<compile_context>
chip_gen: v7x
topology: tpu7x:2x2x1
jax: 0.10.0
libtpu: 0.0.40
codegen_flags: <defaults>
</compile_context>

<pallas_src>
import jax
import jax.numpy as jnp
from jax.experimental import pallas as pl
from jax.experimental.pallas import tpu as pltpu

# ------------- config (mirrors the args of STGCN3DGEPModel) -----------------
N        = 2     # batch
V        = 16    # graph nodes
C_IN     = 4     # args.in_channels
T        = 8     # observed temporal length
D        = 3     # depth dim of the 3D st-gcn input (x is 5-D)
CG       = 32    # args.cell_input_dim
H        = 32    # args.cell_h_dim
NC       = 5     # args.nc
EH       = 32    # args.e_h_dim
EC       = 32    # args.e_c_dim
OUT_DIM  = 5     # args.out_dim
PRED_LEN = 4     # args.pred_len
NV       = N * V
BN_EPS   = 1e-5
LANES    = 128   # all weights / activations / outputs padded to 128 lanes


def _a8(r):      # align section start to the 8-row sublane tile
    return (r + 7) & ~7


# ---- packed weight-matrix slab row offsets (each section 8-row aligned) ----
ROW_WG      = 0                                  # (8, 128)   stgcn 1x1 mix (rows>=C_IN zero)
ROW_PBIG    = _a8(ROW_WG + 8)                    # (8, 128)   per-(step,n) avg-pool over V
ROW_BMEAN   = _a8(ROW_PBIG + PRED_LEN * N)       # (128,128)  per-step block-averaging projector
ROW_WCLS    = _a8(ROW_BMEAN + PRED_LEN * NV)     # (128,128)  classifier (rows>=H, cols>=NC zero)
ROW_WEH     = _a8(ROW_WCLS + LANES)              # (128,128)  enc_h linear
ROW_WEC     = _a8(ROW_WEH + LANES)               # (8, 128)   enc_c linear (rows>=NC zero)
ROW_WOUT_EH = _a8(ROW_WEC + 8)                   # (128,128)  out linear, enc_h half
ROW_WOUT_EC = _a8(ROW_WOUT_EH + LANES)           # (128,128)  out linear, enc_c half
MAT_ROWS    = _a8(ROW_WOUT_EC + LANES)

# ---- packed bias / BN-parameter slab: one (1, 128) zero-padded vector per row ----
(VROW_BG, VROW_BCLS, VROW_BEH, VROW_GEH, VROW_BEEH,
 VROW_BEC, VROW_GEC, VROW_BEEC, VROW_BOUT) = range(9)
VEC_ROWS = 16


# ------------------------------ fused kernel --------------------------------
def _fused_kernel(xm_ref, a2_ref, oh_ref, h0_ref, c0_ref,
                  wgate_ref, bgate_ref, wmat_ref, wvec_ref,
                  c_out_ref, pred_out_ref):
    f32 = jnp.float32

    # ---- packed weights / constants (resident in VMEM for the whole call) ----
    A2      = a2_ref[...]                                        # (NV, NV) block-diag adjacency
    w_g     = wmat_ref[ROW_WG:ROW_WG + 8, :]                     # (8, 128)
    P_big   = wmat_ref[ROW_PBIG:ROW_PBIG + PRED_LEN * N, :]      # (8, 128)
    B_mean  = wmat_ref[ROW_BMEAN:ROW_BMEAN + PRED_LEN * NV, :]   # (128, 128)
    w_cls   = wmat_ref[ROW_WCLS:ROW_WCLS + LANES, :]             # (128, 128)
    w_eh    = wmat_ref[ROW_WEH:ROW_WEH + LANES, :]               # (128, 128)
    w_ec    = wmat_ref[ROW_WEC:ROW_WEC + 8, :]                   # (8, 128)
    w_out_h = wmat_ref[ROW_WOUT_EH:ROW_WOUT_EH + LANES, :]       # (128, 128)
    w_out_c = wmat_ref[ROW_WOUT_EC:ROW_WOUT_EC + LANES, :]       # (128, 128)

    w_ih    = wgate_ref[0:LANES, :]                              # (128, 512) gate-blocked, rows>=CG zero
    w_hh    = wgate_ref[LANES:2 * LANES, :]                      # (128, 512) gate-blocked, rows>=H zero
    b_gates = bgate_ref[...]                                     # (1, 512)

    b_g   = wvec_ref[VROW_BG:VROW_BG + 1, :]
    b_cls = wvec_ref[VROW_BCLS:VROW_BCLS + 1, :]
    b_eh  = wvec_ref[VROW_BEH:VROW_BEH + 1, :]
    g_eh  = wvec_ref[VROW_GEH:VROW_GEH + 1, :]
    be_eh = wvec_ref[VROW_BEEH:VROW_BEEH + 1, :]
    b_ec  = wvec_ref[VROW_BEC:VROW_BEC + 1, :]
    g_ec  = wvec_ref[VROW_GEC:VROW_GEC + 1, :]
    be_ec = wvec_ref[VROW_BEEC:VROW_BEEC + 1, :]
    b_out = wvec_ref[VROW_BOUT:VROW_BOUT + 1, :]

    def mm(a, b):
        return jnp.dot(a, b, preferred_element_type=f32)

    # ---- STGCN stand-in prologue: graph conv -> 1x1 channel mix -> ReLU ----
    # TODO(synk): STGCN3DModule source not provided; representative stand-in.
    gc   = mm(A2, xm_ref[...])                                   # (NV, 8)
    feat = jnp.maximum(mm(gc, w_g) + b_g, 0.0)                   # (NV, 128), lanes>=CG exactly 0

    # x-dependent LSTM gate contribution is loop-invariant (x.repeat(pred_len, ...))
    gates_x = mm(feat, w_ih) + b_gates                           # (NV, 512)

    # ---- serial recurrence: ONLY the LSTMCell lives here (fully unrolled) ----
    h = h0_ref[...]                                              # (NV, 128), lanes>=H zero
    c = c0_ref[...]
    h_steps = []
    for _step in range(PRED_LEN):
        gates = gates_x + mm(h, w_hh)                            # (NV, 512); 128-lane-aligned gate blocks
        i_g = jax.nn.sigmoid(gates[:, 0 * LANES:1 * LANES])
        f_g = jax.nn.sigmoid(gates[:, 1 * LANES:2 * LANES])
        g_g = jnp.tanh(gates[:, 2 * LANES:3 * LANES])
        o_g = jax.nn.sigmoid(gates[:, 3 * LANES:4 * LANES])
        c = f_g * c + i_g * g_g                                  # lanes>=H stay exactly 0
        h = o_g * jnp.tanh(c)
        h_steps.append(h)

    h_all = jnp.concatenate(h_steps, axis=0)                     # (PRED_LEN*NV, 128)

    # ---- ClassifierLayer (all steps at once): avg-pool over V then Linear H->NC ----
    pooled = mm(P_big, h_all)                                    # (PRED_LEN*N, 128)
    c_out_ref[...] = mm(pooled, w_cls) + b_cls                   # single dense (8, 128) store

    # ---- PredictionLayer (all steps at once) ----
    def bn_relu(z, gamma, beta):
        # train-mode BatchNorm1d (biased variance) computed per prediction step via the
        # block-averaging projector B_mean (MXU) -> no cross-sublane reductions.
        mu  = mm(B_mean, z)
        m2  = mm(B_mean, z * z)
        var = jnp.maximum(m2 - mu * mu, 0.0)
        y = (z - mu) * jax.lax.rsqrt(var + BN_EPS) * gamma + beta
        return jnp.maximum(y, 0.0)                               # padded lanes stay exactly 0

    eh = bn_relu(mm(h_all, w_eh) + b_eh, g_eh, be_eh)            # (128, 128), cols>=EH zero
    ec = bn_relu(mm(oh_ref[...], w_ec) + b_ec, g_ec, be_ec)      # (128, 128), cols>=EC zero

    # cat([eh, ec]) @ W_out == eh @ W_out[:EH] + ec @ W_out[EH:]  (+ bias once)
    out = mm(eh, w_out_h) + mm(ec, w_out_c) + b_out              # (128, 128)

    # output_activation: [mu_x, mu_y, exp(sx), exp(sy), tanh(rho)]; padded lanes -> 0
    # TODO(synk): output_activation source not provided; bivariate-Gaussian head assumed.
    col = jax.lax.broadcasted_iota(jnp.int32, out.shape, 1)      # built once, outside any loop
    out_act = jnp.where(col < 2, out,
               jnp.where(col < 4, jnp.exp(out),
                jnp.where(col < OUT_DIM, jnp.tanh(out), 0.0)))
    pred_out_ref[...] = out_act                                  # single dense (128, 128) store


def _fused_forward(xm, A2, oh_rep, h0, c0, w_gates, b_gates, wmat, wvec):
    # No grid: single invocation, full arrays resident in VMEM (no double-buffering).
    return pl.pallas_call(
        _fused_kernel,
        out_shape=(jax.ShapeDtypeStruct((PRED_LEN * N, LANES), jnp.float32),
                   jax.ShapeDtypeStruct((PRED_LEN * NV, LANES), jnp.float32)),
        in_specs=[pl.BlockSpec(memory_space=pltpu.MemorySpace.VMEM) for _ in range(9)],
        out_specs=(pl.BlockSpec(memory_space=pltpu.MemorySpace.VMEM),
                   pl.BlockSpec(memory_space=pltpu.MemorySpace.VMEM)),
    )(xm, A2, oh_rep, h0, c0, w_gates, b_gates, wmat, wvec)


# ------------------------------ model wrapper --------------------------------
@jax.jit
def stgcn3d_gep_forward(x5, A, hidden_states, cell_states, one_hots_c_pred_seq,
                        w_gates, b_gates, wmat, wvec):
    f32 = jnp.float32
    # STGCN stand-in, part 1 (layout fix): temporal mean-pool over (T, D) done in XLA so
    # the kernel receives one small lane-friendly tile instead of a lane-sparse 4-D block.
    xm = jnp.transpose(jnp.mean(x5, axis=(2, 3)), (0, 2, 1)).reshape(NV, C_IN)
    xm = jnp.pad(xm, ((0, 0), (0, 8 - C_IN))).astype(f32)                    # (NV, 8)
    A2 = jnp.kron(jnp.eye(N, dtype=f32), A.astype(f32))                      # (NV, NV) block-diag
    h0 = jnp.pad(hidden_states.reshape(NV, H), ((0, 0), (0, LANES - H))).astype(f32)
    c0 = jnp.pad(cell_states.reshape(NV, H), ((0, 0), (0, LANES - H))).astype(f32)
    # Training branch: one_hots_c = one_hots_c_pred_seq[i]; replicate over V exactly like
    # the PyTorch `.unsqueeze(1).repeat(1, V, 1)` inside PredictionLayer.
    oh_rep = jnp.broadcast_to(one_hots_c_pred_seq[:, :, None, :],
                              (PRED_LEN, N, V, NC)).reshape(PRED_LEN * NV, NC)
    oh_rep = jnp.pad(oh_rep, ((0, 0), (0, 8 - NC))).astype(f32)              # (PRED_LEN*NV, 8)

    c_out_pad, pred_pad = _fused_forward(xm, A2, oh_rep, h0, c0,
                                         w_gates, b_gates, wmat, wvec)
    c_outs = c_out_pad.reshape(PRED_LEN, N, LANES)[:, :, :NC]                # (pred_len, N, nc)
    pred = pred_pad.reshape(PRED_LEN, N, V, LANES)[..., :OUT_DIM]
    pred_outs = jnp.transpose(pred, (1, 0, 2, 3))                            # (N, pred_len, V, out_dim)
    return pred_outs, c_outs


# ------------------------ weight init + packing (once) -----------------------
def init_weights(key):
    ks = jax.random.split(key, 13)
    s = 0.1
    return {
        'w_g':    s * jax.random.normal(ks[0], (C_IN, CG), jnp.float32),
        'b_g':    s * jax.random.normal(ks[1], (1, CG), jnp.float32),
        'w_ih':   s * jax.random.normal(ks[2], (CG, 4 * H), jnp.float32),
        'w_hh':   s * jax.random.normal(ks[3], (H, 4 * H), jnp.float32),
        'b_cell': s * jax.random.normal(ks[4], (1, 4 * H), jnp.float32),
        'w_cls':  s * jax.random.normal(ks[5], (H, NC), jnp.float32),
        'b_cls':  s * jax.random.normal(ks[6], (1, NC), jnp.float32),
        'w_eh':   s * jax.random.normal(ks[7], (H, EH), jnp.float32),
        'b_eh':   s * jax.random.normal(ks[8], (1, EH), jnp.float32),
        'g_eh':   jnp.ones((1, EH), jnp.float32),
        'be_eh':  jnp.zeros((1, EH), jnp.float32),
        'w_ec':   s * jax.random.normal(ks[9], (NC, EC), jnp.float32),
        'b_ec':   s * jax.random.normal(ks[10], (1, EC), jnp.float32),
        'g_ec':   jnp.ones((1, EC), jnp.float32),
        'be_ec':  jnp.zeros((1, EC), jnp.float32),
        'w_out':  s * jax.random.normal(ks[11], (EH + EC, OUT_DIM), jnp.float32),
        'b_out':  s * jax.random.normal(ks[12], (1, OUT_DIM), jnp.float32),
    }


def pack_params(w):
    """Pack all weights/biases/BN params into lane-dense f32 slabs (done once)."""
    f32 = jnp.float32

    # gate slab: rows 0:128 = w_ih (K padded to 128 for the 128-lane feat),
    #            rows 128:256 = w_hh (K padded to 128 for the 128-lane h).
    # Each of the 4 gates (i, f, g, o) sits in its own 128-lane block (cols >= H zero).
    wg = jnp.zeros((2 * LANES, 4 * LANES), f32)
    bg = jnp.zeros((1, 4 * LANES), f32)
    for k in range(4):
        wg = wg.at[:CG, k * LANES:k * LANES + H].set(w['w_ih'][:, k * H:(k + 1) * H])
        wg = wg.at[LANES:LANES + H, k * LANES:k * LANES + H].set(w['w_hh'][:, k * H:(k + 1) * H])
        bg = bg.at[:, k * LANES:k * LANES + H].set(w['b_cell'][:, k * H:(k + 1) * H])

    mat = jnp.zeros((MAT_ROWS, LANES), f32)

    def put(m, row, arr):
        arr = jnp.asarray(arr, f32)
        r, c = arr.shape
        return m.at[row:row + r, :c].set(arr)

    mat = put(mat, ROW_WG, w['w_g'])                                            # (C_IN, CG)
    p_big = jnp.kron(jnp.eye(PRED_LEN * N, dtype=f32),
                     jnp.full((1, V), 1.0 / V, f32))                            # (8, 128)
    mat = put(mat, ROW_PBIG, p_big)
    b_mean = jnp.kron(jnp.eye(PRED_LEN, dtype=f32),
                      jnp.full((NV, NV), 1.0 / NV, f32))                        # (128, 128)
    mat = put(mat, ROW_BMEAN, b_mean)
    mat = put(mat, ROW_WCLS, w['w_cls'])                                        # (H, NC)
    mat = put(mat, ROW_WEH, w['w_eh'])                                          # (H, EH)
    mat = put(mat, ROW_WEC, w['w_ec'])                                          # (NC, EC)
    mat = put(mat, ROW_WOUT_EH, w['w_out'][:EH])                                # (EH, OUT_DIM)
    mat = put(mat, ROW_WOUT_EC, w['w_out'][EH:])                                # (EC, OUT_DIM)

    vec = jnp.zeros((VEC_ROWS, LANES), f32)
    for row, name in ((VROW_BG, 'b_g'), (VROW_BCLS, 'b_cls'),
                      (VROW_BEH, 'b_eh'), (VROW_GEH, 'g_eh'), (VROW_BEEH, 'be_eh'),
                      (VROW_BEC, 'b_ec'), (VROW_GEC, 'g_ec'), (VROW_BEEC, 'be_ec'),
                      (VROW_BOUT, 'b_out')):
        vec = put(vec, row, jnp.asarray(w[name], f32).reshape(1, -1))
    return wg, bg, mat, vec


if __name__ == "__main__":
    key = jax.random.PRNGKey(0)
    k_x, k_h, k_c, k_lbl, k_w = jax.random.split(key, 5)

    x5 = jax.random.normal(k_x, (N, C_IN, T, D, V), jnp.float32)
    eye = jnp.eye(V, dtype=jnp.float32)
    A = (eye + jnp.roll(eye, 1, axis=1) + jnp.roll(eye, -1, axis=1)) / 3.0   # normalized ring graph
    hidden_states = 0.1 * jax.random.normal(k_h, (N, V, H), jnp.float32)
    cell_states   = 0.1 * jax.random.normal(k_c, (N, V, H), jnp.float32)
    labels = jax.random.randint(k_lbl, (PRED_LEN, N), 0, NC)
    one_hots_c_pred_seq = jax.nn.one_hot(labels, NC, dtype=jnp.float32)      # (pred_len, N, nc)

    weights = init_weights(k_w)
    w_gates, b_gates, wmat, wvec = pack_params(weights)                      # packed once

    pred_outs, c_outs = stgcn3d_gep_forward(
        x5, A, hidden_states, cell_states, one_hots_c_pred_seq,
        w_gates, b_gates, wmat, wvec)
    jax.block_until_ready((pred_outs, c_outs))

    assert pred_outs.shape == (N, PRED_LEN, V, OUT_DIM)
    assert c_outs.shape == (PRED_LEN, N, NC)
    assert bool(jnp.all(jnp.isfinite(pred_outs))) and bool(jnp.all(jnp.isfinite(c_outs)))
    print("KERNEL_OK")
</pallas_src>

<mosaic_0001>
module attributes {stable_mosaic.version = 11 : i64} {
  func.func @_fused_kernel(%arg0: memref<32x8xf32, #tpu.memory_space<vmem>>, %arg1: memref<32x32xf32, #tpu.memory_space<vmem>>, %arg2: memref<128x8xf32, #tpu.memory_space<vmem>>, %arg3: memref<32x128xf32, #tpu.memory_space<vmem>>, %arg4: memref<32x128xf32, #tpu.memory_space<vmem>>, %arg5: memref<256x512xf32, #tpu.memory_space<vmem>>, %arg6: memref<1x512xf32, #tpu.memory_space<vmem>>, %arg7: memref<664x128xf32, #tpu.memory_space<vmem>>, %arg8: memref<16x128xf32, #tpu.memory_space<vmem>>, %arg9: memref<8x128xf32, #tpu.memory_space<vmem>>, %arg10: memref<128x128xf32, #tpu.memory_space<vmem>>) attributes {dimension_semantics = [], scalar_prefetch = 0 : i64, scratch_operands = 0 : i64, tpu.core_type = #tpu.core_type<tc>} {
    %c0 = arith.constant 0 : index
    %c0_0 = arith.constant 0 : index
    %0 = vector.load %arg1[%c0, %c0_0] : memref<32x32xf32, #tpu.memory_space<vmem>>, vector<32x32xf32>
    %c0_1 = arith.constant 0 : index
    %c0_2 = arith.constant 0 : index
    %1 = vector.load %arg7[%c0_1, %c0_2] : memref<664x128xf32, #tpu.memory_space<vmem>>, vector<8x128xf32>
    %c8 = arith.constant 8 : index
    %c0_3 = arith.constant 0 : index
    %2 = vector.load %arg7[%c8, %c0_3] : memref<664x128xf32, #tpu.memory_space<vmem>>, vector<8x128xf32>
    %c16 = arith.constant 16 : index
    %c0_4 = arith.constant 0 : index
    %3 = vector.load %arg7[%c16, %c0_4] : memref<664x128xf32, #tpu.memory_space<vmem>>, vector<128x128xf32>
    %c144 = arith.constant 144 : index
    %c0_5 = arith.constant 0 : index
    %4 = vector.load %arg7[%c144, %c0_5] : memref<664x128xf32, #tpu.memory_space<vmem>>, vector<128x128xf32>
    %c272 = arith.constant 272 : index
    %c0_6 = arith.constant 0 : index
    %5 = vector.load %arg7[%c272, %c0_6] : memref<664x128xf32, #tpu.memory_space<vmem>>, vector<128x128xf32>
    %c400 = arith.constant 400 : index
    %c0_7 = arith.constant 0 : index
    %6 = vector.load %arg7[%c400, %c0_7] : memref<664x128xf32, #tpu.memory_space<vmem>>, vector<8x128xf32>
    %c408 = arith.constant 408 : index
    %c0_8 = arith.constant 0 : index
    %7 = vector.load %arg7[%c408, %c0_8] : memref<664x128xf32, #tpu.memory_space<vmem>>, vector<128x128xf32>
    %c536 = arith.constant 536 : index
    %c0_9 = arith.constant 0 : index
    %8 = vector.load %arg7[%c536, %c0_9] : memref<664x128xf32, #tpu.memory_space<vmem>>, vector<128x128xf32>
    %c0_10 = arith.constant 0 : index
    %c0_11 = arith.constant 0 : index
    %9 = vector.load %arg5[%c0_10, %c0_11] : memref<256x512xf32, #tpu.memory_space<vmem>>, vector<128x512xf32>
    %c128 = arith.constant 128 : index
    %c0_12 = arith.constant 0 : index
    %10 = vector.load %arg5[%c128, %c0_12] : memref<256x512xf32, #tpu.memory_space<vmem>>, vector<128x512xf32>
    %c0_13 = arith.constant 0 : index
    %c0_14 = arith.constant 0 : index
    %11 = vector.load %arg6[%c0_13, %c0_14] : memref<1x512xf32, #tpu.memory_space<vmem>>, vector<1x512xf32>
    %c0_15 = arith.constant 0 : index
    %c0_16 = arith.constant 0 : index
    %12 = vector.load %arg8[%c0_15, %c0_16] : memref<16x128xf32, #tpu.memory_space<vmem>>, vector<1x128xf32>
    %c1 = arith.constant 1 : index
    %c0_17 = arith.constant 0 : index
    %13 = vector.load %arg8[%c1, %c0_17] : memref<16x128xf32, #tpu.memory_space<vmem>>, vector<1x128xf32>
    %c2 = arith.constant 2 : index
    %c0_18 = arith.constant 0 : index
    %14 = vector.load %arg8[%c2, %c0_18] : memref<16x128xf32, #tpu.memory_space<vmem>>, vector<1x128xf32>
    %c3 = arith.constant 3 : index
    %c0_19 = arith.constant 0 : index
    %15 = vector.load %arg8[%c3, %c0_19] : memref<16x128xf32, #tpu.memory_space<vmem>>, vector<1x128xf32>
    %c4 = arith.constant 4 : index
    %c0_20 = arith.constant 0 : index
    %16 = vector.load %arg8[%c4, %c0_20] : memref<16x128xf32, #tpu.memory_space<vmem>>, vector<1x128xf32>
    %c5 = arith.constant 5 : index
    %c0_21 = arith.constant 0 : index
    %17 = vector.load %arg8[%c5, %c0_21] : memref<16x128xf32, #tpu.memory_space<vmem>>, vector<1x128xf32>
    %c6 = arith.constant 6 : index
    %c0_22 = arith.constant 0 : index
    %18 = vector.load %arg8[%c6, %c0_22] : memref<16x128xf32, #tpu.memory_space<vmem>>, vector<1x128xf32>
    %c7 = arith.constant 7 : index
    %c0_23 = arith.constant 0 : index
    %19 = vector.load %arg8[%c7, %c0_23] : memref<16x128xf32, #tpu.memory_space<vmem>>, vector<1x128xf32>
    %c8_24 = arith.constant 8 : index
    %c0_25 = arith.constant 0 : index
    %20 = vector.load %arg8[%c8_24, %c0_25] : memref<16x128xf32, #tpu.memory_space<vmem>>, vector<1x128xf32>
    %c0_26 = arith.constant 0 : index
    %c0_27 = arith.constant 0 : index
    %21 = vector.load %arg0[%c0_26, %c0_27] : memref<32x8xf32, #tpu.memory_space<vmem>>, vector<32x8xf32>
    %cst = arith.constant dense<0.000000e+00> : vector<32x8xf32>
    %22 = tpu.matmul %0, %21, %cst {dimension_numbers = #tpu.dot_dimension_numbers<[1], [0], [0], [1], [0, 0, 1, 1], [], []>} : vector<32x32xf32>, vector<32x8xf32>, vector<32x8xf32> -> vector<32x8xf32>
    %cst_28 = arith.constant dense<0.000000e+00> : vector<32x128xf32>
    %23 = tpu.matmul %22, %1, %cst_28 {dimension_numbers = #tpu.dot_dimension_numbers<[1], [0], [0], [1], [0, 0, 1, 1], [], []>} : vector<32x8xf32>, vector<8x128xf32>, vector<32x128xf32> -> vector<32x128xf32>
    %24 = vector.broadcast %12 : vector<1x128xf32> to vector<32x128xf32>
    %25 = arith.addf %23, %24 : vector<32x128xf32>
    %cst_29 = arith.constant 0.000000e+00 : f32
    %26 = vector.broadcast %cst_29 : f32 to vector<32x128xf32>
    %27 = arith.maximumf %25, %26 : vector<32x128xf32>
    %cst_30 = arith.constant dense<0.000000e+00> : vector<32x512xf32>
    %28 = tpu.matmul %27, %9, %cst_30 {dimension_numbers = #tpu.dot_dimension_numbers<[1], [0], [0], [1], [0, 0, 1, 1], [], []>} : vector<32x128xf32>, vector<128x512xf32>, vector<32x512xf32> -> vector<32x512xf32>
    %29 = vector.broadcast %11 : vector<1x512xf32> to vector<32x512xf32>
    %30 = arith.addf %28, %29 : vector<32x512xf32>
    %c0_31 = arith.constant 0 : index
    %c0_32 = arith.constant 0 : index
    %31 = vector.load %arg3[%c0_31, %c0_32] : memref<32x128xf32, #tpu.memory_space<vmem>>, vector<32x128xf32>
    %c0_33 = arith.constant 0 : index
    %c0_34 = arith.constant 0 : index
    %32 = vector.load %arg4[%c0_33, %c0_34] : memref<32x128xf32, #tpu.memory_space<vmem>>, vector<32x128xf32>
    %cst_35 = arith.constant dense<0.000000e+00> : vector<32x512xf32>
    %33 = tpu.matmul %31, %10, %cst_35 {dimension_numbers = #tpu.dot_dimension_numbers<[1], [0], [0], [1], [0, 0, 1, 1], [], []>} : vector<32x128xf32>, vector<128x512xf32>, vector<32x512xf32> -> vector<32x512xf32>
    %34 = arith.addf %30, %33 : vector<32x512xf32>
    %35 = vector.extract_strided_slice %34 {offsets = [0, 0], sizes = [32, 128], strides = [1, 1]} : vector<32x512xf32> to vector<32x128xf32>
    %36 = arith.negf %35 : vector<32x128xf32>
    %37 = math.exp %36 : vector<32x128xf32>
    %cst_36 = arith.constant 1.000000e+00 : f32
    %38 = vector.broadcast %cst_36 : f32 to vector<32x128xf32>
    %39 = arith.addf %38, %37 : vector<32x128xf32>
    %40 = arith.divf %38, %39 : vector<32x128xf32>
    %41 = vector.extract_strided_slice %34 {offsets = [0, 128], sizes = [32, 128], strides = [1, 1]} : vector<32x512xf32> to vector<32x128xf32>
    %42 = arith.negf %41 : vector<32x128xf32>
    %43 = math.exp %42 : vector<32x128xf32>
    %cst_37 = arith.constant 1.000000e+00 : f32
    %44 = vector.broadcast %cst_37 : f32 to vector<32x128xf32>
    %45 = arith.addf %44, %43 : vector<32x128xf32>
    %46 = arith.divf %44, %45 : vector<32x128xf32>
    %47 = vector.extract_strided_slice %34 {offsets = [0, 256], sizes = [32, 128], strides = [1, 1]} : vector<32x512xf32> to vector<32x128xf32>
    %48 = math.tanh %47 : vector<32x128xf32>
    %49 = vector.extract_strided_slice %34 {offsets = [0, 384], sizes = [32, 128], strides = [1, 1]} : vector<32x512xf32> to vector<32x128xf32>
    %50 = arith.negf %49 : vector<32x128xf32>
    %51 = math.exp %50 : vector<32x128xf32>
    %cst_38 = arith.constant 1.000000e+00 : f32
    %52 = vector.broadcast %cst_38 : f32 to vector<32x128xf32>
    %53 = arith.addf %52, %51 : vector<32x128xf32>
    %54 = arith.divf %52, %53 : vector<32x128xf32>
    %55 = arith.mulf %46, %32 : vector<32x128xf32>
    %56 = arith.mulf %40, %48 : vector<32x128xf32>
    %57 = arith.addf %55, %56 : vector<32x128xf32>
    %58 = math.tanh %57 : vector<32x128xf32>
    %59 = arith.mulf %54, %58 : vector<32x128xf32>
    %cst_39 = arith.constant dense<0.000000e+00> : vector<32x512xf32>
    %60 = tpu.matmul %59, %10, %cst_39 {dimension_numbers = #tpu.dot_dimension_numbers<[1], [0], [0], [1], [0, 0, 1, 1], [], []>} : vector<32x128xf32>, vector<128x512xf32>, vector<32x512xf32> -> vector<32x512xf32>
    %61 = arith.addf %30, %60 : vector<32x512xf32>
    %62 = vector.extract_strided_slice %61 {offsets = [0, 0], sizes = [32, 128], strides = [1, 1]} : vector<32x512xf32> to vector<32x128xf32>
    %63 = arith.negf %62 : vector<32x128xf32>
    %64 = math.exp %63 : vector<32x128xf32>
    %cst_40 = arith.constant 1.000000e+00 : f32
    %65 = vector.broadcast %cst_40 : f32 to vector<32x128xf32>
    %66 = arith.addf %65, %64 : vector<32x128xf32>
    %67 = arith.divf %65, %66 : vector<32x128xf32>
    %68 = vector.extract_strided_slice %61 {offsets = [0, 128], sizes = [32, 128], strides = [1, 1]} : vector<32x512xf32> to vector<32x128xf32>
    %69 = arith.negf %68 : vector<32x128xf32>
    %70 = math.exp %69 : vector<32x128xf32>
    %cst_41 = arith.constant 1.000000e+00 : f32
    %71 = vector.broadcast %cst_41 : f32 to vector<32x128xf32>
    %72 = arith.addf %71, %70 : vector<32x128xf32>
    %73 = arith.divf %71, %72 : vector<32x128xf32>
    %74 = vector.extract_strided_slice %61 {offsets = [0, 256], sizes = [32, 128], strides = [1, 1]} : vector<32x512xf32> to vector<32x128xf32>
    %75 = math.tanh %74 : vector<32x128xf32>
    %76 = vector.extract_strided_slice %61 {offsets = [0, 384], sizes = [32, 128], strides = [1, 1]} : vector<32x512xf32> to vector<32x128xf32>
    %77 = arith.negf %76 : vector<32x128xf32>
    %78 = math.exp %77 : vector<32x128xf32>
    %cst_42 = arith.constant 1.000000e+00 : f32
    %79 = vector.broadcast %cst_42 : f32 to vector<32x128xf32>
    %80 = arith.addf %79, %78 : vector<32x128xf32>
    %81 = arith.divf %79, %80 : vector<32x128xf32>
    %82 = arith.mulf %73, %57 : vector<32x128xf32>
    %83 = arith.mulf %67, %75 : vector<32x128xf32>
    %84 = arith.addf %82, %83 : vector<32x128xf32>
    %85 = math.tanh %84 : vector<32x128xf32>
    %86 = arith.mulf %81, %85 : vector<32x128xf32>
    %cst_43 = arith.constant dense<0.000000e+00> : vector<32x512xf32>
    %87 = tpu.matmul %86, %10, %cst_43 {dimension_numbers = #tpu.dot_dimension_numbers<[1], [0], [0], [1], [0, 0, 1, 1], [], []>} : vector<32x128xf32>, vector<128x512xf32>, vector<32x512xf32> -> vector<32x512xf32>
    %88 = arith.addf %30, %87 : vector<32x512xf32>
    %89 = vector.extract_strided_slice %88 {offsets = [0, 0], sizes = [32, 128], strides = [1, 1]} : vector<32x512xf32> to vector<32x128xf32>
    %90 = arith.negf %89 : vector<32x128xf32>
    %91 = math.exp %90 : vector<32x128xf32>
    %cst_44 = arith.constant 1.000000e+00 : f32
    %92 = vector.broadcast %cst_44 : f32 to vector<32x128xf32>
    %93 = arith.addf %92, %91 : vector<32x128xf32>
    %94 = arith.divf %92, %93 : vector<32x128xf32>
    %95 = vector.extract_strided_slice %88 {offsets = [0, 128], sizes = [32, 128], strides = [1, 1]} : vector<32x512xf32> to vector<32x128xf32>
    %96 = arith.negf %95 : vector<32x128xf32>
    %97 = math.exp %96 : vector<32x128xf32>
    %cst_45 = arith.constant 1.000000e+00 : f32
    %98 = vector.broadcast %cst_45 : f32 to vector<32x128xf32>
    %99 = arith.addf %98, %97 : vector<32x128xf32>
    %100 = arith.divf %98, %99 : vector<32x128xf32>
    %101 = vector.extract_strided_slice %88 {offsets = [0, 256], sizes = [32, 128], strides = [1, 1]} : vector<32x512xf32> to vector<32x128xf32>
    %102 = math.tanh %101 : vector<32x128xf32>
    %103 = vector.extract_strided_slice %88 {offsets = [0, 384], sizes = [32, 128], strides = [1, 1]} : vector<32x512xf32> to vector<32x128xf32>
    %104 = arith.negf %103 : vector<32x128xf32>
    %105 = math.exp %104 : vector<32x128xf32>
    %cst_46 = arith.constant 1.000000e+00 : f32
    %106 = vector.broadcast %cst_46 : f32 to vector<32x128xf32>
    %107 = arith.addf %106, %105 : vector<32x128xf32>
    %108 = arith.divf %106, %107 : vector<32x128xf32>
    %109 = arith.mulf %100, %84 : vector<32x128xf32>
    %110 = arith.mulf %94, %102 : vector<32x128xf32>
    %111 = arith.addf %109, %110 : vector<32x128xf32>
    %112 = math.tanh %111 : vector<32x128xf32>
    %113 = arith.mulf %108, %112 : vector<32x128xf32>
    %cst_47 = arith.constant dense<0.000000e+00> : vector<32x512xf32>
    %114 = tpu.matmul %113, %10, %cst_47 {dimension_numbers = #tpu.dot_dimension_numbers<[1], [0], [0], [1], [0, 0, 1, 1], [], []>} : vector<32x128xf32>, vector<128x512xf32>, vector<32x512xf32> -> vector<32x512xf32>
    %115 = arith.addf %30, %114 : vector<32x512xf32>
    %116 = vector.extract_strided_slice %115 {offsets = [0, 0], sizes = [32, 128], strides = [1, 1]} : vector<32x512xf32> to vector<32x128xf32>
    %117 = arith.negf %116 : vector<32x128xf32>
    %118 = math.exp %117 : vector<32x128xf32>
    %cst_48 = arith.constant 1.000000e+00 : f32
    %119 = vector.broadcast %cst_48 : f32 to vector<32x128xf32>
    %120 = arith.addf %119, %118 : vector<32x128xf32>
    %121 = arith.divf %119, %120 : vector<32x128xf32>
    %122 = vector.extract_strided_slice %115 {offsets = [0, 128], sizes = [32, 128], strides = [1, 1]} : vector<32x512xf32> to vector<32x128xf32>
    %123 = arith.negf %122 : vector<32x128xf32>
    %124 = math.exp %123 : vector<32x128xf32>
    %cst_49 = arith.constant 1.000000e+00 : f32
    %125 = vector.broadcast %cst_49 : f32 to vector<32x128xf32>
    %126 = arith.addf %125, %124 : vector<32x128xf32>
    %127 = arith.divf %125, %126 : vector<32x128xf32>
    %128 = vector.extract_strided_slice %115 {offsets = [0, 256], sizes = [32, 128], strides = [1, 1]} : vector<32x512xf32> to vector<32x128xf32>
    %129 = math.tanh %128 : vector<32x128xf32>
    %130 = vector.extract_strided_slice %115 {offsets = [0, 384], sizes = [32, 128], strides = [1, 1]} : vector<32x512xf32> to vector<32x128xf32>
    %131 = arith.negf %130 : vector<32x128xf32>
    %132 = math.exp %131 : vector<32x128xf32>
    %cst_50 = arith.constant 1.000000e+00 : f32
    %133 = vector.broadcast %cst_50 : f32 to vector<32x128xf32>
    %134 = arith.addf %133, %132 : vector<32x128xf32>
    %135 = arith.divf %133, %134 : vector<32x128xf32>
    %136 = arith.mulf %127, %111 : vector<32x128xf32>
    %137 = arith.mulf %121, %129 : vector<32x128xf32>
    %138 = arith.addf %136, %137 : vector<32x128xf32>
    %139 = math.tanh %138 : vector<32x128xf32>
    %140 = arith.mulf %135, %139 : vector<32x128xf32>
    %141 = tpu.concatenate %59, %86, %113, %140 in 0 : vector<32x128xf32>, vector<32x128xf32>, vector<32x128xf32>, vector<32x128xf32> -> vector<128x128xf32>
    %cst_51 = arith.constant dense<0.000000e+00> : vector<8x128xf32>
    %142 = tpu.matmul %2, %141, %cst_51 {dimension_numbers = #tpu.dot_dimension_numbers<[1], [0], [0], [1], [0, 0, 1, 1], [], []>} : vector<8x128xf32>, vector<128x128xf32>, vector<8x128xf32> -> vector<8x128xf32>
    %cst_52 = arith.constant dense<0.000000e+00> : vector<8x128xf32>
    %143 = tpu.matmul %142, %4, %cst_52 {dimension_numbers = #tpu.dot_dimension_numbers<[1], [0], [0], [1], [0, 0, 1, 1], [], []>} : vector<8x128xf32>, vector<128x128xf32>, vector<8x128xf32> -> vector<8x128xf32>
    %144 = vector.broadcast %13 : vector<1x128xf32> to vector<8x128xf32>
    %145 = arith.addf %143, %144 : vector<8x128xf32>
    %c0_53 = arith.constant 0 : index
    %c0_54 = arith.constant 0 : index
    %146 = vector.load %arg9[%c0_53, %c0_54] : memref<8x128xf32, #tpu.memory_space<vmem>>, vector<8x128xf32>
    tpu.vector_store %arg9[%c0_53, %c0_54], %145 {strides = array<i32>} : memref<8x128xf32, #tpu.memory_space<vmem>>, vector<8x128xf32>,
    %cst_55 = arith.constant dense<0.000000e+00> : vector<128x128xf32>
    %147 = tpu.matmul %141, %5, %cst_55 {dimension_numbers = #tpu.dot_dimension_numbers<[1], [0], [0], [1], [0, 0, 1, 1], [], []>} : vector<128x128xf32>, vector<128x128xf32>, vector<128x128xf32> -> vector<128x128xf32>
    %148 = vector.broadcast %14 : vector<1x128xf32> to vector<128x128xf32>
    %149 = arith.addf %147, %148 : vector<128x128xf32>
    %cst_56 = arith.constant dense<0.000000e+00> : vector<128x128xf32>
    %150 = tpu.matmul %3, %149, %cst_56 {dimension_numbers = #tpu.dot_dimension_numbers<[1], [0], [0], [1], [0, 0, 1, 1], [], []>} : vector<128x128xf32>, vector<128x128xf32>, vector<128x128xf32> -> vector<128x128xf32>
    %151 = arith.mulf %149, %149 : vector<128x128xf32>
    %cst_57 = arith.constant dense<0.000000e+00> : vector<128x128xf32>
    %152 = tpu.matmul %3, %151, %cst_57 {dimension_numbers = #tpu.dot_dimension_numbers<[1], [0], [0], [1], [0, 0, 1, 1], [], []>} : vector<128x128xf32>, vector<128x128xf32>, vector<128x128xf32> -> vector<128x128xf32>
    %153 = arith.mulf %150, %150 : vector<128x128xf32>
    %154 = arith.subf %152, %153 : vector<128x128xf32>
    %cst_58 = arith.constant 0.000000e+00 : f32
    %155 = vector.broadcast %cst_58 : f32 to vector<128x128xf32>
    %156 = arith.maximumf %154, %155 : vector<128x128xf32>
    %157 = arith.subf %149, %150 : vector<128x128xf32>
    %cst_59 = arith.constant 9.99999974E-6 : f32
    %158 = vector.broadcast %cst_59 : f32 to vector<128x128xf32>
    %159 = arith.addf %156, %158 : vector<128x128xf32>
    %160 = math.rsqrt %159 : vector<128x128xf32>
    %161 = arith.mulf %157, %160 : vector<128x128xf32>
    %162 = vector.broadcast %15 : vector<1x128xf32> to vector<128x128xf32>
    %163 = arith.mulf %161, %162 : vector<128x128xf32>
    %164 = vector.broadcast %16 : vector<1x128xf32> to vector<128x128xf32>
    %165 = arith.addf %163, %164 : vector<128x128xf32>
    %cst_60 = arith.constant 0.000000e+00 : f32
    %166 = vector.broadcast %cst_60 : f32 to vector<128x128xf32>
    %167 = arith.maximumf %165, %166 : vector<128x128xf32>
    %c0_61 = arith.constant 0 : index
    %c0_62 = arith.constant 0 : index
    %168 = vector.load %arg2[%c0_61, %c0_62] : memref<128x8xf32, #tpu.memory_space<vmem>>, vector<128x8xf32>
    %cst_63 = arith.constant dense<0.000000e+00> : vector<128x128xf32>
    %169 = tpu.matmul %168, %6, %cst_63 {dimension_numbers = #tpu.dot_dimension_numbers<[1], [0], [0], [1], [0, 0, 1, 1], [], []>} : vector<128x8xf32>, vector<8x128xf32>, vector<128x128xf32> -> vector<128x128xf32>
    %170 = vector.broadcast %17 : vector<1x128xf32> to vector<128x128xf32>
    %171 = arith.addf %169, %170 : vector<128x128xf32>
    %cst_64 = arith.constant dense<0.000000e+00> : vector<128x128xf32>
    %172 = tpu.matmul %3, %171, %cst_64 {dimension_numbers = #tpu.dot_dimension_numbers<[1], [0], [0], [1], [0, 0, 1, 1], [], []>} : vector<128x128xf32>, vector<128x128xf32>, vector<128x128xf32> -> vector<128x128xf32>
    %173 = arith.mulf %171, %171 : vector<128x128xf32>
    %cst_65 = arith.constant dense<0.000000e+00> : vector<128x128xf32>
    %174 = tpu.matmul %3, %173, %cst_65 {dimension_numbers = #tpu.dot_dimension_numbers<[1], [0], [0], [1], [0, 0, 1, 1], [], []>} : vector<128x128xf32>, vector<128x128xf32>, vector<128x128xf32> -> vector<128x128xf32>
    %175 = arith.mulf %172, %172 : vector<128x128xf32>
    %176 = arith.subf %174, %175 : vector<128x128xf32>
    %cst_66 = arith.constant 0.000000e+00 : f32
    %177 = vector.broadcast %cst_66 : f32 to vector<128x128xf32>
    %178 = arith.maximumf %176, %177 : vector<128x128xf32>
    %179 = arith.subf %171, %172 : vector<128x128xf32>
    %cst_67 = arith.constant 9.99999974E-6 : f32
    %180 = vector.broadcast %cst_67 : f32 to vector<128x128xf32>
    %181 = arith.addf %178, %180 : vector<128x128xf32>
    %182 = math.rsqrt %181 : vector<128x128xf32>
    %183 = arith.mulf %179, %182 : vector<128x128xf32>
    %184 = vector.broadcast %18 : vector<1x128xf32> to vector<128x128xf32>
    %185 = arith.mulf %183, %184 : vector<128x128xf32>
    %186 = vector.broadcast %19 : vector<1x128xf32> to vector<128x128xf32>
    %187 = arith.addf %185, %186 : vector<128x128xf32>
    %cst_68 = arith.constant 0.000000e+00 : f32
    %188 = vector.broadcast %cst_68 : f32 to vector<128x128xf32>
    %189 = arith.maximumf %187, %188 : vector<128x128xf32>
    %cst_69 = arith.constant dense<0.000000e+00> : vector<128x128xf32>
    %190 = tpu.matmul %167, %7, %cst_69 {dimension_numbers = #tpu.dot_dimension_numbers<[1], [0], [0], [1], [0, 0, 1, 1], [], []>} : vector<128x128xf32>, vector<128x128xf32>, vector<128x128xf32> -> vector<128x128xf32>
    %cst_70 = arith.constant dense<0.000000e+00> : vector<128x128xf32>
    %191 = tpu.matmul %189, %8, %cst_70 {dimension_numbers = #tpu.dot_dimension_numbers<[1], [0], [0], [1], [0, 0, 1, 1], [], []>} : vector<128x128xf32>, vector<128x128xf32>, vector<128x128xf32> -> vector<128x128xf32>
    %192 = arith.addf %190, %191 : vector<128x128xf32>
    %193 = vector.broadcast %20 : vector<1x128xf32> to vector<128x128xf32>
    %194 = arith.addf %192, %193 : vector<128x128xf32>
    %195 = tpu.iota {dimensions = array<i32: 1>} : vector<128x128xi32>
    %c2_i32 = arith.constant 2 : i32
    %196 = vector.broadcast %c2_i32 : i32 to vector<128x128xi32>
    %197 = arith.cmpi slt, %195, %196 : vector<128x128xi32>
    %c4_i32 = arith.constant 4 : i32
    %198 = vector.broadcast %c4_i32 : i32 to vector<128x128xi32>
    %199 = arith.cmpi slt, %195, %198 : vector<128x128xi32>
    %200 = math.exp %194 : vector<128x128xf32>
    %c5_i32 = arith.constant 5 : i32
    %201 = vector.broadcast %c5_i32 : i32 to vector<128x128xi32>
    %202 = arith.cmpi slt, %195, %201 : vector<128x128xi32>
    %203 = math.tanh %194 : vector<128x128xf32>
    %cst_71 = arith.constant 0.000000e+00 : f32
    %204 = vector.broadcast %cst_71 : f32 to vector<128x128xf32>
    %205 = arith.select %202, %203, %204 : vector<128x128xi1>, vector<128x128xf32>
    %206 = arith.select %199, %200, %205 : vector<128x128xi1>, vector<128x128xf32>
    %207 = arith.select %197, %194, %206 : vector<128x128xi1>, vector<128x128xf32>
    %c0_72 = arith.constant 0 : index
    %c0_73 = arith.constant 0 : index
    %208 = vector.load %arg10[%c0_72, %c0_73] : memref<128x128xf32, #tpu.memory_space<vmem>>, vector<128x128xf32>
    tpu.vector_store %arg10[%c0_72, %c0_73], %207 {strides = array<i32>} : memref<128x128xf32, #tpu.memory_space<vmem>>, vector<128x128xf32>,
    return
  }
}

</mosaic_0001>

<llo_original>
// kernel: stgcn3d_gep_forward.1
$region0: #{stgcn3d_gep_forward.1}
  #allocation0 [shape = 'u32[]', space=smem, size = 0x4, offset = 0x4, fixed_abs, tag = 'smem constant byte address 0x4 - core index']
  #allocation1 [shape = 'u32[144,128]{1,0:T(1,128)}', space=vmem, size = 0x12000, scoped, tag = 'internal scratch']
  %s0 = inlined_call_operand.vmem [shape: f32[32,8], index: 0, kind: input, shape index: {}]
  %s1 = inlined_call_operand.vmem [shape: f32[32,32], index: 1, kind: input, shape index: {}]
  %s2 = inlined_call_operand.vmem [shape: f32[128,8], index: 2, kind: input, shape index: {}]
  %s3 = inlined_call_operand.vmem [shape: f32[32,128], index: 3, kind: input, shape index: {}]
  %s4 = inlined_call_operand.vmem [shape: f32[32,128], index: 4, kind: input, shape index: {}]
  %s5 = inlined_call_operand.vmem [shape: f32[256,512], index: 5, kind: input, shape index: {}]
  %s6 = inlined_call_operand.vmem [shape: f32[1,512], index: 6, kind: input, shape index: {}]
  %s7 = inlined_call_operand.hbm [shape: f32[664,128], index: 7, kind: input, shape index: {}]
  %s8 = inlined_call_operand.vmem [shape: f32[16,128], index: 8, kind: input, shape index: {}]
  %s9 = inlined_call_operand.hbm [shape: f32[8,128], index: 9, kind: output, shape index: {0}]
  %s10 = inlined_call_operand.vmem [shape: f32[128,128], index: 10, kind: output, shape index: {1}]
  %11 = xla_tuple %s9, %s10
  %s12 = sld [smem:[#allocation0]]
  $region58: #{stgcn3d_gep_forward.1} parent=0
    _
  %s14 = ssub.s32 1, %s12
  %s15 = scalar_select 0, %s14, %s12
  $region1: #{stgcn3d_gep_forward.1} parent=0
    #allocation2 [shape = 'u8[339968]{0}', space=vmem, size = 0x53000, scoped, tag = 'input window, operand 7, single buffered']
    #allocation3 [shape = 's32[1]{0}', space=sflag, size = 0x4, scoped, tag = 'scoped memory for stgcn3d_gep_forward.1']
    #allocation4 [shape = 's32[1]{0}', space=sflag, size = 0x4, scoped, tag = 'scoped memory for stgcn3d_gep_forward.1']
    #allocation5 [shape = 'u8[4096]{0}', space=vmem, size = 0x1000, scoped, tag = 'output window, operand 0, single buffered']
    %16 = vsyncpa [#allocation3], 0
    %17 = vsyncpa [#allocation4], 0
    // Predicated region
    $region2: #{stgcn3d_gep_forward.1} parent=1 // pred_check
      _
    $region3: #{stgcn3d_gep_forward.1} parent=1 // pred_check_branch
      %19 = sbr.rel (0) target = $region5
    $region4: #{stgcn3d_gep_forward.1} parent=1 // pred_region
      _
    $region5: #{stgcn3d_gep_forward.1} parent=1 // pred_fallthru
      _
    // Predicated region
    $region6: #{stgcn3d_gep_forward.1} parent=1 // pred_check
      _
    $region7: #{stgcn3d_gep_forward.1} parent=1 // pred_check_branch
      %21 = sbr.rel (0) target = $region9
    $region8: #{stgcn3d_gep_forward.1} parent=1 // pred_region
      _
    $region9: #{stgcn3d_gep_forward.1} parent=1 // pred_fallthru
      _
    // Predicated region
    $region10: #{stgcn3d_gep_forward.1} parent=1 // pred_check
      _
    $region11: #{stgcn3d_gep_forward.1} parent=1 // pred_check_branch
      %23 = sbr.rel (0) target = $region13
    $region12: #{stgcn3d_gep_forward.1} parent=1 // pred_region
      _
    $region13: #{stgcn3d_gep_forward.1} parent=1 // pred_fallthru
      _
    // Predicated region
    $region14: #{stgcn3d_gep_forward.1} parent=1 // pred_check
      _
    $region15: #{stgcn3d_gep_forward.1} parent=1 // pred_check_branch
      %25 = sbr.rel (0) target = $region17
    $region16: #{stgcn3d_gep_forward.1} parent=1 // pred_region
      _
    $region17: #{stgcn3d_gep_forward.1} parent=1 // pred_fallthru
      _
    // Predicated region
    $region18: #{stgcn3d_gep_forward.1} parent=1 // pred_check
      _
    $region19: #{stgcn3d_gep_forward.1} parent=1 // pred_check_branch
      %27 = sbr.rel (0) target = $region21
    $region20: #{stgcn3d_gep_forward.1} parent=1 // pred_region
      _
    $region21: #{stgcn3d_gep_forward.1} parent=1 // pred_fallthru
      _
    // Predicated region
    $region22: #{stgcn3d_gep_forward.1} parent=1 // pred_check
      _
    $region23: #{stgcn3d_gep_forward.1} parent=1 // pred_check_branch
      %29 = sbr.rel (0) target = $region25
    $region24: #{stgcn3d_gep_forward.1} parent=1 // pred_region
      _
    $region25: #{stgcn3d_gep_forward.1} parent=1 // pred_fallthru
      _
    // Predicated region
    $region26: #{stgcn3d_gep_forward.1} parent=1 // pred_check
      _
    $region27: #{stgcn3d_gep_forward.1} parent=1 // pred_check_branch
      %31 = sbr.rel (0) target = $region29
    $region28: #{stgcn3d_gep_forward.1} parent=1 // pred_region
      _
    $region29: #{stgcn3d_gep_forward.1} parent=1 // pred_fallthru
      _
    // Predicated region
    $region30: #{stgcn3d_gep_forward.1} parent=1 // pred_check
      _
    $region31: #{stgcn3d_gep_forward.1} parent=1 // pred_check_branch
      %33 = sbr.rel (0) target = $region33
    $region32: #{stgcn3d_gep_forward.1} parent=1 // pred_region
      %s35 = ssub.s32 10624, 10624
      %36 = vsyncadd [#allocation3], %s35
      %s37 = sshll.u32 [#allocation2], 4
      %s38 = int_to_ptr.vmem [resolvable:$true] %s37
      %43 = dma.hbm_to_vmem [thread:$0]  %s7, 10624, %s38, [#allocation3], 128, 128, 8
    $region33: #{stgcn3d_gep_forward.1} parent=1 // pred_fallthru
      _
    // Predicated region
    $region34: #{stgcn3d_gep_forward.1} parent=1 // pred_check
      _
    $region35: #{stgcn3d_gep_forward.1} parent=1 // pred_check_branch
      %45 = sbr.rel (0) target = $region37
    $region36: #{stgcn3d_gep_forward.1} parent=1 // pred_region
      _
    $region37: #{stgcn3d_gep_forward.1} parent=1 // pred_fallthru
      _
    // Predicated region
    $region38: #{stgcn3d_gep_forward.1} parent=1 // pred_check
      _
    $region39: #{stgcn3d_gep_forward.1} parent=1 // pred_check_branch
      %47 = sbr.rel (0) target = $region41
    $region40: #{stgcn3d_gep_forward.1} parent=1 // pred_region
      %48 = dma.done [#allocation3], 10624
    $region41: #{stgcn3d_gep_forward.1} parent=1 // pred_fallthru
      _
    %v49 = vld [vmem:[%s1] sm:$0xff]
    %v50 = vld [vmem:[%s1 + $0x8] sm:$0xff]
    %v51 = vld [vmem:[%s1 + $0x10] sm:$0xff]
    %v52 = vld [vmem:[%s1 + $0x18] sm:$0xff]
    %v53 = vld [vmem:[#allocation2] sm:$0xff]
    %v54 = vld [vmem:[#allocation2 + $0x8] sm:$0xff]
    %v55 = vld [vmem:[#allocation2 + $0x10] sm:$0xff]
    %v56 = vld [vmem:[#allocation2 + $0x18] sm:$0xff]
    %v57 = vld [vmem:[#allocation2 + $0x20] sm:$0xff]
    %v58 = vld [vmem:[#allocation2 + $0x28] sm:$0xff]
    %v59 = vld [vmem:[#allocation2 + $0x30] sm:$0xff]
    %v60 = vld [vmem:[#allocation2 + $0x38] sm:$0xff]
    %v61 = vld [vmem:[#allocation2 + $0x40] sm:$0xff]
    %v62 = vld [vmem:[#allocation2 + $0x48] sm:$0xff]
    %v63 = vld [vmem:[#allocation2 + $0x50] sm:$0xff]
    %v64 = vld [vmem:[#allocation2 + $0x58] sm:$0xff]
    %v65 = vld [vmem:[#allocation2 + $0x60] sm:$0xff]
    %v66 = vld [vmem:[#allocation2 + $0x68] sm:$0xff]
    %v67 = vld [vmem:[#allocation2 + $0x70] sm:$0xff]
    %v68 = vld [vmem:[#allocation2 + $0x78] sm:$0xff]
    %v69 = vld [vmem:[#allocation2 + $0x80] sm:$0xff]
    %v70 = vld [vmem:[#allocation2 + $0x88] sm:$0xff]
    %v71 = vld [vmem:[#allocation2 + $0x90] sm:$0xff]
    %v72 = vld [vmem:[#allocation2 + $0x98] sm:$0xff]
    %v73 = vld [vmem:[#allocation2 + $0xa0] sm:$0xff]
    %v74 = vld [vmem:[#allocation2 + $0xa8] sm:$0xff]
    %v75 = vld [vmem:[#allocation2 + $0xb0] sm:$0xff]
    %v76 = vld [vmem:[#allocation2 + $0xb8] sm:$0xff]
    %v77 = vld [vmem:[#allocation2 + $0xc0] sm:$0xff]
    %v78 = vld [vmem:[#allocation2 + $0xc8] sm:$0xff]
    %v79 = vld [vmem:[#allocation2 + $0xd0] sm:$0xff]
    %v80 = vld [vmem:[#allocation2 + $0xd8] sm:$0xff]
    %v81 = vld [vmem:[#allocation2 + $0xe0] sm:$0xff]
    %v82 = vld [vmem:[#allocation2 + $0xe8] sm:$0xff]
    %v83 = vld [vmem:[#allocation2 + $0xf0] sm:$0xff]
    %v84 = vld [vmem:[#allocation2 + $0xf8] sm:$0xff]
    %v85 = vld [vmem:[#allocation2 + $0x100] sm:$0xff]
    %v86 = vld [vmem:[#allocation2 + $0x108] sm:$0xff]
    %v87 = vld [vmem:[#allocation2 + $0x110] sm:$0xff]
    %v88 = vld [vmem:[#allocation2 + $0x118] sm:$0xff]
    %v89 = vld [vmem:[#allocation2 + $0x120] sm:$0xff]
    %v90 = vld [vmem:[#allocation2 + $0x128] sm:$0xff]
    %v91 = vld [vmem:[#allocation2 + $0x130] sm:$0xff]
    %v92 = vld [vmem:[#allocation2 + $0x138] sm:$0xff]
    %v93 = vld [vmem:[#allocation2 + $0x140] sm:$0xff]
    %v94 = vld [vmem:[#allocation2 + $0x148] sm:$0xff]
    %v95 = vld [vmem:[#allocation2 + $0x150] sm:$0xff]
    %v96 = vld [vmem:[#allocation2 + $0x158] sm:$0xff]
    %v97 = vld [vmem:[#allocation2 + $0x160] sm:$0xff]
    %v98 = vld [vmem:[#allocation2 + $0x168] sm:$0xff]
    %v99 = vld [vmem:[#allocation2 + $0x170] sm:$0xff]
    %v100 = vld [vmem:[#allocation2 + $0x178] sm:$0xff]
    %v101 = vld [vmem:[#allocation2 + $0x180] sm:$0xff]
    %v102 = vld [vmem:[#allocation2 + $0x188] sm:$0xff]
    %v103 = vld [vmem:[#allocation2 + $0x190] sm:$0xff]
    %v104 = vld [vmem:[#allocation2 + $0x198] sm:$0xff]
    %v105 = vld [vmem:[#allocation2 + $0x1a0] sm:$0xff]
    %v106 = vld [vmem:[#allocation2 + $0x1a8] sm:$0xff]
    %v107 = vld [vmem:[#allocation2 + $0x1b0] sm:$0xff]
    %v108 = vld [vmem:[#allocation2 + $0x1b8] sm:$0xff]
    %v109 = vld [vmem:[#allocation2 + $0x1c0] sm:$0xff]
    %v110 = vld [vmem:[#allocation2 + $0x1c8] sm:$0xff]
    %v111 = vld [vmem:[#allocation2 + $0x1d0] sm:$0xff]
    %v112 = vld [vmem:[#allocation2 + $0x1d8] sm:$0xff]
    %v113 = vld [vmem:[#allocation2 + $0x1e0] sm:$0xff]
    %v114 = vld [vmem:[#allocation2 + $0x1e8] sm:$0xff]
    %v115 = vld [vmem:[#allocation2 + $0x1f0] sm:$0xff]
    %v116 = vld [vmem:[#allocation2 + $0x1f8] sm:$0xff]
    %v117 = vld [vmem:[#allocation2 + $0x200] sm:$0xff]
    %v118 = vld [vmem:[#allocation2 + $0x208] sm:$0xff]
    %v119 = vld [vmem:[#allocation2 + $0x210] sm:$0xff]
    %v120 = vld [vmem:[#allocation2 + $0x218] sm:$0xff]
    %v121 = vld [vmem:[#allocation2 + $0x220] sm:$0xff]
    %v122 = vld [vmem:[#allocation2 + $0x228] sm:$0xff]
    %v123 = vld [vmem:[#allocation2 + $0x230] sm:$0xff]
    %v124 = vld [vmem:[#allocation2 + $0x238] sm:$0xff]
    %v125 = vld [vmem:[#allocation2 + $0x240] sm:$0xff]
    %v126 = vld [vmem:[#allocation2 + $0x248] sm:$0xff]
    %v127 = vld [vmem:[#allocation2 + $0x250] sm:$0xff]
    %v128 = vld [vmem:[#allocation2 + $0x258] sm:$0xff]
    %v129 = vld [vmem:[#allocation2 + $0x260] sm:$0xff]
    %v130 = vld [vmem:[#allocation2 + $0x268] sm:$0xff]
    %v131 = vld [vmem:[#allocation2 + $0x270] sm:$0xff]
    %v132 = vld [vmem:[#allocation2 + $0x278] sm:$0xff]
    %v133 = vld [vmem:[#allocation2 + $0x280] sm:$0xff]
    %v134 = vld [vmem:[#allocation2 + $0x288] sm:$0xff]
    %v135 = vld [vmem:[#allocation2 + $0x290] sm:$0xff]
    %v136 = vld [vmem:[%s5] sm:$0xff]
    %v137 = vld [vmem:[%s5 + $0x8] sm:$0xff]
    %v138 = vld [vmem:[%s5 + $0x10] sm:$0xff]
    %v139 = vld [vmem:[%s5 + $0x18] sm:$0xff]
    %v140 = vld [vmem:[%s5 + $0x20] sm:$0xff]
    %v141 = vld [vmem:[%s5 + $0x28] sm:$0xff]
    %v142 = vld [vmem:[%s5 + $0x30] sm:$0xff]
    %v143 = vld [vmem:[%s5 + $0x38] sm:$0xff]
    %v144 = vld [vmem:[%s5 + $0x40] sm:$0xff]
    %v145 = vld [vmem:[%s5 + $0x48] sm:$0xff]
    %v146 = vld [vmem:[%s5 + $0x50] sm:$0xff]
    %v147 = vld [vmem:[%s5 + $0x58] sm:$0xff]
    %v148 = vld [vmem:[%s5 + $0x60] sm:$0xff]
    %v149 = vld [vmem:[%s5 + $0x68] sm:$0xff]
    %v150 = vld [vmem:[%s5 + $0x70] sm:$0xff]
    %v151 = vld [vmem:[%s5 + $0x78] sm:$0xff]
    %v152 = vld [vmem:[%s5 + $0x80] sm:$0xff]
    %v153 = vld [vmem:[%s5 + $0x88] sm:$0xff]
    %v154 = vld [vmem:[%s5 + $0x90] sm:$0xff]
    %v155 = vld [vmem:[%s5 + $0x98] sm:$0xff]
    %v156 = vld [vmem:[%s5 + $0xa0] sm:$0xff]
    %v157 = vld [vmem:[%s5 + $0xa8] sm:$0xff]
    %v158 = vld [vmem:[%s5 + $0xb0] sm:$0xff]
    %v159 = vld [vmem:[%s5 + $0xb8] sm:$0xff]
    %v160 = vld [vmem:[%s5 + $0xc0] sm:$0xff]
    %v161 = vld [vmem:[%s5 + $0xc8] sm:$0xff]
    %v162 = vld [vmem:[%s5 + $0xd0] sm:$0xff]
    %v163 = vld [vmem:[%s5 + $0xd8] sm:$0xff]
    %v164 = vld [vmem:[%s5 + $0xe0] sm:$0xff]
    %v165 = vld [vmem:[%s5 + $0xe8] sm:$0xff]
    %v166 = vld [vmem:[%s5 + $0xf0] sm:$0xff]
    %v167 = vld [vmem:[%s5 + $0xf8] sm:$0xff]
    %v168 = vld [vmem:[%s5 + $0x100] sm:$0xff]
    %v169 = vld [vmem:[%s5 + $0x108] sm:$0xff]
    %v170 = vld [vmem:[%s5 + $0x110] sm:$0xff]
    %v171 = vld [vmem:[%s5 + $0x118] sm:$0xff]
    %v172 = vld [vmem:[%s5 + $0x120] sm:$0xff]
    %v173 = vld [vmem:[%s5 + $0x128] sm:$0xff]
    %v174 = vld [vmem:[%s5 + $0x130] sm:$0xff]
    %v175 = vld [vmem:[%s5 + $0x138] sm:$0xff]
    %v176 = vld [vmem:[%s5 + $0x140] sm:$0xff]
    %v177 = vld [vmem:[%s5 + $0x148] sm:$0xff]
    %v178 = vld [vmem:[%s5 + $0x150] sm:$0xff]
    %v179 = vld [vmem:[%s5 + $0x158] sm:$0xff]
    %v180 = vld [vmem:[%s5 + $0x160] sm:$0xff]
    %v181 = vld [vmem:[%s5 + $0x168] sm:$0xff]
    %v182 = vld [vmem:[%s5 + $0x170] sm:$0xff]
    %v183 = vld [vmem:[%s5 + $0x178] sm:$0xff]
    %v184 = vld [vmem:[%s5 + $0x180] sm:$0xff]
    %v185 = vld [vmem:[%s5 + $0x188] sm:$0xff]
    %v186 = vld [vmem:[%s5 + $0x190] sm:$0xff]
    %v187 = vld [vmem:[%s5 + $0x198] sm:$0xff]
    %v188 = vld [vmem:[%s5 + $0x1a0] sm:$0xff]
    %v189 = vld [vmem:[%s5 + $0x1a8] sm:$0xff]
    %v190 = vld [vmem:[%s5 + $0x1b0] sm:$0xff]
    %v191 = vld [vmem:[%s5 + $0x1b8] sm:$0xff]
    %v192 = vld [vmem:[%s5 + $0x1c0] sm:$0xff]
    %v193 = vld [vmem:[%s5 + $0x1c8] sm:$0xff]
    %v194 = vld [vmem:[%s5 + $0x1d0] sm:$0xff]
    %v195 = vld [vmem:[%s5 + $0x1d8] sm:$0xff]
    %v196 = vld [vmem:[%s5 + $0x1e0] sm:$0xff]
    %v197 = vld [vmem:[%s5 + $0x1e8] sm:$0xff]
    %v198 = vld [vmem:[%s5 + $0x1f0] sm:$0xff]
    %v199 = vld [vmem:[%s5 + $0x1f8] sm:$0xff]
    %v200 = vld [vmem:[%s5 + $0x200] sm:$0xff]
    %v201 = vld [vmem:[%s5 + $0x208] sm:$0xff]
    %v202 = vld [vmem:[%s5 + $0x210] sm:$0xff]
    %v203 = vld [vmem:[%s5 + $0x218] sm:$0xff]
    %v204 = vld [vmem:[%s5 + $0x220] sm:$0xff]
    %v205 = vld [vmem:[%s5 + $0x228] sm:$0xff]
    %v206 = vld [vmem:[%s5 + $0x230] sm:$0xff]
    %v207 = vld [vmem:[%s5 + $0x238] sm:$0xff]
    %v208 = vld [vmem:[%s5 + $0x240] sm:$0xff]
    %v209 = vld [vmem:[%s5 + $0x248] sm:$0xff]
    %v210 = vld [vmem:[%s5 + $0x250] sm:$0xff]
    %v211 = vld [vmem:[%s5 + $0x258] sm:$0xff]
    %v212 = vld [vmem:[%s5 + $0x260] sm:$0xff]
    %v213 = vld [vmem:[%s5 + $0x268] sm:$0xff]
    %v214 = vld [vmem:[%s5 + $0x270] sm:$0xff]
    %v215 = vld [vmem:[%s5 + $0x278] sm:$0xff]
    %v216 = vld [vmem:[%s5 + $0x280] sm:$0xff]
    %v217 = vld [vmem:[%s5 + $0x288] sm:$0xff]
    %v218 = vld [vmem:[%s5 + $0x290] sm:$0xff]
    %v219 = vld [vmem:[%s5 + $0x298] sm:$0xff]
    %v220 = vld [vmem:[%s5 + $0x2a0] sm:$0xff]
    %v221 = vld [vmem:[%s5 + $0x2a8] sm:$0xff]
    %v222 = vld [vmem:[%s5 + $0x2b0] sm:$0xff]
    %v223 = vld [vmem:[%s5 + $0x2b8] sm:$0xff]
    %v224 = vld [vmem:[%s5 + $0x2c0] sm:$0xff]
    %v225 = vld [vmem:[%s5 + $0x2c8] sm:$0xff]
    %v226 = vld [vmem:[%s5 + $0x2d0] sm:$0xff]
    %v227 = vld [vmem:[%s5 + $0x2d8] sm:$0xff]
    %v228 = vld [vmem:[%s5 + $0x2e0] sm:$0xff]
    %v229 = vld [vmem:[%s5 + $0x2e8] sm:$0xff]
    %v230 = vld [vmem:[%s5 + $0x2f0] sm:$0xff]
    %v231 = vld [vmem:[%s5 + $0x2f8] sm:$0xff]
    %v232 = vld [vmem:[%s5 + $0x300] sm:$0xff]
    %v233 = vld [vmem:[%s5 + $0x308] sm:$0xff]
    %v234 = vld [vmem:[%s5 + $0x310] sm:$0xff]
    %v235 = vld [vmem:[%s5 + $0x318] sm:$0xff]
    %v236 = vld [vmem:[%s5 + $0x320] sm:$0xff]
    %v237 = vld [vmem:[%s5 + $0x328] sm:$0xff]
    %v238 = vld [vmem:[%s5 + $0x330] sm:$0xff]
    %v239 = vld [vmem:[%s5 + $0x338] sm:$0xff]
    %v240 = vld [vmem:[%s5 + $0x340] sm:$0xff]
    %v241 = vld [vmem:[%s5 + $0x348] sm:$0xff]
    %v242 = vld [vmem:[%s5 + $0x350] sm:$0xff]
    %v243 = vld [vmem:[%s5 + $0x358] sm:$0xff]
    %v244 = vld [vmem:[%s5 + $0x360] sm:$0xff]
    %v245 = vld [vmem:[%s5 + $0x368] sm:$0xff]
    %v246 = vld [vmem:[%s5 + $0x370] sm:$0xff]
    %v247 = vld [vmem:[%s5 + $0x378] sm:$0xff]
    %v248 = vld [vmem:[%s5 + $0x380] sm:$0xff]
    %v249 = vld [vmem:[%s5 + $0x388] sm:$0xff]
    %v250 = vld [vmem:[%s5 + $0x390] sm:$0xff]
    %v251 = vld [vmem:[%s5 + $0x398] sm:$0xff]
    %v252 = vld [vmem:[%s5 + $0x3a0] sm:$0xff]
    %v253 = vld [vmem:[%s5 + $0x3a8] sm:$0xff]
    %v254 = vld [vmem:[%s5 + $0x3b0] sm:$0xff]
    %v255 = vld [vmem:[%s5 + $0x3b8] sm:$0xff]
    %v256 = vld [vmem:[%s5 + $0x3c0] sm:$0xff]
    %v257 = vld [vmem:[%s5 + $0x3c8] sm:$0xff]
    %v258 = vld [vmem:[%s5 + $0x3d0] sm:$0xff]
    %v259 = vld [vmem:[%s5 + $0x3d8] sm:$0xff]
    %v260 = vld [vmem:[%s5 + $0x3e0] sm:$0xff]
    %v261 = vld [vmem:[%s5 + $0x3e8] sm:$0xff]
    %v262 = vld [vmem:[%s5 + $0x3f0] sm:$0xff]
    %v263 = vld [vmem:[%s5 + $0x3f8] sm:$0xff]
    %v264 = vld [vmem:[%s6] sm:$0xf]
    %v265 = vld [vmem:[%s8] sm:$0x1]
    %v266 = vld [vmem:[%s8 + $0x1] sm:$0x1]
    %v267 = vld [vmem:[%s8 + $0x2] sm:$0x1]
    %v268 = vld [vmem:[%s8 + $0x3] sm:$0x1]
    %v269 = vld [vmem:[%s8 + $0x4] sm:$0x1]
    %v270 = vld [vmem:[%s8 + $0x5] sm:$0x1]
    %v271 = vld [vmem:[%s8 + $0x6] sm:$0x1]
    %v272 = vld [vmem:[%s8 + $0x7] sm:$0x1]
    %v273 = vld [vmem:[%s8 + $0x8] sm:$0x1]
    %v274 = vld [vmem:[%s0] sm:$0xff]
    %v275 = vld [vmem:[%s0 + $0x8] sm:$0xff]
    %v276 = vld [vmem:[%s0 + $0x10] sm:$0xff]
    %v277 = vld [vmem:[%s0 + $0x18] sm:$0xff]
    %vm278 = vcmask 261120
    %v280 = vsel %vm278, %v49, 0
    %v283 = vsel %vm278, %v50, 0
    %v286 = vsel %vm278, %v51, 0
    %v289 = vsel %vm278, %v52, 0
    %291 = vmatprep.subr.mxu0 0.0
    %292 = vmatpush1.msra.mxu0 %v274
    %293 = vmatprep.subr.mxu0 0.0
    %294 = vmatpush1.msra.mxu0 %v275
    %295 = vmatprep.subr.mxu0 0.0
    %296 = vmatpush1.msra.mxu0 %v276
    %297 = vmatprep.subr.mxu0 0.0
    %298 = vmatpush1.msra.mxu0 %v277
    %299 = vmatprep.subr.mxu0 0.0
    %300 = vmatpush1.msra.mxu0 0.0
    %301 = vmatprep.subr.mxu0 0.0
    %302 = vmatpush1.msra.mxu0 0.0
    %303 = vmatprep.subr.mxu0 0.0
    %304 = vmatpush1.msra.mxu0 0.0
    %305 = vmatprep.subr.mxu0 0.0
    %306 = vmatpush1.msra.mxu0 0.0
    %307 = vmatprep.subr.mxu0 0.0
    %308 = vmatpush1.msra.mxu0 0.0
    %309 = vmatprep.subr.mxu0 0.0
    %310 = vmatpush1.msra.mxu0 0.0
    %311 = vmatprep.subr.mxu0 0.0
    %312 = vmatpush1.msra.mxu0 0.0
    %313 = vmatprep.subr.mxu0 0.0
    %314 = vmatpush1.msra.mxu0 0.0
    %315 = vmatprep.subr.mxu0 0.0
    %316 = vmatpush1.msra.mxu0 0.0
    %317 = vmatprep.subr.mxu0 0.0
    %318 = vmatpush1.msra.mxu0 0.0
    %319 = vmatprep.subr.mxu0 0.0
    %320 = vmatpush1.msra.mxu0 0.0
    %321 = vmatprep.subr.mxu0 0.0
    %322 = vmatpush1.msra.mxu0 0.0
    %323 = vmatprep.subr.mxu0 0.0
    %324 = vmatpush1.msra.mxu0 0.0
    %325 = vmatprep.subr.mxu0 0.0
    %326 = vmatpush1.msra.mxu0 0.0
    %327 = vmatprep.subr.mxu0 0.0
    %328 = vmatpush1.msra.mxu0 0.0
    %329 = vmatprep.subr.mxu0 0.0
    %330 = vmatpush1.msra.mxu0 0.0
    %331 = vmatprep.subr.mxu0 0.0
    %332 = vmatpush1.msra.mxu0 0.0
    %333 = vmatprep.subr.mxu0 0.0
    %334 = vmatpush1.msra.mxu0 0.0
    %335 = vmatprep.subr.mxu0 0.0
    %336 = vmatpush1.msra.mxu0 0.0
    %337 = vmatprep.subr.mxu0 0.0
    %338 = vmatpush1.msra.mxu0 0.0
    %339 = vmatprep.subr.mxu0 0.0
    %340 = vmatpush1.msra.mxu0 0.0
    %341 = vmatprep.subr.mxu0 0.0
    %342 = vmatpush1.msra.mxu0 0.0
    %343 = vmatprep.subr.mxu0 0.0
    %344 = vmatpush1.msra.mxu0 0.0
    %345 = vmatprep.subr.mxu0 0.0
    %346 = vmatpush1.msra.mxu0 0.0
    %347 = vmatprep.subr.mxu0 0.0
    %348 = vmatpush1.msra.mxu0 0.0
    %349 = vmatprep.subr.mxu0 0.0
    %350 = vmatpush1.msra.mxu0 0.0
    %351 = vmatprep.subr.mxu0 0.0
    %352 = vmatpush1.msra.mxu0 0.0
    %353 = vmatprep.subr.mxu0 0.0
    %354 = vmatpush1.msra.mxu0 0.0
    %355 = vmatprep.mubr.f32.mxu0 0.0
    %356 = vmatmul.mubr.f32.gmra.mrb[0].mxu0 %v280
    %v357 = vpop.f32.mrb[0].mxu0
    %v358 = vadd.f32 0.0, %v357
    %v359 = vpop.f32.mrb[0].mxu0
    %360 = vmatprep.mubr.f32.mxu0 0.0
    %361 = vmatmul.mubr.f32.gmra.mrb[0].mxu0 %v283
    %v362 = vpop.f32.mrb[0].mxu0
    %v363 = vadd.f32 0.0, %v362
    %v364 = vpop.f32.mrb[0].mxu0
    %365 = vmatprep.mubr.f32.mxu0 0.0
    %366 = vmatmul.mubr.f32.gmra.mrb[0].mxu0 %v286
    %v367 = vpop.f32.mrb[0].mxu0
    %v368 = vadd.f32 0.0, %v367
    %v369 = vpop.f32.mrb[0].mxu0
    %370 = vmatprep.mubr.f32.mxu0 0.0
    %371 = vmatmul.mubr.f32.gmra.mrb[0].mxu0 %v289
    %v372 = vpop.f32.mrb[0].mxu0
    %v373 = vadd.f32 0.0, %v372
    %v374 = vpop.f32.mrb[0].mxu0
    %375 = vdwg.mxu0
    %v376 = vlaneseq
    %v377 = vshrl.u32 %v376, 7
    %v378 = vsub.s32 0, %v377
    %v379 = vrot.slane %v265, %v378
    %vm380 = vcmask 64512
    %v382 = vsel %vm380, %v358, 0
    %v385 = vsel %vm380, %v363, 0
    %v388 = vsel %vm380, %v368, 0
    %v391 = vsel %vm380, %v373, 0
    %393 = vmatprep.subr.mxu0 0.0
    %394 = vmatpush1.msra.mxu0 %v53
    %395 = vmatprep.subr.mxu0 0.0
    %396 = vmatpush1.msra.mxu0 0.0
    %397 = vmatprep.subr.mxu0 0.0
    %398 = vmatpush1.msra.mxu0 0.0
    %399 = vmatprep.subr.mxu0 0.0
    %400 = vmatpush1.msra.mxu0 0.0
    %401 = vmatprep.subr.mxu0 0.0
    %402 = vmatpush1.msra.mxu0 0.0
    %403 = vmatprep.subr.mxu0 0.0
    %404 = vmatpush1.msra.mxu0 0.0
    %405 = vmatprep.subr.mxu0 0.0
    %406 = vmatpush1.msra.mxu0 0.0
    %407 = vmatprep.subr.mxu0 0.0
    %408 = vmatpush1.msra.mxu0 0.0
    %409 = vmatprep.subr.mxu0 0.0
    %410 = vmatpush1.msra.mxu0 0.0
    %411 = vmatprep.subr.mxu0 0.0
    %412 = vmatpush1.msra.mxu0 0.0
    %413 = vmatprep.subr.mxu0 0.0
    %414 = vmatpush1.msra.mxu0 0.0
    %415 = vmatprep.subr.mxu0 0.0
    %416 = vmatpush1.msra.mxu0 0.0
    %417 = vmatprep.subr.mxu0 0.0
    %418 = vmatpush1.msra.mxu0 0.0
    %419 = vmatprep.subr.mxu0 0.0
    %420 = vmatpush1.msra.mxu0 0.0
    %421 = vmatprep.subr.mxu0 0.0
    %422 = vmatpush1.msra.mxu0 0.0
    %423 = vmatprep.subr.mxu0 0.0
    %424 = vmatpush1.msra.mxu0 0.0
    %425 = vmatprep.subr.mxu0 0.0
    %426 = vmatpush1.msra.mxu0 0.0
    %427 = vmatprep.subr.mxu0 0.0
    %428 = vmatpush1.msra.mxu0 0.0
    %429 = vmatprep.subr.mxu0 0.0
    %430 = vmatpush1.msra.mxu0 0.0
    %431 = vmatprep.subr.mxu0 0.0
    %432 = vmatpush1.msra.mxu0 0.0
    %433 = vmatprep.subr.mxu0 0.0
    %434 = vmatpush1.msra.mxu0 0.0
    %435 = vmatprep.subr.mxu0 0.0
    %436 = vmatpush1.msra.mxu0 0.0
    %437 = vmatprep.subr.mxu0 0.0
    %438 = vmatpush1.msra.mxu0 0.0
    %439 = vmatprep.subr.mxu0 0.0
    %440 = vmatpush1.msra.mxu0 0.0
    %441 = vmatprep.subr.mxu0 0.0
    %442 = vmatpush1.msra.mxu0 0.0
    %443 = vmatprep.subr.mxu0 0.0
    %444 = vmatpush1.msra.mxu0 0.0
    %445 = vmatprep.subr.mxu0 0.0
    %446 = vmatpush1.msra.mxu0 0.0
    %447 = vmatprep.subr.mxu0 0.0
    %448 = vmatpush1.msra.mxu0 0.0
    %449 = vmatprep.subr.mxu0 0.0
    %450 = vmatpush1.msra.mxu0 0.0
    %451 = vmatprep.subr.mxu0 0.0
    %452 = vmatpush1.msra.mxu0 0.0
    %453 = vmatprep.subr.mxu0 0.0
    %454 = vmatpush1.msra.mxu0 0.0
    %455 = vmatprep.subr.mxu0 0.0
    %456 = vmatpush1.msra.mxu0 0.0
    %457 = vmatprep.mubr.f32.mxu0 0.0
    %458 = vmatmul.mubr.f32.gmra.mrb[0].mxu0 %v382
    %v459 = vpop.f32.mrb[0].mxu0
    %v460 = vadd.f32 %v379, %v459
    %v461 = vpop.f32.mrb[0].mxu0
    %462 = vmatprep.mubr.f32.mxu0 0.0
    %463 = vmatmul.mubr.f32.gmra.mrb[0].mxu0 %v385
    %v464 = vpop.f32.mrb[0].mxu0
    %v465 = vadd.f32 %v379, %v464
    %v466 = vpop.f32.mrb[0].mxu0
    %467 = vmatprep.mubr.f32.mxu0 0.0
    %468 = vmatmul.mubr.f32.gmra.mrb[0].mxu0 %v388
    %v469 = vpop.f32.mrb[0].mxu0
    %v470 = vadd.f32 %v379, %v469
    %v471 = vpop.f32.mrb[0].mxu0
    %472 = vmatprep.mubr.f32.mxu0 0.0
    %473 = vmatmul.mubr.f32.gmra.mrb[0].mxu0 %v391
    %v474 = vpop.f32.mrb[0].mxu0
    %v475 = vadd.f32 %v379, %v474
    %v476 = vpop.f32.mrb[0].mxu0
    %477 = vdwg.mxu0
    %v478 = vmax.f32 %v460, 0.0
    %v479 = vmax.f32 %v465, 0.0
    %v480 = vmax.f32 %v470, 0.0
    %v481 = vmax.f32 %v475, 0.0
    %v483 = vlaneseq
    %v484 = vshrl.u32 %v483, 7
    %v485 = vsub.s32 0, %v484
    %v486 = vrot.slane %v264, %v485
    %v487 = vlaneseq
    %v488 = vshrl.u32 %v487, 7
    %v489 = vsub.s32 1, %v488
    %v490 = vrot.slane %v264, %v489
    %v491 = vlaneseq
    %v492 = vshrl.u32 %v491, 7
    %v493 = vsub.s32 2, %v492
    %v494 = vrot.slane %v264, %v493
    %v495 = vlaneseq
    %v496 = vshrl.u32 %v495, 7
    %v497 = vsub.s32 3, %v496
    %v498 = vrot.slane %v264, %v497
    %503 = vmatprep.subr.mxu0 %v137
    %504 = vmatpush1.msra.mxu0 %v136
    %505 = vmatprep.subr.mxu0 %v141
    %506 = vmatpush1.msra.mxu0 %v140
    %507 = vmatprep.subr.mxu0 %v145
    %508 = vmatpush1.msra.mxu0 %v144
    %509 = vmatprep.subr.mxu0 %v149
    %510 = vmatpush1.msra.mxu0 %v148
    %511 = vmatprep.subr.mxu0 %v153
    %512 = vmatpush1.msra.mxu0 %v152
    %513 = vmatprep.subr.mxu0 %v157
    %514 = vmatpush1.msra.mxu0 %v156
    %515 = vmatprep.subr.mxu0 %v161
    %516 = vmatpush1.msra.mxu0 %v160
    %517 = vmatprep.subr.mxu0 %v165
    %518 = vmatpush1.msra.mxu0 %v164
    %519 = vmatprep.subr.mxu0 %v169
    %520 = vmatpush1.msra.mxu0 %v168
    %521 = vmatprep.subr.mxu0 %v173
    %522 = vmatpush1.msra.mxu0 %v172
    %523 = vmatprep.subr.mxu0 %v177
    %524 = vmatpush1.msra.mxu0 %v176
    %525 = vmatprep.subr.mxu0 %v181
    %526 = vmatpush1.msra.mxu0 %v180
    %527 = vmatprep.subr.mxu0 %v185
    %528 = vmatpush1.msra.mxu0 %v184
    %529 = vmatprep.subr.mxu0 %v189
    %530 = vmatpush1.msra.mxu0 %v188
    %531 = vmatprep.subr.mxu0 %v193
    %532 = vmatpush1.msra.mxu0 %v192
    %533 = vmatprep.subr.mxu0 %v197
    %534 = vmatpush1.msra.mxu0 %v196
    %535 = vmatprep.subr.mxu0 0.0
    %536 = vmatpush1.msra.mxu0 0.0
    %537 = vmatprep.subr.mxu0 0.0
    %538 = vmatpush1.msra.mxu0 0.0
    %539 = vmatprep.subr.mxu0 0.0
    %540 = vmatpush1.msra.mxu0 0.0
    %541 = vmatprep.subr.mxu0 0.0
    %542 = vmatpush1.msra.mxu0 0.0
    %543 = vmatprep.subr.mxu0 0.0
    %544 = vmatpush1.msra.mxu0 0.0
    %545 = vmatprep.subr.mxu0 0.0
    %546 = vmatpush1.msra.mxu0 0.0
    %547 = vmatprep.subr.mxu0 0.0
    %548 = vmatpush1.msra.mxu0 0.0
    %549 = vmatprep.subr.mxu0 0.0
    %550 = vmatpush1.msra.mxu0 0.0
    %551 = vmatprep.subr.mxu0 0.0
    %552 = vmatpush1.msra.mxu0 0.0
    %553 = vmatprep.subr.mxu0 0.0
    %554 = vmatpush1.msra.mxu0 0.0
    %555 = vmatprep.subr.mxu0 0.0
    %556 = vmatpush1.msra.mxu0 0.0
    %557 = vmatprep.subr.mxu0 0.0
    %558 = vmatpush1.msra.mxu0 0.0
    %559 = vmatprep.subr.mxu0 0.0
    %560 = vmatpush1.msra.mxu0 0.0
    %561 = vmatprep.subr.mxu0 0.0
    %562 = vmatpush1.msra.mxu0 0.0
    %563 = vmatprep.subr.mxu0 0.0
    %564 = vmatpush1.msra.mxu0 0.0
    %565 = vmatprep.subr.mxu0 0.0
    %566 = vmatpush1.msra.mxu0 0.0
    %567 = vmatprep.mubr.f32.mxu0 0.0
    %568 = vmatmul.mubr.f32.gmra.mrb[0].mxu0 %v478
    %v569 = vpop.f32.mrb[0].mxu0
    %v570 = vadd.f32 %v486, %v569
    %v571 = vpop.f32.mrb[0].mxu0
    %v572 = vadd.f32 %v490, %v571
    %573 = vmatprep.mubr.f32.mxu0 0.0
    %574 = vmatmul.mubr.f32.gmra.mrb[0].mxu0 %v479
    %v575 = vpop.f32.mrb[0].mxu0
    %v576 = vadd.f32 %v486, %v575
    %v577 = vpop.f32.mrb[0].mxu0
    %v578 = vadd.f32 %v490, %v577
    %579 = vmatprep.mubr.f32.mxu0 0.0
    %580 = vmatmul.mubr.f32.gmra.mrb[0].mxu0 %v480
    %v581 = vpop.f32.mrb[0].mxu0
    %v582 = vadd.f32 %v486, %v581
    %v583 = vpop.f32.mrb[0].mxu0
    %v584 = vadd.f32 %v490, %v583
    %585 = vmatprep.mubr.f32.mxu0 0.0
    %586 = vmatmul.mubr.f32.gmra.mrb[0].mxu0 %v481
    %v587 = vpop.f32.mrb[0].mxu0
    %v588 = vadd.f32 %v486, %v587
    %v589 = vpop.f32.mrb[0].mxu0
    %v590 = vadd.f32 %v490, %v589
    %591 = vdwg.mxu0
    %592 = vmatprep.subr.mxu0 %v139
    %593 = vmatpush1.msra.mxu0 %v138
    %594 = vmatprep.subr.mxu0 %v143
    %595 = vmatpush1.msra.mxu0 %v142
    %596 = vmatprep.subr.mxu0 %v147
    %597 = vmatpush1.msra.mxu0 %v146
    %598 = vmatprep.subr.mxu0 %v151
    %599 = vmatpush1.msra.mxu0 %v150
    %600 = vmatprep.subr.mxu0 %v155
    %601 = vmatpush1.msra.mxu0 %v154
    %602 = vmatprep.subr.mxu0 %v159
    %603 = vmatpush1.msra.mxu0 %v158
    %604 = vmatprep.subr.mxu0 %v163
    %605 = vmatpush1.msra.mxu0 %v162
    %606 = vmatprep.subr.mxu0 %v167
    %607 = vmatpush1.msra.mxu0 %v166
    %608 = vmatprep.subr.mxu0 %v171
    %609 = vmatpush1.msra.mxu0 %v170
    %610 = vmatprep.subr.mxu0 %v175
    %611 = vmatpush1.msra.mxu0 %v174
    %612 = vmatprep.subr.mxu0 %v179
    %613 = vmatpush1.msra.mxu0 %v178
    %614 = vmatprep.subr.mxu0 %v183
    %615 = vmatpush1.msra.mxu0 %v182
    %616 = vmatprep.subr.mxu0 %v187
    %617 = vmatpush1.msra.mxu0 %v186
    %618 = vmatprep.subr.mxu0 %v191
    %619 = vmatpush1.msra.mxu0 %v190
    %620 = vmatprep.subr.mxu0 %v195
    %621 = vmatpush1.msra.mxu0 %v194
    %622 = vmatprep.subr.mxu0 %v199
    %623 = vmatpush1.msra.mxu0 %v198
    %624 = vmatprep.subr.mxu0 0.0
    %625 = vmatpush1.msra.mxu0 0.0
    %626 = vmatprep.subr.mxu0 0.0
    %627 = vmatpush1.msra.mxu0 0.0
    %628 = vmatprep.subr.mxu0 0.0
    %629 = vmatpush1.msra.mxu0 0.0
    %630 = vmatprep.subr.mxu0 0.0
    %631 = vmatpush1.msra.mxu0 0.0
    %632 = vmatprep.subr.mxu0 0.0
    %633 = vmatpush1.msra.mxu0 0.0
    %634 = vmatprep.subr.mxu0 0.0
    %635 = vmatpush1.msra.mxu0 0.0
    %636 = vmatprep.subr.mxu0 0.0
    %637 = vmatpush1.msra.mxu0 0.0
    %638 = vmatprep.subr.mxu0 0.0
    %639 = vmatpush1.msra.mxu0 0.0
    %640 = vmatprep.subr.mxu0 0.0
    %641 = vmatpush1.msra.mxu0 0.0
    %642 = vmatprep.subr.mxu0 0.0
    %643 = vmatpush1.msra.mxu0 0.0
    %644 = vmatprep.subr.mxu0 0.0
    %645 = vmatpush1.msra.mxu0 0.0
    %646 = vmatprep.subr.mxu0 0.0
    %647 = vmatpush1.msra.mxu0 0.0
    %648 = vmatprep.subr.mxu0 0.0
    %649 = vmatpush1.msra.mxu0 0.0
    %650 = vmatprep.subr.mxu0 0.0
    %651 = vmatpush1.msra.mxu0 0.0
    %652 = vmatprep.subr.mxu0 0.0
    %653 = vmatpush1.msra.mxu0 0.0
    %654 = vmatprep.subr.mxu0 0.0
    %655 = vmatpush1.msra.mxu0 0.0
    %656 = vmatprep.mubr.f32.mxu0 0.0
    %657 = vmatmul.mubr.f32.gmra.mrb[0].mxu0 %v478
    %v658 = vpop.f32.mrb[0].mxu0
    %v659 = vadd.f32 %v494, %v658
    %v660 = vpop.f32.mrb[0].mxu0
    %v661 = vadd.f32 %v498, %v660
    %662 = vmatprep.mubr.f32.mxu0 0.0
    %663 = vmatmul.mubr.f32.gmra.mrb[0].mxu0 %v479
    %v664 = vpop.f32.mrb[0].mxu0
    %v665 = vadd.f32 %v494, %v664
    %v666 = vpop.f32.mrb[0].mxu0
    %v667 = vadd.f32 %v498, %v666
    %668 = vmatprep.mubr.f32.mxu0 0.0
    %669 = vmatmul.mubr.f32.gmra.mrb[0].mxu0 %v480
    %v670 = vpop.f32.mrb[0].mxu0
    %v671 = vadd.f32 %v494, %v670
    %v672 = vpop.f32.mrb[0].mxu0
    %v673 = vadd.f32 %v498, %v672
    %674 = vmatprep.mubr.f32.mxu0 0.0
    %675 = vmatmul.mubr.f32.gmra.mrb[0].mxu0 %v481
    %v676 = vpop.f32.mrb[0].mxu0
    %v677 = vadd.f32 %v494, %v676
    %v678 = vpop.f32.mrb[0].mxu0
    %v679 = vadd.f32 %v498, %v678
    %680 = vdwg.mxu0
    %v681 = vld [vmem:[%s3] sm:$0xff]
    %v682 = vld [vmem:[%s3 + $0x8] sm:$0xff]
    %v683 = vld [vmem:[%s3 + $0x10] sm:$0xff]
    %v684 = vld [vmem:[%s3 + $0x18] sm:$0xff]
    %v685 = vld [vmem:[%s4] sm:$0xff]
    %v686 = vld [vmem:[%s4 + $0x8] sm:$0xff]
    %v687 = vld [vmem:[%s4 + $0x10] sm:$0xff]
    %v688 = vld [vmem:[%s4 + $0x18] sm:$0xff]
    %689 = vmatprep.subr.mxu0 %v201
    %690 = vmatpush1.msra.mxu0 %v200
    %691 = vmatprep.subr.mxu0 %v205
    %692 = vmatpush1.msra.mxu0 %v204
    %693 = vmatprep.subr.mxu0 %v209
    %694 = vmatpush1.msra.mxu0 %v208
    %695 = vmatprep.subr.mxu0 %v213
    %696 = vmatpush1.msra.mxu0 %v212
    %697 = vmatprep.subr.mxu0 %v217
    %698 = vmatpush1.msra.mxu0 %v216
    %699 = vmatprep.subr.mxu0 %v221
    %700 = vmatpush1.msra.mxu0 %v220
    %701 = vmatprep.subr.mxu0 %v225
    %702 = vmatpush1.msra.mxu0 %v224
    %703 = vmatprep.subr.mxu0 %v229
    %704 = vmatpush1.msra.mxu0 %v228
    %705 = vmatprep.subr.mxu0 %v233
    %706 = vmatpush1.msra.mxu0 %v232
    %707 = vmatprep.subr.mxu0 %v237
    %708 = vmatpush1.msra.mxu0 %v236
    %709 = vmatprep.subr.mxu0 %v241
    %710 = vmatpush1.msra.mxu0 %v240
    %711 = vmatprep.subr.mxu0 %v245
    %712 = vmatpush1.msra.mxu0 %v244
    %713 = vmatprep.subr.mxu0 %v249
    %714 = vmatpush1.msra.mxu0 %v248
    %715 = vmatprep.subr.mxu0 %v253
    %716 = vmatpush1.msra.mxu0 %v252
    %717 = vmatprep.subr.mxu0 %v257
    %718 = vmatpush1.msra.mxu0 %v256
    %719 = vmatprep.subr.mxu0 %v261
    %720 = vmatpush1.msra.mxu0 %v260
    %721 = vmatprep.subr.mxu0 0.0
    %722 = vmatpush1.msra.mxu0 0.0
    %723 = vmatprep.subr.mxu0 0.0
    %724 = vmatpush1.msra.mxu0 0.0
    %725 = vmatprep.subr.mxu0 0.0
    %726 = vmatpush1.msra.mxu0 0.0
    %727 = vmatprep.subr.mxu0 0.0
    %728 = vmatpush1.msra.mxu0 0.0
    %729 = vmatprep.subr.mxu0 0.0
    %730 = vmatpush1.msra.mxu0 0.0
    %731 = vmatprep.subr.mxu0 0.0
    %732 = vmatpush1.msra.mxu0 0.0
    %733 = vmatprep.subr.mxu0 0.0
    %734 = vmatpush1.msra.mxu0 0.0
    %735 = vmatprep.subr.mxu0 0.0
    %736 = vmatpush1.msra.mxu0 0.0
    %737 = vmatprep.subr.mxu0 0.0
    %738 = vmatpush1.msra.mxu0 0.0
    %739 = vmatprep.subr.mxu0 0.0
    %740 = vmatpush1.msra.mxu0 0.0
    %741 = vmatprep.subr.mxu0 0.0
    %742 = vmatpush1.msra.mxu0 0.0
    %743 = vmatprep.subr.mxu0 0.0
    %744 = vmatpush1.msra.mxu0 0.0
    %745 = vmatprep.subr.mxu0 0.0
    %746 = vmatpush1.msra.mxu0 0.0
    %747 = vmatprep.subr.mxu0 0.0
    %748 = vmatpush1.msra.mxu0 0.0
    %749 = vmatprep.subr.mxu0 0.0
    %750 = vmatpush1.msra.mxu0 0.0
    %751 = vmatprep.subr.mxu0 0.0
    %752 = vmatpush1.msra.mxu0 0.0
    %753 = vmatprep.mubr.f32.mxu0 0.0
    %754 = vmatmul.mubr.f32.gmra.mrb[0].mxu0 %v681
    %v755 = vpop.f32.mrb[0].mxu0
    %v756 = vadd.f32 0.0, %v755
    %v757 = vpop.f32.mrb[0].mxu0
    %v758 = vadd.f32 0.0, %v757
    %759 = vmatprep.mubr.f32.mxu0 0.0
    %760 = vmatmul.mubr.f32.gmra.mrb[0].mxu0 %v682
    %v761 = vpop.f32.mrb[0].mxu0
    %v762 = vadd.f32 0.0, %v761
    %v763 = vpop.f32.mrb[0].mxu0
    %v764 = vadd.f32 0.0, %v763
    %765 = vmatprep.mubr.f32.mxu0 0.0
    %766 = vmatmul.mubr.f32.gmra.mrb[0].mxu0 %v683
    %v767 = vpop.f32.mrb[0].mxu0
    %v768 = vadd.f32 0.0, %v767
    %v769 = vpop.f32.mrb[0].mxu0
    %v770 = vadd.f32 0.0, %v769
    %771 = vmatprep.mubr.f32.mxu0 0.0
    %772 = vmatmul.mubr.f32.gmra.mrb[0].mxu0 %v684
    %v773 = vpop.f32.mrb[0].mxu0
    %v774 = vadd.f32 0.0, %v773
    %v775 = vpop.f32.mrb[0].mxu0
    %v776 = vadd.f32 0.0, %v775
    %777 = vdwg.mxu0
    %778 = vmatprep.subr.mxu0 %v203
    %779 = vmatpush1.msra.mxu0 %v202
    %780 = vmatprep.subr.mxu0 %v207
    %781 = vmatpush1.msra.mxu0 %v206
    %782 = vmatprep.subr.mxu0 %v211
    %783 = vmatpush1.msra.mxu0 %v210
    %784 = vmatprep.subr.mxu0 %v215
    %785 = vmatpush1.msra.mxu0 %v214
    %786 = vmatprep.subr.mxu0 %v219
    %787 = vmatpush1.msra.mxu0 %v218
    %788 = vmatprep.subr.mxu0 %v223
    %789 = vmatpush1.msra.mxu0 %v222
    %790 = vmatprep.subr.mxu0 %v227
    %791 = vmatpush1.msra.mxu0 %v226
    %792 = vmatprep.subr.mxu0 %v231
    %793 = vmatpush1.msra.mxu0 %v230
    %794 = vmatprep.subr.mxu0 %v235
    %795 = vmatpush1.msra.mxu0 %v234
    %796 = vmatprep.subr.mxu0 %v239
    %797 = vmatpush1.msra.mxu0 %v238
    %798 = vmatprep.subr.mxu0 %v243
    %799 = vmatpush1.msra.mxu0 %v242
    %800 = vmatprep.subr.mxu0 %v247
    %801 = vmatpush1.msra.mxu0 %v246
    %802 = vmatprep.subr.mxu0 %v251
    %803 = vmatpush1.msra.mxu0 %v250
    %804 = vmatprep.subr.mxu0 %v255
    %805 = vmatpush1.msra.mxu0 %v254
    %806 = vmatprep.subr.mxu0 %v259
    %807 = vmatpush1.msra.mxu0 %v258
    %808 = vmatprep.subr.mxu0 %v263
    %809 = vmatpush1.msra.mxu0 %v262
    %810 = vmatprep.subr.mxu0 0.0
    %811 = vmatpush1.msra.mxu0 0.0
    %812 = vmatprep.subr.mxu0 0.0
    %813 = vmatpush1.msra.mxu0 0.0
    %814 = vmatprep.subr.mxu0 0.0
    %815 = vmatpush1.msra.mxu0 0.0
    %816 = vmatprep.subr.mxu0 0.0
    %817 = vmatpush1.msra.mxu0 0.0
    %818 = vmatprep.subr.mxu0 0.0
    %819 = vmatpush1.msra.mxu0 0.0
    %820 = vmatprep.subr.mxu0 0.0
    %821 = vmatpush1.msra.mxu0 0.0
    %822 = vmatprep.subr.mxu0 0.0
    %823 = vmatpush1.msra.mxu0 0.0
    %824 = vmatprep.subr.mxu0 0.0
    %825 = vmatpush1.msra.mxu0 0.0
    %826 = vmatprep.subr.mxu0 0.0
    %827 = vmatpush1.msra.mxu0 0.0
    %828 = vmatprep.subr.mxu0 0.0
    %829 = vmatpush1.msra.mxu0 0.0
    %830 = vmatprep.subr.mxu0 0.0
    %831 = vmatpush1.msra.mxu0 0.0
    %832 = vmatprep.subr.mxu0 0.0
    %833 = vmatpush1.msra.mxu0 0.0
    %834 = vmatprep.subr.mxu0 0.0
    %835 = vmatpush1.msra.mxu0 0.0
    %836 = vmatprep.subr.mxu0 0.0
    %837 = vmatpush1.msra.mxu0 0.0
    %838 = vmatprep.subr.mxu0 0.0
    %839 = vmatpush1.msra.mxu0 0.0
    %840 = vmatprep.subr.mxu0 0.0
    %841 = vmatpush1.msra.mxu0 0.0
    %842 = vmatprep.mubr.f32.mxu0 0.0
    %843 = vmatmul.mubr.f32.gmra.mrb[0].mxu0 %v681
    %v844 = vpop.f32.mrb[0].mxu0
    %v845 = vadd.f32 0.0, %v844
    %v846 = vpop.f32.mrb[0].mxu0
    %v847 = vadd.f32 0.0, %v846
    %848 = vmatprep.mubr.f32.mxu0 0.0
    %849 = vmatmul.mubr.f32.gmra.mrb[0].mxu0 %v682
    %v850 = vpop.f32.mrb[0].mxu0
    %v851 = vadd.f32 0.0, %v850
    %v852 = vpop.f32.mrb[0].mxu0
    %v853 = vadd.f32 0.0, %v852
    %854 = vmatprep.mubr.f32.mxu0 0.0
    %855 = vmatmul.mubr.f32.gmra.mrb[0].mxu0 %v683
    %v856 = vpop.f32.mrb[0].mxu0
    %v857 = vadd.f32 0.0, %v856
    %v858 = vpop.f32.mrb[0].mxu0
    %v859 = vadd.f32 0.0, %v858
    %860 = vmatprep.mubr.f32.mxu0 0.0
    %861 = vmatmul.mubr.f32.gmra.mrb[0].mxu0 %v684
    %v862 = vpop.f32.mrb[0].mxu0
    %v863 = vadd.f32 0.0, %v862
    %v864 = vpop.f32.mrb[0].mxu0
    %v865 = vadd.f32 0.0, %v864
    %866 = vdwg.mxu0
    %v867 = vadd.f32 %v570, %v756
    %v868 = vadd.f32 %v572, %v758
    %v869 = vadd.f32 %v659, %v845
    %v870 = vadd.f32 %v661, %v847
    %v871 = vadd.f32 %v576, %v762
    %v872 = vadd.f32 %v578, %v764
    %v873 = vadd.f32 %v665, %v851
    %v874 = vadd.f32 %v667, %v853
    %v875 = vadd.f32 %v582, %v768
    %v876 = vadd.f32 %v584, %v770
    %v877 = vadd.f32 %v671, %v857
    %v878 = vadd.f32 %v673, %v859
    %v879 = vadd.f32 %v588, %v774
    %v880 = vadd.f32 %v590, %v776
    %v881 = vadd.f32 %v677, %v863
    %v882 = vadd.f32 %v679, %v865
    %v883 = vxor.u32 %v867, 2147483648
    %v884 = vxor.u32 %v871, 2147483648
    %v885 = vxor.u32 %v875, 2147483648
    %v886 = vxor.u32 %v879, 2147483648
    %v887 = vmul.f32 %v883, 1.442695
    %v888 = vpow.pop %v887
    %v889 = vmul.f32 %v884, 1.442695
    %v890 = vpow.pop %v889
    %v891 = vmul.f32 %v885, 1.442695
    %v892 = vpow.pop %v891
    %v893 = vmul.f32 %v886, 1.442695
    %v894 = vpow.pop %v893
    %v895 = vadd.f32 %v888, 1.0
    %v896 = vadd.f32 %v890, 1.0
    %v897 = vadd.f32 %v892, 1.0
    %v898 = vadd.f32 %v894, 1.0
    %v899 = vrcp.pop %v895
    %v900 = vmul.f32 1.0, %v899
    %v901 = vrcp.pop %v896
    %v902 = vmul.f32 1.0, %v901
    %v903 = vrcp.pop %v897
    %v904 = vmul.f32 1.0, %v903
    %v905 = vrcp.pop %v898
    %v906 = vmul.f32 1.0, %v905
    %v907 = vxor.u32 %v868, 2147483648
    %v908 = vxor.u32 %v872, 2147483648
    %v909 = vxor.u32 %v876, 2147483648
    %v910 = vxor.u32 %v880, 2147483648
    %v911 = vmul.f32 %v907, 1.442695
    %v912 = vpow.pop %v911
    %v913 = vmul.f32 %v908, 1.442695
    %v914 = vpow.pop %v913
    %v915 = vmul.f32 %v909, 1.442695
    %v916 = vpow.pop %v915
    %v917 = vmul.f32 %v910, 1.442695
    %v918 = vpow.pop %v917
    %v919 = vadd.f32 %v912, 1.0
    %v920 = vadd.f32 %v914, 1.0
    %v921 = vadd.f32 %v916, 1.0
    %v922 = vadd.f32 %v918, 1.0
    %v923 = vrcp.pop %v919
    %v924 = vmul.f32 1.0, %v923
    %v925 = vrcp.pop %v920
    %v926 = vmul.f32 1.0, %v925
    %v927 = vrcp.pop %v921
    %v928 = vmul.f32 1.0, %v927
    %v929 = vrcp.pop %v922
    %v930 = vmul.f32 1.0, %v929
    %v931 = vtanh.pop %v869
    %v932 = vtanh.pop %v873
    %v933 = vtanh.pop %v877
    %v934 = vtanh.pop %v881
    %v935 = vxor.u32 %v870, 2147483648
    %v936 = vxor.u32 %v874, 2147483648
    %v937 = vxor.u32 %v878, 2147483648
    %v938 = vxor.u32 %v882, 2147483648
    %v939 = vmul.f32 %v935, 1.442695
    %v940 = vpow.pop %v939
    %v941 = vmul.f32 %v936, 1.442695
    %v942 = vpow.pop %v941
    %v943 = vmul.f32 %v937, 1.442695
    %v944 = vpow.pop %v943
    %v945 = vmul.f32 %v938, 1.442695
    %v946 = vpow.pop %v945
    %v947 = vadd.f32 %v940, 1.0
    %v948 = vadd.f32 %v942, 1.0
    %v949 = vadd.f32 %v944, 1.0
    %v950 = vadd.f32 %v946, 1.0
    %v951 = vrcp.pop %v947
    %v952 = vmul.f32 1.0, %v951
    %v953 = vrcp.pop %v948
    %v954 = vmul.f32 1.0, %v953
    %v955 = vrcp.pop %v949
    %v956 = vmul.f32 1.0, %v955
    %v957 = vrcp.pop %v950
    %v958 = vmul.f32 1.0, %v957
    %v959 = vmul.f32 %v924, %v685
    %v960 = vmul.f32 %v926, %v686
    %v961 = vmul.f32 %v928, %v687
    %v962 = vmul.f32 %v930, %v688
    %v963 = vmul.f32 %v900, %v931
    %v964 = vmul.f32 %v902, %v932
    %v965 = vmul.f32 %v904, %v933
    %v966 = vmul.f32 %v906, %v934
    %v967 = vadd.f32 %v959, %v963
    %v968 = vadd.f32 %v960, %v964
    %v969 = vadd.f32 %v961, %v965
    %v970 = vadd.f32 %v962, %v966
    %v971 = vtanh.pop %v967
    %v972 = vtanh.pop %v968
    %v973 = vtanh.pop %v969
    %v974 = vtanh.pop %v970
    %v975 = vmul.f32 %v952, %v971
    %v976 = vmul.f32 %v954, %v972
    %v977 = vmul.f32 %v956, %v973
    %v978 = vmul.f32 %v958, %v974
    %979 = vmatprep.subr.mxu0 %v201
    %980 = vmatpush1.msra.mxu0 %v200
    %981 = vmatprep.subr.mxu0 %v205
    %982 = vmatpush1.msra.mxu0 %v204
    %983 = vmatprep.subr.mxu0 %v209
    %984 = vmatpush1.msra.mxu0 %v208
    %985 = vmatprep.subr.mxu0 %v213
    %986 = vmatpush1.msra.mxu0 %v212
    %987 = vmatprep.subr.mxu0 %v217
    %988 = vmatpush1.msra.mxu0 %v216
    %989 = vmatprep.subr.mxu0 %v221
    %990 = vmatpush1.msra.mxu0 %v220
    %991 = vmatprep.subr.mxu0 %v225
    %992 = vmatpush1.msra.mxu0 %v224
    %993 = vmatprep.subr.mxu0 %v229
    %994 = vmatpush1.msra.mxu0 %v228
    %995 = vmatprep.subr.mxu0 %v233
    %996 = vmatpush1.msra.mxu0 %v232
    %997 = vmatprep.subr.mxu0 %v237
    %998 = vmatpush1.msra.mxu0 %v236
    %999 = vmatprep.subr.mxu0 %v241
    %1000 = vmatpush1.msra.mxu0 %v240
    %1001 = vmatprep.subr.mxu0 %v245
    %1002 = vmatpush1.msra.mxu0 %v244
    %1003 = vmatprep.subr.mxu0 %v249
    %1004 = vmatpush1.msra.mxu0 %v248
    %1005 = vmatprep.subr.mxu0 %v253
    %1006 = vmatpush1.msra.mxu0 %v252
    %1007 = vmatprep.subr.mxu0 %v257
    %1008 = vmatpush1.msra.mxu0 %v256
    %1009 = vmatprep.subr.mxu0 %v261
    %1010 = vmatpush1.msra.mxu0 %v260
    %1011 = vmatprep.subr.mxu0 0.0
    %1012 = vmatpush1.msra.mxu0 0.0
    %1013 = vmatprep.subr.mxu0 0.0
    %1014 = vmatpush1.msra.mxu0 0.0
    %1015 = vmatprep.subr.mxu0 0.0
    %1016 = vmatpush1.msra.mxu0 0.0
    %1017 = vmatprep.subr.mxu0 0.0
    %1018 = vmatpush1.msra.mxu0 0.0
    %1019 = vmatprep.subr.mxu0 0.0
    %1020 = vmatpush1.msra.mxu0 0.0
    %1021 = vmatprep.subr.mxu0 0.0
    %1022 = vmatpush1.msra.mxu0 0.0
    %1023 = vmatprep.subr.mxu0 0.0
    %1024 = vmatpush1.msra.mxu0 0.0
    %1025 = vmatprep.subr.mxu0 0.0
    %1026 = vmatpush1.msra.mxu0 0.0
    %1027 = vmatprep.subr.mxu0 0.0
    %1028 = vmatpush1.msra.mxu0 0.0
    %1029 = vmatprep.subr.mxu0 0.0
    %1030 = vmatpush1.msra.mxu0 0.0
    %1031 = vmatprep.subr.mxu0 0.0
    %1032 = vmatpush1.msra.mxu0 0.0
    %1033 = vmatprep.subr.mxu0 0.0
    %1034 = vmatpush1.msra.mxu0 0.0
    %1035 = vmatprep.subr.mxu0 0.0
    %1036 = vmatpush1.msra.mxu0 0.0
    %1037 = vmatprep.subr.mxu0 0.0
    %1038 = vmatpush1.msra.mxu0 0.0
    %1039 = vmatprep.subr.mxu0 0.0
    %1040 = vmatpush1.msra.mxu0 0.0
    %1041 = vmatprep.subr.mxu0 0.0
    %1042 = vmatpush1.msra.mxu0 0.0
    %1043 = vmatprep.mubr.f32.mxu0 0.0
    %1044 = vmatmul.mubr.f32.gmra.mrb[0].mxu0 %v975
    %v1045 = vpop.f32.mrb[0].mxu0
    %v1046 = vadd.f32 0.0, %v1045
    %v1047 = vpop.f32.mrb[0].mxu0
    %v1048 = vadd.f32 0.0, %v1047
    %1049 = vmatprep.mubr.f32.mxu0 0.0
    %1050 = vmatmul.mubr.f32.gmra.mrb[0].mxu0 %v976
    %v1051 = vpop.f32.mrb[0].mxu0
    %v1052 = vadd.f32 0.0, %v1051
    %v1053 = vpop.f32.mrb[0].mxu0
    %v1054 = vadd.f32 0.0, %v1053
    %1055 = vmatprep.mubr.f32.mxu0 0.0
    %1056 = vmatmul.mubr.f32.gmra.mrb[0].mxu0 %v977
    %v1057 = vpop.f32.mrb[0].mxu0
    %v1058 = vadd.f32 0.0, %v1057
    %v1059 = vpop.f32.mrb[0].mxu0
    %v1060 = vadd.f32 0.0, %v1059
    %1061 = vmatprep.mubr.f32.mxu0 0.0
    %1062 = vmatmul.mubr.f32.gmra.mrb[0].mxu0 %v978
    %v1063 = vpop.f32.mrb[0].mxu0
    %v1064 = vadd.f32 0.0, %v1063
    %v1065 = vpop.f32.mrb[0].mxu0
    %v1066 = vadd.f32 0.0, %v1065
    %1067 = vdwg.mxu0
    %1068 = vmatprep.subr.mxu0 %v203
    %1069 = vmatpush1.msra.mxu0 %v202
    %1070 = vmatprep.subr.mxu0 %v207
    %1071 = vmatpush1.msra.mxu0 %v206
    %1072 = vmatprep.subr.mxu0 %v211
    %1073 = vmatpush1.msra.mxu0 %v210
    %1074 = vmatprep.subr.mxu0 %v215
    %1075 = vmatpush1.msra.mxu0 %v214
    %1076 = vmatprep.subr.mxu0 %v219
    %1077 = vmatpush1.msra.mxu0 %v218
    %1078 = vmatprep.subr.mxu0 %v223
    %1079 = vmatpush1.msra.mxu0 %v222
    %1080 = vmatprep.subr.mxu0 %v227
    %1081 = vmatpush1.msra.mxu0 %v226
    %1082 = vmatprep.subr.mxu0 %v231
    %1083 = vmatpush1.msra.mxu0 %v230
    %1084 = vmatprep.subr.mxu0 %v235
    %1085 = vmatpush1.msra.mxu0 %v234
    %1086 = vmatprep.subr.mxu0 %v239
    %1087 = vmatpush1.msra.mxu0 %v238
    %1088 = vmatprep.subr.mxu0 %v243
    %1089 = vmatpush1.msra.mxu0 %v242
    %1090 = vmatprep.subr.mxu0 %v247
    %1091 = vmatpush1.msra.mxu0 %v246
    %1092 = vmatprep.subr.mxu0 %v251
    %1093 = vmatpush1.msra.mxu0 %v250
    %1094 = vmatprep.subr.mxu0 %v255
    %1095 = vmatpush1.msra.mxu0 %v254
    %1096 = vmatprep.subr.mxu0 %v259
    %1097 = vmatpush1.msra.mxu0 %v258
    %1098 = vmatprep.subr.mxu0 %v263
    %1099 = vmatpush1.msra.mxu0 %v262
    %1100 = vmatprep.subr.mxu0 0.0
    %1101 = vmatpush1.msra.mxu0 0.0
    %1102 = vmatprep.subr.mxu0 0.0
    %1103 = vmatpush1.msra.mxu0 0.0
    %1104 = vmatprep.subr.mxu0 0.0
    %1105 = vmatpush1.msra.mxu0 0.0
    %1106 = vmatprep.subr.mxu0 0.0
    %1107 = vmatpush1.msra.mxu0 0.0
    %1108 = vmatprep.subr.mxu0 0.0
    %1109 = vmatpush1.msra.mxu0 0.0
    %1110 = vmatprep.subr.mxu0 0.0
    %1111 = vmatpush1.msra.mxu0 0.0
    %1112 = vmatprep.subr.mxu0 0.0
    %1113 = vmatpush1.msra.mxu0 0.0
    %1114 = vmatprep.subr.mxu0 0.0
    %1115 = vmatpush1.msra.mxu0 0.0
    %1116 = vmatprep.subr.mxu0 0.0
    %1117 = vmatpush1.msra.mxu0 0.0
    %1118 = vmatprep.subr.mxu0 0.0
    %1119 = vmatpush1.msra.mxu0 0.0
    %1120 = vmatprep.subr.mxu0 0.0
    %1121 = vmatpush1.msra.mxu0 0.0
    %1122 = vmatprep.subr.mxu0 0.0
    %1123 = vmatpush1.msra.mxu0 0.0
    %1124 = vmatprep.subr.mxu0 0.0
    %1125 = vmatpush1.msra.mxu0 0.0
    %1126 = vmatprep.subr.mxu0 0.0
    %1127 = vmatpush1.msra.mxu0 0.0
    %1128 = vmatprep.subr.mxu0 0.0
    %1129 = vmatpush1.msra.mxu0 0.0
    %1130 = vmatprep.subr.mxu0 0.0
    %1131 = vmatpush1.msra.mxu0 0.0
    %1132 = vmatprep.mubr.f32.mxu0 0.0
    %1133 = vmatmul.mubr.f32.gmra.mrb[0].mxu0 %v975
    %v1134 = vpop.f32.mrb[0].mxu0
    %v1135 = vadd.f32 0.0, %v1134
    %v1136 = vpop.f32.mrb[0].mxu0
    %v1137 = vadd.f32 0.0, %v1136
    %1138 = vmatprep.mubr.f32.mxu0 0.0
    %1139 = vmatmul.mubr.f32.gmra.mrb[0].mxu0 %v976
    %v1140 = vpop.f32.mrb[0].mxu0
    %v1141 = vadd.f32 0.0, %v1140
    %v1142 = vpop.f32.mrb[0].mxu0
    %v1143 = vadd.f32 0.0, %v1142
    %1144 = vmatprep.mubr.f32.mxu0 0.0
    %1145 = vmatmul.mubr.f32.gmra.mrb[0].mxu0 %v977
    %v1146 = vpop.f32.mrb[0].mxu0
    %v1147 = vadd.f32 0.0, %v1146
    %v1148 = vpop.f32.mrb[0].mxu0
    %v1149 = vadd.f32 0.0, %v1148
    %1150 = vmatprep.mubr.f32.mxu0 0.0
    %1151 = vmatmul.mubr.f32.gmra.mrb[0].mxu0 %v978
    %v1152 = vpop.f32.mrb[0].mxu0
    %v1153 = vadd.f32 0.0, %v1152
    %v1154 = vpop.f32.mrb[0].mxu0
    %v1155 = vadd.f32 0.0, %v1154
    %1156 = vdwg.mxu0
    %v1157 = vadd.f32 %v570, %v1046
    %v1158 = vadd.f32 %v572, %v1048
    %v1159 = vadd.f32 %v659, %v1135
    %v1160 = vadd.f32 %v661, %v1137
    %v1161 = vadd.f32 %v576, %v1052
    %v1162 = vadd.f32 %v578, %v1054
    %v1163 = vadd.f32 %v665, %v1141
    %v1164 = vadd.f32 %v667, %v1143
    %v1165 = vadd.f32 %v582, %v1058
    %v1166 = vadd.f32 %v584, %v1060
    %v1167 = vadd.f32 %v671, %v1147
    %v1168 = vadd.f32 %v673, %v1149
    %v1169 = vadd.f32 %v588, %v1064
    %v1170 = vadd.f32 %v590, %v1066
    %v1171 = vadd.f32 %v677, %v1153
    %v1172 = vadd.f32 %v679, %v1155
    %v1173 = vxor.u32 %v1157, 2147483648
    %v1174 = vxor.u32 %v1161, 2147483648
    %v1175 = vxor.u32 %v1165, 2147483648
    %v1176 = vxor.u32 %v1169, 2147483648
    %v1177 = vmul.f32 %v1173, 1.442695
    %v1178 = vpow.pop %v1177
    %v1179 = vmul.f32 %v1174, 1.442695
    %v1180 = vpow.pop %v1179
    %v1181 = vmul.f32 %v1175, 1.442695
    %v1182 = vpow.pop %v1181
    %v1183 = vmul.f32 %v1176, 1.442695
    %v1184 = vpow.pop %v1183
    %v1185 = vadd.f32 %v1178, 1.0
    %v1186 = vadd.f32 %v1180, 1.0
    %v1187 = vadd.f32 %v1182, 1.0
    %v1188 = vadd.f32 %v1184, 1.0
    %v1189 = vrcp.pop %v1185
    %v1190 = vmul.f32 1.0, %v1189
    %v1191 = vrcp.pop %v1186
    %v1192 = vmul.f32 1.0, %v1191
    %v1193 = vrcp.pop %v1187
    %v1194 = vmul.f32 1.0, %v1193
    %v1195 = vrcp.pop %v1188
    %v1196 = vmul.f32 1.0, %v1195
    %v1197 = vxor.u32 %v1158, 2147483648
    %v1198 = vxor.u32 %v1162, 2147483648
    %v1199 = vxor.u32 %v1166, 2147483648
    %v1200 = vxor.u32 %v1170, 2147483648
    %v1201 = vmul.f32 %v1197, 1.442695
    %v1202 = vpow.pop %v1201
    %v1203 = vmul.f32 %v1198, 1.442695
    %v1204 = vpow.pop %v1203
    %v1205 = vmul.f32 %v1199, 1.442695
    %v1206 = vpow.pop %v1205
    %v1207 = vmul.f32 %v1200, 1.442695
    %v1208 = vpow.pop %v1207
    %v1209 = vadd.f32 %v1202, 1.0
    %v1210 = vadd.f32 %v1204, 1.0
    %v1211 = vadd.f32 %v1206, 1.0
    %v1212 = vadd.f32 %v1208, 1.0
    %v1213 = vrcp.pop %v1209
    %v1214 = vmul.f32 1.0, %v1213
    %v1215 = vrcp.pop %v1210
    %v1216 = vmul.f32 1.0, %v1215
    %v1217 = vrcp.pop %v1211
    %v1218 = vmul.f32 1.0, %v1217
    %v1219 = vrcp.pop %v1212
    %v1220 = vmul.f32 1.0, %v1219
    %v1221 = vtanh.pop %v1159
    %v1222 = vtanh.pop %v1163
    %v1223 = vtanh.pop %v1167
    %v1224 = vtanh.pop %v1171
    %v1225 = vxor.u32 %v1160, 2147483648
    %v1226 = vxor.u32 %v1164, 2147483648
    %v1227 = vxor.u32 %v1168, 2147483648
    %v1228 = vxor.u32 %v1172, 2147483648
    %v1229 = vmul.f32 %v1225, 1.442695
    %v1230 = vpow.pop %v1229
    %v1231 = vmul.f32 %v1226, 1.442695
    %v1232 = vpow.pop %v1231
    %v1233 = vmul.f32 %v1227, 1.442695
    %v1234 = vpow.pop %v1233
    %v1235 = vmul.f32 %v1228, 1.442695
    %v1236 = vpow.pop %v1235
    %v1237 = vadd.f32 %v1230, 1.0
    %v1238 = vadd.f32 %v1232, 1.0
    %v1239 = vadd.f32 %v1234, 1.0
    %v1240 = vadd.f32 %v1236, 1.0
    %v1241 = vrcp.pop %v1237
    %v1242 = vmul.f32 1.0, %v1241
    %v1243 = vrcp.pop %v1238
    %v1244 = vmul.f32 1.0, %v1243
    %v1245 = vrcp.pop %v1239
    %v1246 = vmul.f32 1.0, %v1245
    %v1247 = vrcp.pop %v1240
    %v1248 = vmul.f32 1.0, %v1247
    %v1249 = vmul.f32 %v1214, %v967
    %v1250 = vmul.f32 %v1216, %v968
    %v1251 = vmul.f32 %v1218, %v969
    %v1252 = vmul.f32 %v1220, %v970
    %v1253 = vmul.f32 %v1190, %v1221
    %v1254 = vmul.f32 %v1192, %v1222
    %v1255 = vmul.f32 %v1194, %v1223
    %v1256 = vmul.f32 %v1196, %v1224
    %v1257 = vadd.f32 %v1249, %v1253
    %v1258 = vadd.f32 %v1250, %v1254
    %v1259 = vadd.f32 %v1251, %v1255
    %v1260 = vadd.f32 %v1252, %v1256
    %v1261 = vtanh.pop %v1257
    %v1262 = vtanh.pop %v1258
    %v1263 = vtanh.pop %v1259
    %v1264 = vtanh.pop %v1260
    %v1265 = vmul.f32 %v1242, %v1261
    %v1266 = vmul.f32 %v1244, %v1262
    %v1267 = vmul.f32 %v1246, %v1263
    %v1268 = vmul.f32 %v1248, %v1264
    %1269 = vmatprep.subr.mxu0 %v201
    %1270 = vmatpush1.msra.mxu0 %v200
    %1271 = vmatprep.subr.mxu0 %v205
    %1272 = vmatpush1.msra.mxu0 %v204
    %1273 = vmatprep.subr.mxu0 %v209
    %1274 = vmatpush1.msra.mxu0 %v208
    %1275 = vmatprep.subr.mxu0 %v213
    %1276 = vmatpush1.msra.mxu0 %v212
    %1277 = vmatprep.subr.mxu0 %v217
    %1278 = vmatpush1.msra.mxu0 %v216
    %1279 = vmatprep.subr.mxu0 %v221
    %1280 = vmatpush1.msra.mxu0 %v220
    %1281 = vmatprep.subr.mxu0 %v225
    %1282 = vmatpush1.msra.mxu0 %v224
    %1283 = vmatprep.subr.mxu0 %v229
    %1284 = vmatpush1.msra.mxu0 %v228
    %1285 = vmatprep.subr.mxu0 %v233
    %1286 = vmatpush1.msra.mxu0 %v232
    %1287 = vmatprep.subr.mxu0 %v237
    %1288 = vmatpush1.msra.mxu0 %v236
    %1289 = vmatprep.subr.mxu0 %v241
    %1290 = vmatpush1.msra.mxu0 %v240
    %1291 = vmatprep.subr.mxu0 %v245
    %1292 = vmatpush1.msra.mxu0 %v244
    %1293 = vmatprep.subr.mxu0 %v249
    %1294 = vmatpush1.msra.mxu0 %v248
    %1295 = vmatprep.subr.mxu0 %v253
    %1296 = vmatpush1.msra.mxu0 %v252
    %1297 = vmatprep.subr.mxu0 %v257
    %1298 = vmatpush1.msra.mxu0 %v256
    %1299 = vmatprep.subr.mxu0 %v261
    %1300 = vmatpush1.msra.mxu0 %v260
    %1301 = vmatprep.subr.mxu0 0.0
    %1302 = vmatpush1.msra.mxu0 0.0
    %1303 = vmatprep.subr.mxu0 0.0
    %1304 = vmatpush1.msra.mxu0 0.0
    %1305 = vmatprep.subr.mxu0 0.0
    %1306 = vmatpush1.msra.mxu0 0.0
    %1307 = vmatprep.subr.mxu0 0.0
    %1308 = vmatpush1.msra.mxu0 0.0
    %1309 = vmatprep.subr.mxu0 0.0
    %1310 = vmatpush1.msra.mxu0 0.0
    %1311 = vmatprep.subr.mxu0 0.0
    %1312 = vmatpush1.msra.mxu0 0.0
    %1313 = vmatprep.subr.mxu0 0.0
    %1314 = vmatpush1.msra.mxu0 0.0
    %1315 = vmatprep.subr.mxu0 0.0
    %1316 = vmatpush1.msra.mxu0 0.0
    %1317 = vmatprep.subr.mxu0 0.0
    %1318 = vmatpush1.msra.mxu0 0.0
    %1319 = vmatprep.subr.mxu0 0.0
    %1320 = vmatpush1.msra.mxu0 0.0
    %1321 = vmatprep.subr.mxu0 0.0
    %1322 = vmatpush1.msra.mxu0 0.0
    %1323 = vmatprep.subr.mxu0 0.0
    %1324 = vmatpush1.msra.mxu0 0.0
    %1325 = vmatprep.subr.mxu0 0.0
    %1326 = vmatpush1.msra.mxu0 0.0
    %1327 = vmatprep.subr.mxu0 0.0
    %1328 = vmatpush1.msra.mxu0 0.0
    %1329 = vmatprep.subr.mxu0 0.0
    %1330 = vmatpush1.msra.mxu0 0.0
    %1331 = vmatprep.subr.mxu0 0.0
    %1332 = vmatpush1.msra.mxu0 0.0
    %1333 = vmatprep.mubr.f32.mxu0 0.0
    %1334 = vmatmul.mubr.f32.gmra.mrb[0].mxu0 %v1265
    %v1335 = vpop.f32.mrb[0].mxu0
    %v1336 = vadd.f32 0.0, %v1335
    %v1337 = vpop.f32.mrb[0].mxu0
    %v1338 = vadd.f32 0.0, %v1337
    %1339 = vmatprep.mubr.f32.mxu0 0.0
    %1340 = vmatmul.mubr.f32.gmra.mrb[0].mxu0 %v1266
    %v1341 = vpop.f32.mrb[0].mxu0
    %v1342 = vadd.f32 0.0, %v1341
    %v1343 = vpop.f32.mrb[0].mxu0
    %v1344 = vadd.f32 0.0, %v1343
    %1345 = vmatprep.mubr.f32.mxu0 0.0
    %1346 = vmatmul.mubr.f32.gmra.mrb[0].mxu0 %v1267
    %v1347 = vpop.f32.mrb[0].mxu0
    %v1348 = vadd.f32 0.0, %v1347
    %v1349 = vpop.f32.mrb[0].mxu0
    %v1350 = vadd.f32 0.0, %v1349
    %1351 = vmatprep.mubr.f32.mxu0 0.0
    %1352 = vmatmul.mubr.f32.gmra.mrb[0].mxu0 %v1268
    %v1353 = vpop.f32.mrb[0].mxu0
    %v1354 = vadd.f32 0.0, %v1353
    %v1355 = vpop.f32.mrb[0].mxu0
    %v1356 = vadd.f32 0.0, %v1355
    %1357 = vdwg.mxu0
    %1358 = vmatprep.subr.mxu0 %v203
    %1359 = vmatpush1.msra.mxu0 %v202
    %1360 = vmatprep.subr.mxu0 %v207
    %1361 = vmatpush1.msra.mxu0 %v206
    %1362 = vmatprep.subr.mxu0 %v211
    %1363 = vmatpush1.msra.mxu0 %v210
    %1364 = vmatprep.subr.mxu0 %v215
    %1365 = vmatpush1.msra.mxu0 %v214
    %1366 = vmatprep.subr.mxu0 %v219
    %1367 = vmatpush1.msra.mxu0 %v218
    %1368 = vmatprep.subr.mxu0 %v223
    %1369 = vmatpush1.msra.mxu0 %v222
    %1370 = vmatprep.subr.mxu0 %v227
    %1371 = vmatpush1.msra.mxu0 %v226
    %1372 = vmatprep.subr.mxu0 %v231
    %1373 = vmatpush1.msra.mxu0 %v230
    %1374 = vmatprep.subr.mxu0 %v235
    %1375 = vmatpush1.msra.mxu0 %v234
    %1376 = vmatprep.subr.mxu0 %v239
    %1377 = vmatpush1.msra.mxu0 %v238
    %1378 = vmatprep.subr.mxu0 %v243
    %1379 = vmatpush1.msra.mxu0 %v242
    %1380 = vmatprep.subr.mxu0 %v247
    %1381 = vmatpush1.msra.mxu0 %v246
    %1382 = vmatprep.subr.mxu0 %v251
    %1383 = vmatpush1.msra.mxu0 %v250
    %1384 = vmatprep.subr.mxu0 %v255
    %1385 = vmatpush1.msra.mxu0 %v254
    %1386 = vmatprep.subr.mxu0 %v259
    %1387 = vmatpush1.msra.mxu0 %v258
    %1388 = vmatprep.subr.mxu0 %v263
    %1389 = vmatpush1.msra.mxu0 %v262
    %1390 = vmatprep.subr.mxu0 0.0
    %1391 = vmatpush1.msra.mxu0 0.0
    %1392 = vmatprep.subr.mxu0 0.0
    %1393 = vmatpush1.msra.mxu0 0.0
    %1394 = vmatprep.subr.mxu0 0.0
    %1395 = vmatpush1.msra.mxu0 0.0
    %1396 = vmatprep.subr.mxu0 0.0
    %1397 = vmatpush1.msra.mxu0 0.0
    %1398 = vmatprep.subr.mxu0 0.0
    %1399 = vmatpush1.msra.mxu0 0.0
    %1400 = vmatprep.subr.mxu0 0.0
    %1401 = vmatpush1.msra.mxu0 0.0
    %1402 = vmatprep.subr.mxu0 0.0
    %1403 = vmatpush1.msra.mxu0 0.0
    %1404 = vmatprep.subr.mxu0 0.0
    %1405 = vmatpush1.msra.mxu0 0.0
    %1406 = vmatprep.subr.mxu0 0.0
    %1407 = vmatpush1.msra.mxu0 0.0
    %1408 = vmatprep.subr.mxu0 0.0
    %1409 = vmatpush1.msra.mxu0 0.0
    %1410 = vmatprep.subr.mxu0 0.0
    %1411 = vmatpush1.msra.mxu0 0.0
    %1412 = vmatprep.subr.mxu0 0.0
    %1413 = vmatpush1.msra.mxu0 0.0
    %1414 = vmatprep.subr.mxu0 0.0
    %1415 = vmatpush1.msra.mxu0 0.0
    %1416 = vmatprep.subr.mxu0 0.0
    %1417 = vmatpush1.msra.mxu0 0.0
    %1418 = vmatprep.subr.mxu0 0.0
    %1419 = vmatpush1.msra.mxu0 0.0
    %1420 = vmatprep.subr.mxu0 0.0
    %1421 = vmatpush1.msra.mxu0 0.0
    %1422 = vmatprep.mubr.f32.mxu0 0.0
    %1423 = vmatmul.mubr.f32.gmra.mrb[0].mxu0 %v1265
    %v1424 = vpop.f32.mrb[0].mxu0
    %v1425 = vadd.f32 0.0, %v1424
    %v1426 = vpop.f32.mrb[0].mxu0
    %v1427 = vadd.f32 0.0, %v1426
    %1428 = vmatprep.mubr.f32.mxu0 0.0
    %1429 = vmatmul.mubr.f32.gmra.mrb[0].mxu0 %v1266
    %v1430 = vpop.f32.mrb[0].mxu0
    %v1431 = vadd.f32 0.0, %v1430
    %v1432 = vpop.f32.mrb[0].mxu0
    %v1433 = vadd.f32 0.0, %v1432
    %1434 = vmatprep.mubr.f32.mxu0 0.0
    %1435 = vmatmul.mubr.f32.gmra.mrb[0].mxu0 %v1267
    %v1436 = vpop.f32.mrb[0].mxu0
    %v1437 = vadd.f32 0.0, %v1436
    %v1438 = vpop.f32.mrb[0].mxu0
    %v1439 = vadd.f32 0.0, %v1438
    %1440 = vmatprep.mubr.f32.mxu0 0.0
    %1441 = vmatmul.mubr.f32.gmra.mrb[0].mxu0 %v1268
    %v1442 = vpop.f32.mrb[0].mxu0
    %v1443 = vadd.f32 0.0, %v1442
    %v1444 = vpop.f32.mrb[0].mxu0
    %v1445 = vadd.f32 0.0, %v1444
    %1446 = vdwg.mxu0
    %v1447 = vadd.f32 %v570, %v1336
    %v1448 = vadd.f32 %v572, %v1338
    %v1449 = vadd.f32 %v659, %v1425
    %v1450 = vadd.f32 %v661, %v1427
    %v1451 = vadd.f32 %v576, %v1342
    %v1452 = vadd.f32 %v578, %v1344
    %v1453 = vadd.f32 %v665, %v1431
    %v1454 = vadd.f32 %v667, %v1433
    %v1455 = vadd.f32 %v582, %v1348
    %v1456 = vadd.f32 %v584, %v1350
    %v1457 = vadd.f32 %v671, %v1437
    %v1458 = vadd.f32 %v673, %v1439
    %v1459 = vadd.f32 %v588, %v1354
    %v1460 = vadd.f32 %v590, %v1356
    %v1461 = vadd.f32 %v677, %v1443
    %v1462 = vadd.f32 %v679, %v1445
    %v1463 = vxor.u32 %v1447, 2147483648
    %v1464 = vxor.u32 %v1451, 2147483648
    %v1465 = vxor.u32 %v1455, 2147483648
    %v1466 = vxor.u32 %v1459, 2147483648
    %v1467 = vmul.f32 %v1463, 1.442695
    %v1468 = vpow.pop %v1467
    %v1469 = vmul.f32 %v1464, 1.442695
    %v1470 = vpow.pop %v1469
    %v1471 = vmul.f32 %v1465, 1.442695
    %v1472 = vpow.pop %v1471
    %v1473 = vmul.f32 %v1466, 1.442695
    %v1474 = vpow.pop %v1473
    %v1475 = vadd.f32 %v1468, 1.0
    %v1476 = vadd.f32 %v1470, 1.0
    %v1477 = vadd.f32 %v1472, 1.0
    %v1478 = vadd.f32 %v1474, 1.0
    %v1479 = vrcp.pop %v1475
    %v1480 = vmul.f32 1.0, %v1479
    %v1481 = vrcp.pop %v1476
    %v1482 = vmul.f32 1.0, %v1481
    %v1483 = vrcp.pop %v1477
    %v1484 = vmul.f32 1.0, %v1483
    %v1485 = vrcp.pop %v1478
    %v1486 = vmul.f32 1.0, %v1485
    %v1487 = vxor.u32 %v1448, 2147483648
    %v1488 = vxor.u32 %v1452, 2147483648
    %v1489 = vxor.u32 %v1456, 2147483648
    %v1490 = vxor.u32 %v1460, 2147483648
    %v1491 = vmul.f32 %v1487, 1.442695
    %v1492 = vpow.pop %v1491
    %v1493 = vmul.f32 %v1488, 1.442695
    %v1494 = vpow.pop %v1493
    %v1495 = vmul.f32 %v1489, 1.442695
    %v1496 = vpow.pop %v1495
    %v1497 = vmul.f32 %v1490, 1.442695
    %v1498 = vpow.pop %v1497
    %v1499 = vadd.f32 %v1492, 1.0
    %v1500 = vadd.f32 %v1494, 1.0
    %v1501 = vadd.f32 %v1496, 1.0
    %v1502 = vadd.f32 %v1498, 1.0
    %v1503 = vrcp.pop %v1499
    %v1504 = vmul.f32 1.0, %v1503
    %v1505 = vrcp.pop %v1500
    %v1506 = vmul.f32 1.0, %v1505
    %v1507 = vrcp.pop %v1501
    %v1508 = vmul.f32 1.0, %v1507
    %v1509 = vrcp.pop %v1502
    %v1510 = vmul.f32 1.0, %v1509
    %v1511 = vtanh.pop %v1449
    %v1512 = vtanh.pop %v1453
    %v1513 = vtanh.pop %v1457
    %v1514 = vtanh.pop %v1461
    %v1515 = vxor.u32 %v1450, 2147483648
    %v1516 = vxor.u32 %v1454, 2147483648
    %v1517 = vxor.u32 %v1458, 2147483648
    %v1518 = vxor.u32 %v1462, 2147483648
    %v1519 = vmul.f32 %v1515, 1.442695
    %v1520 = vpow.pop %v1519
    %v1521 = vmul.f32 %v1516, 1.442695
    %v1522 = vpow.pop %v1521
    %v1523 = vmul.f32 %v1517, 1.442695
    %v1524 = vpow.pop %v1523
    %v1525 = vmul.f32 %v1518, 1.442695
    %v1526 = vpow.pop %v1525
    %v1527 = vadd.f32 %v1520, 1.0
    %v1528 = vadd.f32 %v1522, 1.0
    %v1529 = vadd.f32 %v1524, 1.0
    %v1530 = vadd.f32 %v1526, 1.0
    %v1531 = vrcp.pop %v1527
    %v1532 = vmul.f32 1.0, %v1531
    %v1533 = vrcp.pop %v1528
    %v1534 = vmul.f32 1.0, %v1533
    %v1535 = vrcp.pop %v1529
    %v1536 = vmul.f32 1.0, %v1535
    %v1537 = vrcp.pop %v1530
    %v1538 = vmul.f32 1.0, %v1537
    %v1539 = vmul.f32 %v1504, %v1257
    %v1540 = vmul.f32 %v1506, %v1258
    %v1541 = vmul.f32 %v1508, %v1259
    %v1542 = vmul.f32 %v1510, %v1260
    %v1543 = vmul.f32 %v1480, %v1511
    %v1544 = vmul.f32 %v1482, %v1512
    %v1545 = vmul.f32 %v1484, %v1513
    %v1546 = vmul.f32 %v1486, %v1514
    %v1547 = vadd.f32 %v1539, %v1543
    %v1548 = vadd.f32 %v1540, %v1544
    %v1549 = vadd.f32 %v1541, %v1545
    %v1550 = vadd.f32 %v1542, %v1546
    %v1551 = vtanh.pop %v1547
    %v1552 = vtanh.pop %v1548
    %v1553 = vtanh.pop %v1549
    %v1554 = vtanh.pop %v1550
    %v1555 = vmul.f32 %v1532, %v1551
    %v1556 = vmul.f32 %v1534, %v1552
    %v1557 = vmul.f32 %v1536, %v1553
    %v1558 = vmul.f32 %v1538, %v1554
    %1559 = vmatprep.subr.mxu0 %v201
    %1560 = vmatpush1.msra.mxu0 %v200
    %1561 = vmatprep.subr.mxu0 %v205
    %1562 = vmatpush1.msra.mxu0 %v204
    %1563 = vmatprep.subr.mxu0 %v209
    %1564 = vmatpush1.msra.mxu0 %v208
    %1565 = vmatprep.subr.mxu0 %v213
    %1566 = vmatpush1.msra.mxu0 %v212
    %1567 = vmatprep.subr.mxu0 %v217
    %1568 = vmatpush1.msra.mxu0 %v216
    %1569 = vmatprep.subr.mxu0 %v221
    %1570 = vmatpush1.msra.mxu0 %v220
    %1571 = vmatprep.subr.mxu0 %v225
    %1572 = vmatpush1.msra.mxu0 %v224
    %1573 = vmatprep.subr.mxu0 %v229
    %1574 = vmatpush1.msra.mxu0 %v228
    %1575 = vmatprep.subr.mxu0 %v233
    %1576 = vmatpush1.msra.mxu0 %v232
    %1577 = vmatprep.subr.mxu0 %v237
    %1578 = vmatpush1.msra.mxu0 %v236
    %1579 = vmatprep.subr.mxu0 %v241
    %1580 = vmatpush1.msra.mxu0 %v240
    %1581 = vmatprep.subr.mxu0 %v245
    %1582 = vmatpush1.msra.mxu0 %v244
    %1583 = vmatprep.subr.mxu0 %v249
    %1584 = vmatpush1.msra.mxu0 %v248
    %1585 = vmatprep.subr.mxu0 %v253
    %1586 = vmatpush1.msra.mxu0 %v252
    %1587 = vmatprep.subr.mxu0 %v257
    %1588 = vmatpush1.msra.mxu0 %v256
    %1589 = vmatprep.subr.mxu0 %v261
    %1590 = vmatpush1.msra.mxu0 %v260
    %1591 = vmatprep.subr.mxu0 0.0
    %1592 = vmatpush1.msra.mxu0 0.0
    %1593 = vmatprep.subr.mxu0 0.0
    %1594 = vmatpush1.msra.mxu0 0.0
    %1595 = vmatprep.subr.mxu0 0.0
    %1596 = vmatpush1.msra.mxu0 0.0
    %1597 = vmatprep.subr.mxu0 0.0
    %1598 = vmatpush1.msra.mxu0 0.0
    %1599 = vmatprep.subr.mxu0 0.0
    %1600 = vmatpush1.msra.mxu0 0.0
    %1601 = vmatprep.subr.mxu0 0.0
    %1602 = vmatpush1.msra.mxu0 0.0
    %1603 = vmatprep.subr.mxu0 0.0
    %1604 = vmatpush1.msra.mxu0 0.0
    %1605 = vmatprep.subr.mxu0 0.0
    %1606 = vmatpush1.msra.mxu0 0.0
    %1607 = vmatprep.subr.mxu0 0.0
    %1608 = vmatpush1.msra.mxu0 0.0
    %1609 = vmatprep.subr.mxu0 0.0
    %1610 = vmatpush1.msra.mxu0 0.0
    %1611 = vmatprep.subr.mxu0 0.0
    %1612 = vmatpush1.msra.mxu0 0.0
    %1613 = vmatprep.subr.mxu0 0.0
    %1614 = vmatpush1.msra.mxu0 0.0
    %1615 = vmatprep.subr.mxu0 0.0
    %1616 = vmatpush1.msra.mxu0 0.0
    %1617 = vmatprep.subr.mxu0 0.0
    %1618 = vmatpush1.msra.mxu0 0.0
    %1619 = vmatprep.subr.mxu0 0.0
    %1620 = vmatpush1.msra.mxu0 0.0
    %1621 = vmatprep.subr.mxu0 0.0
    %1622 = vmatpush1.msra.mxu0 0.0
    %1623 = vmatprep.mubr.f32.mxu0 0.0
    %1624 = vmatmul.mubr.f32.gmra.mrb[0].mxu0 %v1555
    %v1625 = vpop.f32.mrb[0].mxu0
    %v1626 = vadd.f32 0.0, %v1625
    %v1627 = vpop.f32.mrb[0].mxu0
    %v1628 = vadd.f32 0.0, %v1627
    %1629 = vmatprep.mubr.f32.mxu0 0.0
    %1630 = vmatmul.mubr.f32.gmra.mrb[0].mxu0 %v1556
    %v1631 = vpop.f32.mrb[0].mxu0
    %v1632 = vadd.f32 0.0, %v1631
    %v1633 = vpop.f32.mrb[0].mxu0
    %v1634 = vadd.f32 0.0, %v1633
    %1635 = vmatprep.mubr.f32.mxu0 0.0
    %1636 = vmatmul.mubr.f32.gmra.mrb[0].mxu0 %v1557
    %v1637 = vpop.f32.mrb[0].mxu0
    %v1638 = vadd.f32 0.0, %v1637
    %v1639 = vpop.f32.mrb[0].mxu0
    %v1640 = vadd.f32 0.0, %v1639
    %1641 = vmatprep.mubr.f32.mxu0 0.0
    %1642 = vmatmul.mubr.f32.gmra.mrb[0].mxu0 %v1558
    %v1643 = vpop.f32.mrb[0].mxu0
    %v1644 = vadd.f32 0.0, %v1643
    %v1645 = vpop.f32.mrb[0].mxu0
    %v1646 = vadd.f32 0.0, %v1645
    %1647 = vdwg.mxu0
    %1648 = vmatprep.subr.mxu0 %v203
    %1649 = vmatpush1.msra.mxu0 %v202
    %1650 = vmatprep.subr.mxu0 %v207
    %1651 = vmatpush1.msra.mxu0 %v206
    %1652 = vmatprep.subr.mxu0 %v211
    %1653 = vmatpush1.msra.mxu0 %v210
    %1654 = vmatprep.subr.mxu0 %v215
    %1655 = vmatpush1.msra.mxu0 %v214
    %1656 = vmatprep.subr.mxu0 %v219
    %1657 = vmatpush1.msra.mxu0 %v218
    %1658 = vmatprep.subr.mxu0 %v223
    %1659 = vmatpush1.msra.mxu0 %v222
    %1660 = vmatprep.subr.mxu0 %v227
    %1661 = vmatpush1.msra.mxu0 %v226
    %1662 = vmatprep.subr.mxu0 %v231
    %1663 = vmatpush1.msra.mxu0 %v230
    %1664 = vmatprep.subr.mxu0 %v235
    %1665 = vmatpush1.msra.mxu0 %v234
    %1666 = vmatprep.subr.mxu0 %v239
    %1667 = vmatpush1.msra.mxu0 %v238
    %1668 = vmatprep.subr.mxu0 %v243
    %1669 = vmatpush1.msra.mxu0 %v242
    %1670 = vmatprep.subr.mxu0 %v247
    %1671 = vmatpush1.msra.mxu0 %v246
    %1672 = vmatprep.subr.mxu0 %v251
    %1673 = vmatpush1.msra.mxu0 %v250
    %1674 = vmatprep.subr.mxu0 %v255
    %1675 = vmatpush1.msra.mxu0 %v254
    %1676 = vmatprep.subr.mxu0 %v259
    %1677 = vmatpush1.msra.mxu0 %v258
    %1678 = vmatprep.subr.mxu0 %v263
    %1679 = vmatpush1.msra.mxu0 %v262
    %1680 = vmatprep.subr.mxu0 0.0
    %1681 = vmatpush1.msra.mxu0 0.0
    %1682 = vmatprep.subr.mxu0 0.0
    %1683 = vmatpush1.msra.mxu0 0.0
    %1684 = vmatprep.subr.mxu0 0.0
    %1685 = vmatpush1.msra.mxu0 0.0
    %1686 = vmatprep.subr.mxu0 0.0
    %1687 = vmatpush1.msra.mxu0 0.0
    %1688 = vmatprep.subr.mxu0 0.0
    %1689 = vmatpush1.msra.mxu0 0.0
    %1690 = vmatprep.subr.mxu0 0.0
    %1691 = vmatpush1.msra.mxu0 0.0
    %1692 = vmatprep.subr.mxu0 0.0
    %1693 = vmatpush1.msra.mxu0 0.0
    %1694 = vmatprep.subr.mxu0 0.0
    %1695 = vmatpush1.msra.mxu0 0.0
    %1696 = vmatprep.subr.mxu0 0.0
    %1697 = vmatpush1.msra.mxu0 0.0
    %1698 = vmatprep.subr.mxu0 0.0
    %1699 = vmatpush1.msra.mxu0 0.0
    %1700 = vmatprep.subr.mxu0 0.0
    %1701 = vmatpush1.msra.mxu0 0.0
    %1702 = vmatprep.subr.mxu0 0.0
    %1703 = vmatpush1.msra.mxu0 0.0
    %1704 = vmatprep.subr.mxu0 0.0
    %1705 = vmatpush1.msra.mxu0 0.0
    %1706 = vmatprep.subr.mxu0 0.0
    %1707 = vmatpush1.msra.mxu0 0.0
    %1708 = vmatprep.subr.mxu0 0.0
    %1709 = vmatpush1.msra.mxu0 0.0
    %1710 = vmatprep.subr.mxu0 0.0
    %1711 = vmatpush1.msra.mxu0 0.0
    %1712 = vmatprep.mubr.f32.mxu0 0.0
    %1713 = vmatmul.mubr.f32.gmra.mrb[0].mxu0 %v1555
    %v1714 = vpop.f32.mrb[0].mxu0
    %v1715 = vadd.f32 0.0, %v1714
    %v1716 = vpop.f32.mrb[0].mxu0
    %v1717 = vadd.f32 0.0, %v1716
    %1718 = vmatprep.mubr.f32.mxu0 0.0
    %1719 = vmatmul.mubr.f32.gmra.mrb[0].mxu0 %v1556
    %v1720 = vpop.f32.mrb[0].mxu0
    %v1721 = vadd.f32 0.0, %v1720
    %v1722 = vpop.f32.mrb[0].mxu0
    %v1723 = vadd.f32 0.0, %v1722
    %1724 = vmatprep.mubr.f32.mxu0 0.0
    %1725 = vmatmul.mubr.f32.gmra.mrb[0].mxu0 %v1557
    %v1726 = vpop.f32.mrb[0].mxu0
    %v1727 = vadd.f32 0.0, %v1726
    %v1728 = vpop.f32.mrb[0].mxu0
    %v1729 = vadd.f32 0.0, %v1728
    %1730 = vmatprep.mubr.f32.mxu0 0.0
    %1731 = vmatmul.mubr.f32.gmra.mrb[0].mxu0 %v1558
    %v1732 = vpop.f32.mrb[0].mxu0
    %v1733 = vadd.f32 0.0, %v1732
    %v1734 = vpop.f32.mrb[0].mxu0
    %v1735 = vadd.f32 0.0, %v1734
    %1736 = vdwg.mxu0
    %v1737 = vadd.f32 %v570, %v1626
    %v1738 = vadd.f32 %v572, %v1628
    %v1739 = vadd.f32 %v659, %v1715
    %v1740 = vadd.f32 %v661, %v1717
    %v1741 = vadd.f32 %v576, %v1632
    %v1742 = vadd.f32 %v578, %v1634
    %v1743 = vadd.f32 %v665, %v1721
    %v1744 = vadd.f32 %v667, %v1723
    %v1745 = vadd.f32 %v582, %v1638
    %v1746 = vadd.f32 %v584, %v1640
    %v1747 = vadd.f32 %v671, %v1727
    %v1748 = vadd.f32 %v673, %v1729
    %v1749 = vadd.f32 %v588, %v1644
    %v1750 = vadd.f32 %v590, %v1646
    %v1751 = vadd.f32 %v677, %v1733
    %v1752 = vadd.f32 %v679, %v1735
    %v1753 = vxor.u32 %v1737, 2147483648
    %v1754 = vxor.u32 %v1741, 2147483648
    %v1755 = vxor.u32 %v1745, 2147483648
    %v1756 = vxor.u32 %v1749, 2147483648
    %v1757 = vmul.f32 %v1753, 1.442695
    %v1758 = vpow.pop %v1757
    %v1759 = vmul.f32 %v1754, 1.442695
    %v1760 = vpow.pop %v1759
    %v1761 = vmul.f32 %v1755, 1.442695
    %v1762 = vpow.pop %v1761
    %v1763 = vmul.f32 %v1756, 1.442695
    %v1764 = vpow.pop %v1763
    %v1765 = vadd.f32 %v1758, 1.0
    %v1766 = vadd.f32 %v1760, 1.0
    %v1767 = vadd.f32 %v1762, 1.0
    %v1768 = vadd.f32 %v1764, 1.0
    %v1769 = vrcp.pop %v1765
    %v1770 = vmul.f32 1.0, %v1769
    %v1771 = vrcp.pop %v1766
    %v1772 = vmul.f32 1.0, %v1771
    %v1773 = vrcp.pop %v1767
    %v1774 = vmul.f32 1.0, %v1773
    %v1775 = vrcp.pop %v1768
    %v1776 = vmul.f32 1.0, %v1775
    %v1777 = vxor.u32 %v1738, 2147483648
    %v1778 = vxor.u32 %v1742, 2147483648
    %v1779 = vxor.u32 %v1746, 2147483648
    %v1780 = vxor.u32 %v1750, 2147483648
    %v1781 = vmul.f32 %v1777, 1.442695
    %v1782 = vpow.pop %v1781
    %v1783 = vmul.f32 %v1778, 1.442695
    %v1784 = vpow.pop %v1783
    %v1785 = vmul.f32 %v1779, 1.442695
    %v1786 = vpow.pop %v1785
    %v1787 = vmul.f32 %v1780, 1.442695
    %v1788 = vpow.pop %v1787
    %v1789 = vadd.f32 %v1782, 1.0
    %v1790 = vadd.f32 %v1784, 1.0
    %v1791 = vadd.f32 %v1786, 1.0
    %v1792 = vadd.f32 %v1788, 1.0
    %v1793 = vrcp.pop %v1789
    %v1794 = vmul.f32 1.0, %v1793
    %v1795 = vrcp.pop %v1790
    %v1796 = vmul.f32 1.0, %v1795
    %v1797 = vrcp.pop %v1791
    %v1798 = vmul.f32 1.0, %v1797
    %v1799 = vrcp.pop %v1792
    %v1800 = vmul.f32 1.0, %v1799
    %v1801 = vtanh.pop %v1739
    %v1802 = vtanh.pop %v1743
    %v1803 = vtanh.pop %v1747
    %v1804 = vtanh.pop %v1751
    %v1805 = vxor.u32 %v1740, 2147483648
    %v1806 = vxor.u32 %v1744, 2147483648
    %v1807 = vxor.u32 %v1748, 2147483648
    %v1808 = vxor.u32 %v1752, 2147483648
    %v1809 = vmul.f32 %v1805, 1.442695
    %v1810 = vpow.pop %v1809
    %v1811 = vmul.f32 %v1806, 1.442695
    %v1812 = vpow.pop %v1811
    %v1813 = vmul.f32 %v1807, 1.442695
    %v1814 = vpow.pop %v1813
    %v1815 = vmul.f32 %v1808, 1.442695
    %v1816 = vpow.pop %v1815
    %v1817 = vadd.f32 %v1810, 1.0
    %v1818 = vadd.f32 %v1812, 1.0
    %v1819 = vadd.f32 %v1814, 1.0
    %v1820 = vadd.f32 %v1816, 1.0
    %v1821 = vrcp.pop %v1817
    %v1822 = vmul.f32 1.0, %v1821
    %v1823 = vrcp.pop %v1818
    %v1824 = vmul.f32 1.0, %v1823
    %v1825 = vrcp.pop %v1819
    %v1826 = vmul.f32 1.0, %v1825
    %v1827 = vrcp.pop %v1820
    %v1828 = vmul.f32 1.0, %v1827
    %v1829 = vmul.f32 %v1794, %v1547
    %v1830 = vmul.f32 %v1796, %v1548
    %v1831 = vmul.f32 %v1798, %v1549
    %v1832 = vmul.f32 %v1800, %v1550
    %v1833 = vmul.f32 %v1770, %v1801
    %v1834 = vmul.f32 %v1772, %v1802
    %v1835 = vmul.f32 %v1774, %v1803
    %v1836 = vmul.f32 %v1776, %v1804
    %v1837 = vadd.f32 %v1829, %v1833
    %v1838 = vadd.f32 %v1830, %v1834
    %v1839 = vadd.f32 %v1831, %v1835
    %v1840 = vadd.f32 %v1832, %v1836
    %v1841 = vtanh.pop %v1837
    %v1842 = vtanh.pop %v1838
    %v1843 = vtanh.pop %v1839
    %v1844 = vtanh.pop %v1840
    %v1845 = vmul.f32 %v1822, %v1841
    %v1846 = vmul.f32 %v1824, %v1842
    %v1847 = vmul.f32 %v1826, %v1843
    %v1848 = vmul.f32 %v1828, %v1844
    %1849 = vmatprep.subr.mxu0 0.0
    %1850 = vmatpush1.msra.mxu0 %v975
    %1851 = vmatprep.subr.mxu0 0.0
    %1852 = vmatpush1.msra.mxu0 %v976
    %1853 = vmatprep.subr.mxu0 0.0
    %1854 = vmatpush1.msra.mxu0 %v977
    %1855 = vmatprep.subr.mxu0 0.0
    %1856 = vmatpush1.msra.mxu0 %v978
    %1857 = vmatprep.subr.mxu0 0.0
    %1858 = vmatpush1.msra.mxu0 %v1265
    %1859 = vmatprep.subr.mxu0 0.0
    %1860 = vmatpush1.msra.mxu0 %v1266
    %1861 = vmatprep.subr.mxu0 0.0
    %1862 = vmatpush1.msra.mxu0 %v1267
    %1863 = vmatprep.subr.mxu0 0.0
    %1864 = vmatpush1.msra.mxu0 %v1268
    %1865 = vmatprep.subr.mxu0 0.0
    %1866 = vmatpush1.msra.mxu0 %v1555
    %1867 = vmatprep.subr.mxu0 0.0
    %1868 = vmatpush1.msra.mxu0 %v1556
    %1869 = vmatprep.subr.mxu0 0.0
    %1870 = vmatpush1.msra.mxu0 %v1557
    %1871 = vmatprep.subr.mxu0 0.0
    %1872 = vmatpush1.msra.mxu0 %v1558
    %1873 = vmatprep.subr.mxu0 0.0
    %1874 = vmatpush1.msra.mxu0 %v1845
    %1875 = vmatprep.subr.mxu0 0.0
    %1876 = vmatpush1.msra.mxu0 %v1846
    %1877 = vmatprep.subr.mxu0 0.0
    %1878 = vmatpush1.msra.mxu0 %v1847
    %1879 = vmatprep.subr.mxu0 0.0
    %1880 = vmatpush1.msra.mxu0 %v1848
    %1881 = vmatprep.subr.mxu0 0.0
    %1882 = vmatpush1.msra.mxu0 0.0
    %1883 = vmatprep.subr.mxu0 0.0
    %1884 = vmatpush1.msra.mxu0 0.0
    %1885 = vmatprep.subr.mxu0 0.0
    %1886 = vmatpush1.msra.mxu0 0.0
    %1887 = vmatprep.subr.mxu0 0.0
    %1888 = vmatpush1.msra.mxu0 0.0
    %1889 = vmatprep.subr.mxu0 0.0
    %1890 = vmatpush1.msra.mxu0 0.0
    %1891 = vmatprep.subr.mxu0 0.0
    %1892 = vmatpush1.msra.mxu0 0.0
    %1893 = vmatprep.subr.mxu0 0.0
    %1894 = vmatpush1.msra.mxu0 0.0
    %1895 = vmatprep.subr.mxu0 0.0
    %1896 = vmatpush1.msra.mxu0 0.0
    %1897 = vmatprep.subr.mxu0 0.0
    %1898 = vmatpush1.msra.mxu0 0.0
    %1899 = vmatprep.subr.mxu0 0.0
    %1900 = vmatpush1.msra.mxu0 0.0
    %1901 = vmatprep.subr.mxu0 0.0
    %1902 = vmatpush1.msra.mxu0 0.0
    %1903 = vmatprep.subr.mxu0 0.0
    %1904 = vmatpush1.msra.mxu0 0.0
    %1905 = vmatprep.subr.mxu0 0.0
    %1906 = vmatpush1.msra.mxu0 0.0
    %1907 = vmatprep.subr.mxu0 0.0
    %1908 = vmatpush1.msra.mxu0 0.0
    %1909 = vmatprep.subr.mxu0 0.0
    %1910 = vmatpush1.msra.mxu0 0.0
    %1911 = vmatprep.subr.mxu0 0.0
    %1912 = vmatpush1.msra.mxu0 0.0
    %1913 = vmatprep.mubr.f32.mxu0 0.0
    %1914 = vmatmul.mubr.f32.gmra.mrb[0].mxu0 %v54
    %v1915 = vpop.f32.mrb[0].mxu0
    %v1916 = vadd.f32 0.0, %v1915
    %v1917 = vpop.f32.mrb[0].mxu0
    %1918 = vdwg.mxu0
    %v1919 = vlaneseq
    %v1920 = vshrl.u32 %v1919, 7
    %v1921 = vsub.s32 0, %v1920
    %v1922 = vrot.slane %v266, %v1921
    %1923 = vmatprep.subr.mxu0 0.0
    %1924 = vmatpush1.msra.mxu0 %v71
    %1925 = vmatprep.subr.mxu0 0.0
    %1926 = vmatpush1.msra.mxu0 %v72
    %1927 = vmatprep.subr.mxu0 0.0
    %1928 = vmatpush1.msra.mxu0 %v73
    %1929 = vmatprep.subr.mxu0 0.0
    %1930 = vmatpush1.msra.mxu0 %v74
    %1931 = vmatprep.subr.mxu0 0.0
    %1932 = vmatpush1.msra.mxu0 %v75
    %1933 = vmatprep.subr.mxu0 0.0
    %1934 = vmatpush1.msra.mxu0 %v76
    %1935 = vmatprep.subr.mxu0 0.0
    %1936 = vmatpush1.msra.mxu0 %v77
    %1937 = vmatprep.subr.mxu0 0.0
    %1938 = vmatpush1.msra.mxu0 %v78
    %1939 = vmatprep.subr.mxu0 0.0
    %1940 = vmatpush1.msra.mxu0 %v79
    %1941 = vmatprep.subr.mxu0 0.0
    %1942 = vmatpush1.msra.mxu0 %v80
    %1943 = vmatprep.subr.mxu0 0.0
    %1944 = vmatpush1.msra.mxu0 %v81
    %1945 = vmatprep.subr.mxu0 0.0
    %1946 = vmatpush1.msra.mxu0 %v82
    %1947 = vmatprep.subr.mxu0 0.0
    %1948 = vmatpush1.msra.mxu0 %v83
    %1949 = vmatprep.subr.mxu0 0.0
    %1950 = vmatpush1.msra.mxu0 %v84
    %1951 = vmatprep.subr.mxu0 0.0
    %1952 = vmatpush1.msra.mxu0 %v85
    %1953 = vmatprep.subr.mxu0 0.0
    %1954 = vmatpush1.msra.mxu0 %v86
    %1955 = vmatprep.subr.mxu0 0.0
    %1956 = vmatpush1.msra.mxu0 0.0
    %1957 = vmatprep.subr.mxu0 0.0
    %1958 = vmatpush1.msra.mxu0 0.0
    %1959 = vmatprep.subr.mxu0 0.0
    %1960 = vmatpush1.msra.mxu0 0.0
    %1961 = vmatprep.subr.mxu0 0.0
    %1962 = vmatpush1.msra.mxu0 0.0
    %1963 = vmatprep.subr.mxu0 0.0
    %1964 = vmatpush1.msra.mxu0 0.0
    %1965 = vmatprep.subr.mxu0 0.0
    %1966 = vmatpush1.msra.mxu0 0.0
    %1967 = vmatprep.subr.mxu0 0.0
    %1968 = vmatpush1.msra.mxu0 0.0
    %1969 = vmatprep.subr.mxu0 0.0
    %1970 = vmatpush1.msra.mxu0 0.0
    %1971 = vmatprep.subr.mxu0 0.0
    %1972 = vmatpush1.msra.mxu0 0.0
    %1973 = vmatprep.subr.mxu0 0.0
    %1974 = vmatpush1.msra.mxu0 0.0
    %1975 = vmatprep.subr.mxu0 0.0
    %1976 = vmatpush1.msra.mxu0 0.0
    %1977 = vmatprep.subr.mxu0 0.0
    %1978 = vmatpush1.msra.mxu0 0.0
    %1979 = vmatprep.subr.mxu0 0.0
    %1980 = vmatpush1.msra.mxu0 0.0
    %1981 = vmatprep.subr.mxu0 0.0
    %1982 = vmatpush1.msra.mxu0 0.0
    %1983 = vmatprep.subr.mxu0 0.0
    %1984 = vmatpush1.msra.mxu0 0.0
    %1985 = vmatprep.subr.mxu0 0.0
    %1986 = vmatpush1.msra.mxu0 0.0
    %1987 = vmatprep.mubr.f32.mxu0 0.0
    %1988 = vmatmul.mubr.f32.gmra.mrb[0].mxu0 %v1916
    %v1989 = vpop.f32.mrb[0].mxu0
    %v1990 = vadd.f32 %v1922, %v1989
    %v1991 = vpop.f32.mrb[0].mxu0
    %1992 = vdwg.mxu0
    %1993 = vst [vmem:[#allocation5] sm:$0xff] %v1990
    %v1994 = vlaneseq
    %v1995 = vshrl.u32 %v1994, 7
    %v1996 = vsub.s32 0, %v1995
    %v1997 = vrot.slane %v267, %v1996
    %1998 = vmatprep.subr.mxu0 0.0
    %1999 = vmatpush1.msra.mxu0 %v87
    %2000 = vmatprep.subr.mxu0 0.0
    %2001 = vmatpush1.msra.mxu0 %v88
    %2002 = vmatprep.subr.mxu0 0.0
    %2003 = vmatpush1.msra.mxu0 %v89
    %2004 = vmatprep.subr.mxu0 0.0
    %2005 = vmatpush1.msra.mxu0 %v90
    %2006 = vmatprep.subr.mxu0 0.0
    %2007 = vmatpush1.msra.mxu0 %v91
    %2008 = vmatprep.subr.mxu0 0.0
    %2009 = vmatpush1.msra.mxu0 %v92
    %2010 = vmatprep.subr.mxu0 0.0
    %2011 = vmatpush1.msra.mxu0 %v93
    %2012 = vmatprep.subr.mxu0 0.0
    %2013 = vmatpush1.msra.mxu0 %v94
    %2014 = vmatprep.subr.mxu0 0.0
    %2015 = vmatpush1.msra.mxu0 %v95
    %2016 = vmatprep.subr.mxu0 0.0
    %2017 = vmatpush1.msra.mxu0 %v96
    %2018 = vmatprep.subr.mxu0 0.0
    %2019 = vmatpush1.msra.mxu0 %v97
    %2020 = vmatprep.subr.mxu0 0.0
    %2021 = vmatpush1.msra.mxu0 %v98
    %2022 = vmatprep.subr.mxu0 0.0
    %2023 = vmatpush1.msra.mxu0 %v99
    %2024 = vmatprep.subr.mxu0 0.0
    %2025 = vmatpush1.msra.mxu0 %v100
    %2026 = vmatprep.subr.mxu0 0.0
    %2027 = vmatpush1.msra.mxu0 %v101
    %2028 = vmatprep.subr.mxu0 0.0
    %2029 = vmatpush1.msra.mxu0 %v102
    %2030 = vmatprep.subr.mxu0 0.0
    %2031 = vmatpush1.msra.mxu0 0.0
    %2032 = vmatprep.subr.mxu0 0.0
    %2033 = vmatpush1.msra.mxu0 0.0
    %2034 = vmatprep.subr.mxu0 0.0
    %2035 = vmatpush1.msra.mxu0 0.0
    %2036 = vmatprep.subr.mxu0 0.0
    %2037 = vmatpush1.msra.mxu0 0.0
    %2038 = vmatprep.subr.mxu0 0.0
    %2039 = vmatpush1.msra.mxu0 0.0
    %2040 = vmatprep.subr.mxu0 0.0
    %2041 = vmatpush1.msra.mxu0 0.0
    %2042 = vmatprep.subr.mxu0 0.0
    %2043 = vmatpush1.msra.mxu0 0.0
    %2044 = vmatprep.subr.mxu0 0.0
    %2045 = vmatpush1.msra.mxu0 0.0
    %2046 = vmatprep.subr.mxu0 0.0
    %2047 = vmatpush1.msra.mxu0 0.0
    %2048 = vmatprep.subr.mxu0 0.0
    %2049 = vmatpush1.msra.mxu0 0.0
    %2050 = vmatprep.subr.mxu0 0.0
    %2051 = vmatpush1.msra.mxu0 0.0
    %2052 = vmatprep.subr.mxu0 0.0
    %2053 = vmatpush1.msra.mxu0 0.0
    %2054 = vmatprep.subr.mxu0 0.0
    %2055 = vmatpush1.msra.mxu0 0.0
    %2056 = vmatprep.subr.mxu0 0.0
    %2057 = vmatpush1.msra.mxu0 0.0
    %2058 = vmatprep.subr.mxu0 0.0
    %2059 = vmatpush1.msra.mxu0 0.0
    %2060 = vmatprep.subr.mxu0 0.0
    %2061 = vmatpush1.msra.mxu0 0.0
    %2062 = vmatprep.mubr.f32.mxu0 0.0
    %2063 = vmatmul.mubr.f32.gmra.mrb[0].mxu0 %v975
    %v2064 = vpop.f32.mrb[0].mxu0
    %v2065 = vadd.f32 %v1997, %v2064
    %v2066 = vpop.f32.mrb[0].mxu0
    %2067 = vmatprep.mubr.f32.mxu0 0.0
    %2068 = vmatmul.mubr.f32.gmra.mrb[0].mxu0 %v976
    %v2069 = vpop.f32.mrb[0].mxu0
    %v2070 = vadd.f32 %v1997, %v2069
    %v2071 = vpop.f32.mrb[0].mxu0
    %2072 = vmatprep.mubr.f32.mxu0 0.0
    %2073 = vmatmul.mubr.f32.gmra.mrb[0].mxu0 %v977
    %v2074 = vpop.f32.mrb[0].mxu0
    %v2075 = vadd.f32 %v1997, %v2074
    %v2076 = vpop.f32.mrb[0].mxu0
    %2077 = vmatprep.mubr.f32.mxu0 0.0
    %2078 = vmatmul.mubr.f32.gmra.mrb[0].mxu0 %v978
    %v2079 = vpop.f32.mrb[0].mxu0
    %v2080 = vadd.f32 %v1997, %v2079
    %v2081 = vpop.f32.mrb[0].mxu0
    %2082 = vmatprep.mubr.f32.mxu0 0.0
    %2083 = vmatmul.mubr.f32.gmra.mrb[0].mxu0 %v1265
    %v2084 = vpop.f32.mrb[0].mxu0
    %v2085 = vadd.f32 %v1997, %v2084
    %v2086 = vpop.f32.mrb[0].mxu0
    %2087 = vmatprep.mubr.f32.mxu0 0.0
    %2088 = vmatmul.mubr.f32.gmra.mrb[0].mxu0 %v1266
    %v2089 = vpop.f32.mrb[0].mxu0
    %v2090 = vadd.f32 %v1997, %v2089
    %v2091 = vpop.f32.mrb[0].mxu0
    %2092 = vmatprep.mubr.f32.mxu0 0.0
    %2093 = vmatmul.mubr.f32.gmra.mrb[0].mxu0 %v1267
    %v2094 = vpop.f32.mrb[0].mxu0
    %v2095 = vadd.f32 %v1997, %v2094
    %v2096 = vpop.f32.mrb[0].mxu0
    %2097 = vmatprep.mubr.f32.mxu0 0.0
    %2098 = vmatmul.mubr.f32.gmra.mrb[0].mxu0 %v1268
    %v2099 = vpop.f32.mrb[0].mxu0
    %v2100 = vadd.f32 %v1997, %v2099
    %v2101 = vpop.f32.mrb[0].mxu0
    %2102 = vmatprep.mubr.f32.mxu0 0.0
    %2103 = vmatmul.mubr.f32.gmra.mrb[0].mxu0 %v1555
    %v2104 = vpop.f32.mrb[0].mxu0
    %v2105 = vadd.f32 %v1997, %v2104
    %v2106 = vpop.f32.mrb[0].mxu0
    %2107 = vmatprep.mubr.f32.mxu0 0.0
    %2108 = vmatmul.mubr.f32.gmra.mrb[0].mxu0 %v1556
    %v2109 = vpop.f32.mrb[0].mxu0
    %v2110 = vadd.f32 %v1997, %v2109
    %v2111 = vpop.f32.mrb[0].mxu0
    %2112 = vmatprep.mubr.f32.mxu0 0.0
    %2113 = vmatmul.mubr.f32.gmra.mrb[0].mxu0 %v1557
    %v2114 = vpop.f32.mrb[0].mxu0
    %v2115 = vadd.f32 %v1997, %v2114
    %v2116 = vpop.f32.mrb[0].mxu0
    %2117 = vmatprep.mubr.f32.mxu0 0.0
    %2118 = vmatmul.mubr.f32.gmra.mrb[0].mxu0 %v1558
    %v2119 = vpop.f32.mrb[0].mxu0
    %v2120 = vadd.f32 %v1997, %v2119
    %v2121 = vpop.f32.mrb[0].mxu0
    %2122 = vmatprep.mubr.f32.mxu0 0.0
    %2123 = vmatmul.mubr.f32.gmra.mrb[0].mxu0 %v1845
    %v2124 = vpop.f32.mrb[0].mxu0
    %v2125 = vadd.f32 %v1997, %v2124
    %v2126 = vpop.f32.mrb[0].mxu0
    %2127 = vmatprep.mubr.f32.mxu0 0.0
    %2128 = vmatmul.mubr.f32.gmra.mrb[0].mxu0 %v1846
    %v2129 = vpop.f32.mrb[0].mxu0
    %v2130 = vadd.f32 %v1997, %v2129
    %v2131 = vpop.f32.mrb[0].mxu0
    %2132 = vmatprep.mubr.f32.mxu0 0.0
    %2133 = vmatmul.mubr.f32.gmra.mrb[0].mxu0 %v1847
    %v2134 = vpop.f32.mrb[0].mxu0
    %v2135 = vadd.f32 %v1997, %v2134
    %v2136 = vpop.f32.mrb[0].mxu0
    %2137 = vmatprep.mubr.f32.mxu0 0.0
    %2138 = vmatmul.mubr.f32.gmra.mrb[0].mxu0 %v1848
    %v2139 = vpop.f32.mrb[0].mxu0
    %v2140 = vadd.f32 %v1997, %v2139
    %v2141 = vpop.f32.mrb[0].mxu0
    %2142 = vdwg.mxu0
    %2143 = vmatprep.subr.mxu0 0.0
    %2144 = vmatpush1.msra.mxu0 %v2065
    %2145 = vmatprep.subr.mxu0 0.0
    %2146 = vmatpush1.msra.mxu0 %v2070
    %2147 = vmatprep.subr.mxu0 0.0
    %2148 = vmatpush1.msra.mxu0 %v2075
    %2149 = vmatprep.subr.mxu0 0.0
    %2150 = vmatpush1.msra.mxu0 %v2080
    %2151 = vmatprep.subr.mxu0 0.0
    %2152 = vmatpush1.msra.mxu0 %v2085
    %2153 = vmatprep.subr.mxu0 0.0
    %2154 = vmatpush1.msra.mxu0 %v2090
    %2155 = vmatprep.subr.mxu0 0.0
    %2156 = vmatpush1.msra.mxu0 %v2095
    %2157 = vmatprep.subr.mxu0 0.0
    %2158 = vmatpush1.msra.mxu0 %v2100
    %2159 = vmatprep.subr.mxu0 0.0
    %2160 = vmatpush1.msra.mxu0 %v2105
    %2161 = vmatprep.subr.mxu0 0.0
    %2162 = vmatpush1.msra.mxu0 %v2110
    %2163 = vmatprep.subr.mxu0 0.0
    %2164 = vmatpush1.msra.mxu0 %v2115
    %2165 = vmatprep.subr.mxu0 0.0
    %2166 = vmatpush1.msra.mxu0 %v2120
    %2167 = vmatprep.subr.mxu0 0.0
    %2168 = vmatpush1.msra.mxu0 %v2125
    %2169 = vmatprep.subr.mxu0 0.0
    %2170 = vmatpush1.msra.mxu0 %v2130
    %2171 = vmatprep.subr.mxu0 0.0
    %2172 = vmatpush1.msra.mxu0 %v2135
    %2173 = vmatprep.subr.mxu0 0.0
    %2174 = vmatpush1.msra.mxu0 %v2140
    %2175 = vmatprep.subr.mxu0 0.0
    %2176 = vmatpush1.msra.mxu0 0.0
    %2177 = vmatprep.subr.mxu0 0.0
    %2178 = vmatpush1.msra.mxu0 0.0
    %2179 = vmatprep.subr.mxu0 0.0
    %2180 = vmatpush1.msra.mxu0 0.0
    %2181 = vmatprep.subr.mxu0 0.0
    %2182 = vmatpush1.msra.mxu0 0.0
    %2183 = vmatprep.subr.mxu0 0.0
    %2184 = vmatpush1.msra.mxu0 0.0
    %2185 = vmatprep.subr.mxu0 0.0
    %2186 = vmatpush1.msra.mxu0 0.0
    %2187 = vmatprep.subr.mxu0 0.0
    %2188 = vmatpush1.msra.mxu0 0.0
    %2189 = vmatprep.subr.mxu0 0.0
    %2190 = vmatpush1.msra.mxu0 0.0
    %2191 = vmatprep.subr.mxu0 0.0
    %2192 = vmatpush1.msra.mxu0 0.0
    %2193 = vmatprep.subr.mxu0 0.0
    %2194 = vmatpush1.msra.mxu0 0.0
    %2195 = vmatprep.subr.mxu0 0.0
    %2196 = vmatpush1.msra.mxu0 0.0
    %2197 = vmatprep.subr.mxu0 0.0
    %2198 = vmatpush1.msra.mxu0 0.0
    %2199 = vmatprep.subr.mxu0 0.0
    %2200 = vmatpush1.msra.mxu0 0.0
    %2201 = vmatprep.subr.mxu0 0.0
    %2202 = vmatpush1.msra.mxu0 0.0
    %2203 = vmatprep.subr.mxu0 0.0
    %2204 = vmatpush1.msra.mxu0 0.0
    %2205 = vmatprep.subr.mxu0 0.0
    %2206 = vmatpush1.msra.mxu0 0.0
    %2207 = vmatprep.mubr.f32.mxu0 0.0
    %2208 = vmatmul.mubr.f32.gmra.mrb[0].mxu0 %v55
    %v2209 = vpop.f32.mrb[0].mxu0
    %v2210 = vadd.f32 0.0, %v2209
    %v2211 = vpop.f32.mrb[0].mxu0
    %2212 = vmatprep.mubr.f32.mxu0 0.0
    %2213 = vmatmul.mubr.f32.gmra.mrb[0].mxu0 %v56
    %v2214 = vpop.f32.mrb[0].mxu0
    %v2215 = vadd.f32 0.0, %v2214
    %v2216 = vpop.f32.mrb[0].mxu0
    %2217 = vmatprep.mubr.f32.mxu0 0.0
    %2218 = vmatmul.mubr.f32.gmra.mrb[0].mxu0 %v57
    %v2219 = vpop.f32.mrb[0].mxu0
    %v2220 = vadd.f32 0.0, %v2219
    %v2221 = vpop.f32.mrb[0].mxu0
    %2222 = vmatprep.mubr.f32.mxu0 0.0
    %2223 = vmatmul.mubr.f32.gmra.mrb[0].mxu0 %v58
    %v2224 = vpop.f32.mrb[0].mxu0
    %v2225 = vadd.f32 0.0, %v2224
    %v2226 = vpop.f32.mrb[0].mxu0
    %2227 = vmatprep.mubr.f32.mxu0 0.0
    %2228 = vmatmul.mubr.f32.gmra.mrb[0].mxu0 %v59
    %v2229 = vpop.f32.mrb[0].mxu0
    %v2230 = vadd.f32 0.0, %v2229
    %v2231 = vpop.f32.mrb[0].mxu0
    %2232 = vmatprep.mubr.f32.mxu0 0.0
    %2233 = vmatmul.mubr.f32.gmra.mrb[0].mxu0 %v60
    %v2234 = vpop.f32.mrb[0].mxu0
    %v2235 = vadd.f32 0.0, %v2234
    %v2236 = vpop.f32.mrb[0].mxu0
    %2237 = vmatprep.mubr.f32.mxu0 0.0
    %2238 = vmatmul.mubr.f32.gmra.mrb[0].mxu0 %v61
    %v2239 = vpop.f32.mrb[0].mxu0
    %v2240 = vadd.f32 0.0, %v2239
    %v2241 = vpop.f32.mrb[0].mxu0
    %2242 = vmatprep.mubr.f32.mxu0 0.0
    %2243 = vmatmul.mubr.f32.gmra.mrb[0].mxu0 %v62
    %v2244 = vpop.f32.mrb[0].mxu0
    %v2245 = vadd.f32 0.0, %v2244
    %v2246 = vpop.f32.mrb[0].mxu0
    %2247 = vmatprep.mubr.f32.mxu0 0.0
    %2248 = vmatmul.mubr.f32.gmra.mrb[0].mxu0 %v63
    %v2249 = vpop.f32.mrb[0].mxu0
    %v2250 = vadd.f32 0.0, %v2249
    %v2251 = vpop.f32.mrb[0].mxu0
    %2252 = vmatprep.mubr.f32.mxu0 0.0
    %2253 = vmatmul.mubr.f32.gmra.mrb[0].mxu0 %v64
    %v2254 = vpop.f32.mrb[0].mxu0
    %v2255 = vadd.f32 0.0, %v2254
    %v2256 = vpop.f32.mrb[0].mxu0
    %2257 = vmatprep.mubr.f32.mxu0 0.0
    %2258 = vmatmul.mubr.f32.gmra.mrb[0].mxu0 %v65
    %v2259 = vpop.f32.mrb[0].mxu0
    %v2260 = vadd.f32 0.0, %v2259
    %v2261 = vpop.f32.mrb[0].mxu0
    %2262 = vmatprep.mubr.f32.mxu0 0.0
    %2263 = vmatmul.mubr.f32.gmra.mrb[0].mxu0 %v66
    %v2264 = vpop.f32.mrb[0].mxu0
    %v2265 = vadd.f32 0.0, %v2264
    %v2266 = vpop.f32.mrb[0].mxu0
    %2267 = vmatprep.mubr.f32.mxu0 0.0
    %2268 = vmatmul.mubr.f32.gmra.mrb[0].mxu0 %v67
    %v2269 = vpop.f32.mrb[0].mxu0
    %v2270 = vadd.f32 0.0, %v2269
    %v2271 = vpop.f32.mrb[0].mxu0
    %2272 = vmatprep.mubr.f32.mxu0 0.0
    %2273 = vmatmul.mubr.f32.gmra.mrb[0].mxu0 %v68
    %v2274 = vpop.f32.mrb[0].mxu0
    %v2275 = vadd.f32 0.0, %v2274
    %v2276 = vpop.f32.mrb[0].mxu0
    %2277 = vmatprep.mubr.f32.mxu0 0.0
    %2278 = vmatmul.mubr.f32.gmra.mrb[0].mxu0 %v69
    %v2279 = vpop.f32.mrb[0].mxu0
    %v2280 = vadd.f32 0.0, %v2279
    %v2281 = vpop.f32.mrb[0].mxu0
    %2282 = vmatprep.mubr.f32.mxu0 0.0
    %2283 = vmatmul.mubr.f32.gmra.mrb[0].mxu0 %v70
    %v2284 = vpop.f32.mrb[0].mxu0
    %v2285 = vadd.f32 0.0, %v2284
    %v2286 = vpop.f32.mrb[0].mxu0
    %2287 = vdwg.mxu0
    %v2288 = vmul.f32 %v2065, %v2065
    %v2289 = vmul.f32 %v2070, %v2070
    %v2290 = vmul.f32 %v2075, %v2075
    %v2291 = vmul.f32 %v2080, %v2080
    %v2292 = vmul.f32 %v2085, %v2085
    %v2293 = vmul.f32 %v2090, %v2090
    %v2294 = vmul.f32 %v2095, %v2095
    %v2295 = vmul.f32 %v2100, %v2100
    %v2296 = vmul.f32 %v2105, %v2105
    %v2297 = vmul.f32 %v2110, %v2110
    %v2298 = vmul.f32 %v2115, %v2115
    %v2299 = vmul.f32 %v2120, %v2120
    %v2300 = vmul.f32 %v2125, %v2125
    %v2301 = vmul.f32 %v2130, %v2130
    %v2302 = vmul.f32 %v2135, %v2135
    %v2303 = vmul.f32 %v2140, %v2140
    %2304 = vmatprep.subr.mxu0 0.0
    %2305 = vmatpush1.msra.mxu0 %v2288
    %2306 = vmatprep.subr.mxu0 0.0
    %2307 = vmatpush1.msra.mxu0 %v2289
    %2308 = vmatprep.subr.mxu0 0.0
    %2309 = vmatpush1.msra.mxu0 %v2290
    %2310 = vmatprep.subr.mxu0 0.0
    %2311 = vmatpush1.msra.mxu0 %v2291
    %2312 = vmatprep.subr.mxu0 0.0
    %2313 = vmatpush1.msra.mxu0 %v2292
    %2314 = vmatprep.subr.mxu0 0.0
    %2315 = vmatpush1.msra.mxu0 %v2293
    %2316 = vmatprep.subr.mxu0 0.0
    %2317 = vmatpush1.msra.mxu0 %v2294
    %2318 = vmatprep.subr.mxu0 0.0
    %2319 = vmatpush1.msra.mxu0 %v2295
    %2320 = vmatprep.subr.mxu0 0.0
    %2321 = vmatpush1.msra.mxu0 %v2296
    %2322 = vmatprep.subr.mxu0 0.0
    %2323 = vmatpush1.msra.mxu0 %v2297
    %2324 = vmatprep.subr.mxu0 0.0
    %2325 = vmatpush1.msra.mxu0 %v2298
    %2326 = vmatprep.subr.mxu0 0.0
    %2327 = vmatpush1.msra.mxu0 %v2299
    %2328 = vmatprep.subr.mxu0 0.0
    %2329 = vmatpush1.msra.mxu0 %v2300
    %2330 = vmatprep.subr.mxu0 0.0
    %2331 = vmatpush1.msra.mxu0 %v2301
    %2332 = vmatprep.subr.mxu0 0.0
    %2333 = vmatpush1.msra.mxu0 %v2302
    %2334 = vmatprep.subr.mxu0 0.0
    %2335 = vmatpush1.msra.mxu0 %v2303
    %2336 = vmatprep.subr.mxu0 0.0
    %2337 = vmatpush1.msra.mxu0 0.0
    %2338 = vmatprep.subr.mxu0 0.0
    %2339 = vmatpush1.msra.mxu0 0.0
    %2340 = vmatprep.subr.mxu0 0.0
    %2341 = vmatpush1.msra.mxu0 0.0
    %2342 = vmatprep.subr.mxu0 0.0
    %2343 = vmatpush1.msra.mxu0 0.0
    %2344 = vmatprep.subr.mxu0 0.0
    %2345 = vmatpush1.msra.mxu0 0.0
    %2346 = vmatprep.subr.mxu0 0.0
    %2347 = vmatpush1.msra.mxu0 0.0
    %2348 = vmatprep.subr.mxu0 0.0
    %2349 = vmatpush1.msra.mxu0 0.0
    %2350 = vmatprep.subr.mxu0 0.0
    %2351 = vmatpush1.msra.mxu0 0.0
    %2352 = vmatprep.subr.mxu0 0.0
    %2353 = vmatpush1.msra.mxu0 0.0
    %2354 = vmatprep.subr.mxu0 0.0
    %2355 = vmatpush1.msra.mxu0 0.0
    %2356 = vmatprep.subr.mxu0 0.0
    %2357 = vmatpush1.msra.mxu0 0.0
    %2358 = vmatprep.subr.mxu0 0.0
    %2359 = vmatpush1.msra.mxu0 0.0
    %2360 = vmatprep.subr.mxu0 0.0
    %2361 = vmatpush1.msra.mxu0 0.0
    %2362 = vmatprep.subr.mxu0 0.0
    %2363 = vmatpush1.msra.mxu0 0.0
    %2364 = vmatprep.subr.mxu0 0.0
    %2365 = vmatpush1.msra.mxu0 0.0
    %2366 = vmatprep.subr.mxu0 0.0
    %2367 = vmatpush1.msra.mxu0 0.0
    %2368 = vmatprep.mubr.f32.mxu0 0.0
    %2369 = vmatmul.mubr.f32.gmra.mrb[0].mxu0 %v55
    %v2370 = vpop.f32.mrb[0].mxu0
    %v2371 = vadd.f32 0.0, %v2370
    %v2372 = vpop.f32.mrb[0].mxu0
    %2373 = vmatprep.mubr.f32.mxu0 0.0
    %2374 = vmatmul.mubr.f32.gmra.mrb[0].mxu0 %v56
    %v2375 = vpop.f32.mrb[0].mxu0
    %v2376 = vadd.f32 0.0, %v2375
    %v2377 = vpop.f32.mrb[0].mxu0
    %2378 = vmatprep.mubr.f32.mxu0 0.0
    %2379 = vmatmul.mubr.f32.gmra.mrb[0].mxu0 %v57
    %v2380 = vpop.f32.mrb[0].mxu0
    %v2381 = vadd.f32 0.0, %v2380
    %v2382 = vpop.f32.mrb[0].mxu0
    %2383 = vmatprep.mubr.f32.mxu0 0.0
    %2384 = vmatmul.mubr.f32.gmra.mrb[0].mxu0 %v58
    %v2385 = vpop.f32.mrb[0].mxu0
    %v2386 = vadd.f32 0.0, %v2385
    %v2387 = vpop.f32.mrb[0].mxu0
    %2388 = vmatprep.mubr.f32.mxu0 0.0
    %2389 = vmatmul.mubr.f32.gmra.mrb[0].mxu0 %v59
    %v2390 = vpop.f32.mrb[0].mxu0
    %v2391 = vadd.f32 0.0, %v2390
    %v2392 = vpop.f32.mrb[0].mxu0
    %2393 = vmatprep.mubr.f32.mxu0 0.0
    %2394 = vmatmul.mubr.f32.gmra.mrb[0].mxu0 %v60
    %v2395 = vpop.f32.mrb[0].mxu0
    %v2396 = vadd.f32 0.0, %v2395
    %v2397 = vpop.f32.mrb[0].mxu0
    %2398 = vmatprep.mubr.f32.mxu0 0.0
    %2399 = vmatmul.mubr.f32.gmra.mrb[0].mxu0 %v61
    %v2400 = vpop.f32.mrb[0].mxu0
    %v2401 = vadd.f32 0.0, %v2400
    %v2402 = vpop.f32.mrb[0].mxu0
    %2403 = vmatprep.mubr.f32.mxu0 0.0
    %2404 = vmatmul.mubr.f32.gmra.mrb[0].mxu0 %v62
    %v2405 = vpop.f32.mrb[0].mxu0
    %v2406 = vadd.f32 0.0, %v2405
    %v2407 = vpop.f32.mrb[0].mxu0
    %2408 = vmatprep.mubr.f32.mxu0 0.0
    %2409 = vmatmul.mubr.f32.gmra.mrb[0].mxu0 %v63
    %v2410 = vpop.f32.mrb[0].mxu0
    %v2411 = vadd.f32 0.0, %v2410
    %v2412 = vpop.f32.mrb[0].mxu0
    %2413 = vmatprep.mubr.f32.mxu0 0.0
    %2414 = vmatmul.mubr.f32.gmra.mrb[0].mxu0 %v64
    %v2415 = vpop.f32.mrb[0].mxu0
    %v2416 = vadd.f32 0.0, %v2415
    %v2417 = vpop.f32.mrb[0].mxu0
    %2418 = vmatprep.mubr.f32.mxu0 0.0
    %2419 = vmatmul.mubr.f32.gmra.mrb[0].mxu0 %v65
    %v2420 = vpop.f32.mrb[0].mxu0
    %v2421 = vadd.f32 0.0, %v2420
    %v2422 = vpop.f32.mrb[0].mxu0
    %2423 = vmatprep.mubr.f32.mxu0 0.0
    %2424 = vmatmul.mubr.f32.gmra.mrb[0].mxu0 %v66
    %v2425 = vpop.f32.mrb[0].mxu0
    %v2426 = vadd.f32 0.0, %v2425
    %v2427 = vpop.f32.mrb[0].mxu0
    %2428 = vmatprep.mubr.f32.mxu0 0.0
    %2429 = vmatmul.mubr.f32.gmra.mrb[0].mxu0 %v67
    %v2430 = vpop.f32.mrb[0].mxu0
    %v2431 = vadd.f32 0.0, %v2430
    %v2432 = vpop.f32.mrb[0].mxu0
    %2433 = vmatprep.mubr.f32.mxu0 0.0
    %2434 = vmatmul.mubr.f32.gmra.mrb[0].mxu0 %v68
    %v2435 = vpop.f32.mrb[0].mxu0
    %v2436 = vadd.f32 0.0, %v2435
    %v2437 = vpop.f32.mrb[0].mxu0
    %2438 = vmatprep.mubr.f32.mxu0 0.0
    %2439 = vmatmul.mubr.f32.gmra.mrb[0].mxu0 %v69
    %v2440 = vpop.f32.mrb[0].mxu0
    %v2441 = vadd.f32 0.0, %v2440
    %v2442 = vpop.f32.mrb[0].mxu0
    %2443 = vmatprep.mubr.f32.mxu0 0.0
    %2444 = vmatmul.mubr.f32.gmra.mrb[0].mxu0 %v70
    %v2445 = vpop.f32.mrb[0].mxu0
    %v2446 = vadd.f32 0.0, %v2445
    %v2447 = vpop.f32.mrb[0].mxu0
    %2448 = vdwg.mxu0
    %v2449 = vmul.f32 %v2210, %v2210
    %v2450 = vmul.f32 %v2215, %v2215
    %v2451 = vmul.f32 %v2220, %v2220
    %v2452 = vmul.f32 %v2225, %v2225
    %v2453 = vmul.f32 %v2230, %v2230
    %v2454 = vmul.f32 %v2235, %v2235
    %v2455 = vmul.f32 %v2240, %v2240
    %v2456 = vmul.f32 %v2245, %v2245
    %v2457 = vmul.f32 %v2250, %v2250
    %v2458 = vmul.f32 %v2255, %v2255
    %v2459 = vmul.f32 %v2260, %v2260
    %v2460 = vmul.f32 %v2265, %v2265
    %v2461 = vmul.f32 %v2270, %v2270
    %v2462 = vmul.f32 %v2275, %v2275
    %v2463 = vmul.f32 %v2280, %v2280
    %v2464 = vmul.f32 %v2285, %v2285
    %v2465 = vsub.f32 %v2371, %v2449
    %v2466 = vsub.f32 %v2376, %v2450
    %v2467 = vsub.f32 %v2381, %v2451
    %v2468 = vsub.f32 %v2386, %v2452
    %v2469 = vsub.f32 %v2391, %v2453
    %v2470 = vsub.f32 %v2396, %v2454
    %v2471 = vsub.f32 %v2401, %v2455
    %v2472 = vsub.f32 %v2406, %v2456
    %v2473 = vsub.f32 %v2411, %v2457
    %v2474 = vsub.f32 %v2416, %v2458
    %v2475 = vsub.f32 %v2421, %v2459
    %v2476 = vsub.f32 %v2426, %v2460
    %v2477 = vsub.f32 %v2431, %v2461
    %v2478 = vsub.f32 %v2436, %v2462
    %v2479 = vsub.f32 %v2441, %v2463
    %v2480 = vsub.f32 %v2446, %v2464
    %v2481 = vmax.f32 %v2465, 0.0
    %v2482 = vmax.f32 %v2466, 0.0
    %v2483 = vmax.f32 %v2467, 0.0
    %v2484 = vmax.f32 %v2468, 0.0
    %v2485 = vmax.f32 %v2469, 0.0
    %v2486 = vmax.f32 %v2470, 0.0
    %v2487 = vmax.f32 %v2471, 0.0
    %v2488 = vmax.f32 %v2472, 0.0
    %v2489 = vmax.f32 %v2473, 0.0
    %v2490 = vmax.f32 %v2474, 0.0
    %v2491 = vmax.f32 %v2475, 0.0
    %v2492 = vmax.f32 %v2476, 0.0
    %v2493 = vmax.f32 %v2477, 0.0
    %v2494 = vmax.f32 %v2478, 0.0
    %v2495 = vmax.f32 %v2479, 0.0
    %v2496 = vmax.f32 %v2480, 0.0
    %v2497 = vsub.f32 %v2065, %v2210
    %v2498 = vsub.f32 %v2070, %v2215
    %v2499 = vsub.f32 %v2075, %v2220
    %v2500 = vsub.f32 %v2080, %v2225
    %v2501 = vsub.f32 %v2085, %v2230
    %v2502 = vsub.f32 %v2090, %v2235
    %v2503 = vsub.f32 %v2095, %v2240
    %v2504 = vsub.f32 %v2100, %v2245
    %v2505 = vsub.f32 %v2105, %v2250
    %v2506 = vsub.f32 %v2110, %v2255
    %v2507 = vsub.f32 %v2115, %v2260
    %v2508 = vsub.f32 %v2120, %v2265
    %v2509 = vsub.f32 %v2125, %v2270
    %v2510 = vsub.f32 %v2130, %v2275
    %v2511 = vsub.f32 %v2135, %v2280
    %v2512 = vsub.f32 %v2140, %v2285
    %v2513 = vadd.f32 %v2481, 1e-05
    %v2514 = vadd.f32 %v2482, 1e-05
    %v2515 = vadd.f32 %v2483, 1e-05
    %v2516 = vadd.f32 %v2484, 1e-05
    %v2517 = vadd.f32 %v2485, 1e-05
    %v2518 = vadd.f32 %v2486, 1e-05
    %v2519 = vadd.f32 %v2487, 1e-05
    %v2520 = vadd.f32 %v2488, 1e-05
    %v2521 = vadd.f32 %v2489, 1e-05
    %v2522 = vadd.f32 %v2490, 1e-05
    %v2523 = vadd.f32 %v2491, 1e-05
    %v2524 = vadd.f32 %v2492, 1e-05
    %v2525 = vadd.f32 %v2493, 1e-05
    %v2526 = vadd.f32 %v2494, 1e-05
    %v2527 = vadd.f32 %v2495, 1e-05
    %v2528 = vadd.f32 %v2496, 1e-05
    %v2529 = vrsqrt.pop %v2513
    %v2530 = vrsqrt.pop %v2514
    %v2531 = vrsqrt.pop %v2515
    %v2532 = vrsqrt.pop %v2516
    %v2533 = vrsqrt.pop %v2517
    %v2534 = vrsqrt.pop %v2518
    %v2535 = vrsqrt.pop %v2519
    %v2536 = vrsqrt.pop %v2520
    %v2537 = vrsqrt.pop %v2521
    %v2538 = vrsqrt.pop %v2522
    %v2539 = vrsqrt.pop %v2523
    %v2540 = vrsqrt.pop %v2524
    %v2541 = vrsqrt.pop %v2525
    %v2542 = vrsqrt.pop %v2526
    %v2543 = vrsqrt.pop %v2527
    %v2544 = vrsqrt.pop %v2528
    %v2545 = vmul.f32 %v2497, %v2529
    %v2546 = vmul.f32 %v2498, %v2530
    %v2547 = vmul.f32 %v2499, %v2531
    %v2548 = vmul.f32 %v2500, %v2532
    %v2549 = vmul.f32 %v2501, %v2533
    %v2550 = vmul.f32 %v2502, %v2534
    %v2551 = vmul.f32 %v2503, %v2535
    %v2552 = vmul.f32 %v2504, %v2536
    %v2553 = vmul.f32 %v2505, %v2537
    %v2554 = vmul.f32 %v2506, %v2538
    %v2555 = vmul.f32 %v2507, %v2539
    %v2556 = vmul.f32 %v2508, %v2540
    %v2557 = vmul.f32 %v2509, %v2541
    %v2558 = vmul.f32 %v2510, %v2542
    %v2559 = vmul.f32 %v2511, %v2543
    %v2560 = vmul.f32 %v2512, %v2544
    %v2561 = vlaneseq
    %v2562 = vshrl.u32 %v2561, 7
    %v2563 = vsub.s32 0, %v2562
    %v2564 = vrot.slane %v268, %v2563
    %v2565 = vmul.f32 %v2545, %v2564
    %v2566 = vmul.f32 %v2546, %v2564
    %v2567 = vmul.f32 %v2547, %v2564
    %v2568 = vmul.f32 %v2548, %v2564
    %v2569 = vmul.f32 %v2549, %v2564
    %v2570 = vmul.f32 %v2550, %v2564
    %v2571 = vmul.f32 %v2551, %v2564
    %v2572 = vmul.f32 %v2552, %v2564
    %v2573 = vmul.f32 %v2553, %v2564
    %v2574 = vmul.f32 %v2554, %v2564
    %v2575 = vmul.f32 %v2555, %v2564
    %v2576 = vmul.f32 %v2556, %v2564
    %v2577 = vmul.f32 %v2557, %v2564
    %v2578 = vmul.f32 %v2558, %v2564
    %v2579 = vmul.f32 %v2559, %v2564
    %v2580 = vmul.f32 %v2560, %v2564
    %v2581 = vlaneseq
    %v2582 = vshrl.u32 %v2581, 7
    %v2583 = vsub.s32 0, %v2582
    %v2584 = vrot.slane %v269, %v2583
    %v2585 = vadd.f32 %v2565, %v2584
    %v2586 = vadd.f32 %v2566, %v2584
    %v2587 = vadd.f32 %v2567, %v2584
    %v2588 = vadd.f32 %v2568, %v2584
    %v2589 = vadd.f32 %v2569, %v2584
    %v2590 = vadd.f32 %v2570, %v2584
    %v2591 = vadd.f32 %v2571, %v2584
    %v2592 = vadd.f32 %v2572, %v2584
    %v2593 = vadd.f32 %v2573, %v2584
    %v2594 = vadd.f32 %v2574, %v2584
    %v2595 = vadd.f32 %v2575, %v2584
    %v2596 = vadd.f32 %v2576, %v2584
    %v2597 = vadd.f32 %v2577, %v2584
    %v2598 = vadd.f32 %v2578, %v2584
    %v2599 = vadd.f32 %v2579, %v2584
    %v2600 = vadd.f32 %v2580, %v2584
    %v2601 = vmax.f32 %v2585, 0.0
    %v2602 = vmax.f32 %v2586, 0.0
    %v2603 = vmax.f32 %v2587, 0.0
    %v2604 = vmax.f32 %v2588, 0.0
    %v2605 = vmax.f32 %v2589, 0.0
    %v2606 = vmax.f32 %v2590, 0.0
    %v2607 = vmax.f32 %v2591, 0.0
    %v2608 = vmax.f32 %v2592, 0.0
    %v2609 = vmax.f32 %v2593, 0.0
    %v2610 = vmax.f32 %v2594, 0.0
    %v2611 = vmax.f32 %v2595, 0.0
    %v2612 = vmax.f32 %v2596, 0.0
    %v2613 = vmax.f32 %v2597, 0.0
    %v2614 = vmax.f32 %v2598, 0.0
    %v2615 = vmax.f32 %v2599, 0.0
    %v2616 = vmax.f32 %v2600, 0.0
    %v2617 = vld [vmem:[%s2] sm:$0xff]
    %v2618 = vld [vmem:[%s2 + $0x8] sm:$0xff]
    %v2619 = vld [vmem:[%s2 + $0x10] sm:$0xff]
    %v2620 = vld [vmem:[%s2 + $0x18] sm:$0xff]
    %v2621 = vld [vmem:[%s2 + $0x20] sm:$0xff]
    %v2622 = vld [vmem:[%s2 + $0x28] sm:$0xff]
    %v2623 = vld [vmem:[%s2 + $0x30] sm:$0xff]
    %v2624 = vld [vmem:[%s2 + $0x38] sm:$0xff]
    %v2625 = vld [vmem:[%s2 + $0x40] sm:$0xff]
    %v2626 = vld [vmem:[%s2 + $0x48] sm:$0xff]
    %v2627 = vld [vmem:[%s2 + $0x50] sm:$0xff]
    %v2628 = vld [vmem:[%s2 + $0x58] sm:$0xff]
    %v2629 = vld [vmem:[%s2 + $0x60] sm:$0xff]
    %v2630 = vld [vmem:[%s2 + $0x68] sm:$0xff]
    %v2631 = vld [vmem:[%s2 + $0x70] sm:$0xff]
    %v2632 = vld [vmem:[%s2 + $0x78] sm:$0xff]
    %v2633 = vlaneseq
    %v2634 = vshrl.u32 %v2633, 7
    %v2635 = vsub.s32 0, %v2634
    %v2636 = vrot.slane %v270, %v2635
    %v2638 = vsel %vm380, %v2617, 0
    %v2641 = vsel %vm380, %v2618, 0
    %v2644 = vsel %vm380, %v2619, 0
    %v2647 = vsel %vm380, %v2620, 0
    %v2650 = vsel %vm380, %v2621, 0
    %v2653 = vsel %vm380, %v2622, 0
    %v2656 = vsel %vm380, %v2623, 0
    %v2659 = vsel %vm380, %v2624, 0
    %v2662 = vsel %vm380, %v2625, 0
    %v2665 = vsel %vm380, %v2626, 0
    %v2668 = vsel %vm380, %v2627, 0
    %v2671 = vsel %vm380, %v2628, 0
    %v2674 = vsel %vm380, %v2629, 0
    %v2677 = vsel %vm380, %v2630, 0
    %v2680 = vsel %vm380, %v2631, 0
    %v2683 = vsel %vm380, %v2632, 0
    %2685 = vmatprep.subr.mxu0 0.0
    %2686 = vmatpush1.msra.mxu0 %v103
    %2687 = vmatprep.subr.mxu0 0.0
    %2688 = vmatpush1.msra.mxu0 0.0
    %2689 = vmatprep.subr.mxu0 0.0
    %2690 = vmatpush1.msra.mxu0 0.0
    %2691 = vmatprep.subr.mxu0 0.0
    %2692 = vmatpush1.msra.mxu0 0.0
    %2693 = vmatprep.subr.mxu0 0.0
    %2694 = vmatpush1.msra.mxu0 0.0
    %2695 = vmatprep.subr.mxu0 0.0
    %2696 = vmatpush1.msra.mxu0 0.0
    %2697 = vmatprep.subr.mxu0 0.0
    %2698 = vmatpush1.msra.mxu0 0.0
    %2699 = vmatprep.subr.mxu0 0.0
    %2700 = vmatpush1.msra.mxu0 0.0
    %2701 = vmatprep.subr.mxu0 0.0
    %2702 = vmatpush1.msra.mxu0 0.0
    %2703 = vmatprep.subr.mxu0 0.0
    %2704 = vmatpush1.msra.mxu0 0.0
    %2705 = vmatprep.subr.mxu0 0.0
    %2706 = vmatpush1.msra.mxu0 0.0
    %2707 = vmatprep.subr.mxu0 0.0
    %2708 = vmatpush1.msra.mxu0 0.0
    %2709 = vmatprep.subr.mxu0 0.0
    %2710 = vmatpush1.msra.mxu0 0.0
    %2711 = vmatprep.subr.mxu0 0.0
    %2712 = vmatpush1.msra.mxu0 0.0
    %2713 = vmatprep.subr.mxu0 0.0
    %2714 = vmatpush1.msra.mxu0 0.0
    %2715 = vmatprep.subr.mxu0 0.0
    %2716 = vmatpush1.msra.mxu0 0.0
    %2717 = vmatprep.subr.mxu0 0.0
    %2718 = vmatpush1.msra.mxu0 0.0
    %2719 = vmatprep.subr.mxu0 0.0
    %2720 = vmatpush1.msra.mxu0 0.0
    %2721 = vmatprep.subr.mxu0 0.0
    %2722 = vmatpush1.msra.mxu0 0.0
    %2723 = vmatprep.subr.mxu0 0.0
    %2724 = vmatpush1.msra.mxu0 0.0
    %2725 = vmatprep.subr.mxu0 0.0
    %2726 = vmatpush1.msra.mxu0 0.0
    %2727 = vmatprep.subr.mxu0 0.0
    %2728 = vmatpush1.msra.mxu0 0.0
    %2729 = vmatprep.subr.mxu0 0.0
    %2730 = vmatpush1.msra.mxu0 0.0
    %2731 = vmatprep.subr.mxu0 0.0
    %2732 = vmatpush1.msra.mxu0 0.0
    %2733 = vmatprep.subr.mxu0 0.0
    %2734 = vmatpush1.msra.mxu0 0.0
    %2735 = vmatprep.subr.mxu0 0.0
    %2736 = vmatpush1.msra.mxu0 0.0
    %2737 = vmatprep.subr.mxu0 0.0
    %2738 = vmatpush1.msra.mxu0 0.0
    %2739 = vmatprep.subr.mxu0 0.0
    %2740 = vmatpush1.msra.mxu0 0.0
    %2741 = vmatprep.subr.mxu0 0.0
    %2742 = vmatpush1.msra.mxu0 0.0
    %2743 = vmatprep.subr.mxu0 0.0
    %2744 = vmatpush1.msra.mxu0 0.0
    %2745 = vmatprep.subr.mxu0 0.0
    %2746 = vmatpush1.msra.mxu0 0.0
    %2747 = vmatprep.subr.mxu0 0.0
    %2748 = vmatpush1.msra.mxu0 0.0
    %2749 = vmatprep.mubr.f32.mxu0 0.0
    %2750 = vmatmul.mubr.f32.gmra.mrb[0].mxu0 %v2638
    %v2751 = vpop.f32.mrb[0].mxu0
    %v2752 = vadd.f32 %v2636, %v2751
    %v2753 = vpop.f32.mrb[0].mxu0
    %2754 = vmatprep.mubr.f32.mxu0 0.0
    %2755 = vmatmul.mubr.f32.gmra.mrb[0].mxu0 %v2641
    %v2756 = vpop.f32.mrb[0].mxu0
    %v2757 = vadd.f32 %v2636, %v2756
    %v2758 = vpop.f32.mrb[0].mxu0
    %2759 = vmatprep.mubr.f32.mxu0 0.0
    %2760 = vmatmul.mubr.f32.gmra.mrb[0].mxu0 %v2644
    %v2761 = vpop.f32.mrb[0].mxu0
    %v2762 = vadd.f32 %v2636, %v2761
    %v2763 = vpop.f32.mrb[0].mxu0
    %2764 = vmatprep.mubr.f32.mxu0 0.0
    %2765 = vmatmul.mubr.f32.gmra.mrb[0].mxu0 %v2647
    %v2766 = vpop.f32.mrb[0].mxu0
    %v2767 = vadd.f32 %v2636, %v2766
    %v2768 = vpop.f32.mrb[0].mxu0
    %2769 = vmatprep.mubr.f32.mxu0 0.0
    %2770 = vmatmul.mubr.f32.gmra.mrb[0].mxu0 %v2650
    %v2771 = vpop.f32.mrb[0].mxu0
    %v2772 = vadd.f32 %v2636, %v2771
    %v2773 = vpop.f32.mrb[0].mxu0
    %2774 = vmatprep.mubr.f32.mxu0 0.0
    %2775 = vmatmul.mubr.f32.gmra.mrb[0].mxu0 %v2653
    %v2776 = vpop.f32.mrb[0].mxu0
    %v2777 = vadd.f32 %v2636, %v2776
    %v2778 = vpop.f32.mrb[0].mxu0
    %2779 = vmatprep.mubr.f32.mxu0 0.0
    %2780 = vmatmul.mubr.f32.gmra.mrb[0].mxu0 %v2656
    %v2781 = vpop.f32.mrb[0].mxu0
    %v2782 = vadd.f32 %v2636, %v2781
    %v2783 = vpop.f32.mrb[0].mxu0
    %2784 = vmatprep.mubr.f32.mxu0 0.0
    %2785 = vmatmul.mubr.f32.gmra.mrb[0].mxu0 %v2659
    %v2786 = vpop.f32.mrb[0].mxu0
    %v2787 = vadd.f32 %v2636, %v2786
    %v2788 = vpop.f32.mrb[0].mxu0
    %2789 = vmatprep.mubr.f32.mxu0 0.0
    %2790 = vmatmul.mubr.f32.gmra.mrb[0].mxu0 %v2662
    %v2791 = vpop.f32.mrb[0].mxu0
    %v2792 = vadd.f32 %v2636, %v2791
    %v2793 = vpop.f32.mrb[0].mxu0
    %2794 = vmatprep.mubr.f32.mxu0 0.0
    %2795 = vmatmul.mubr.f32.gmra.mrb[0].mxu0 %v2665
    %v2796 = vpop.f32.mrb[0].mxu0
    %v2797 = vadd.f32 %v2636, %v2796
    %v2798 = vpop.f32.mrb[0].mxu0
    %2799 = vmatprep.mubr.f32.mxu0 0.0
    %2800 = vmatmul.mubr.f32.gmra.mrb[0].mxu0 %v2668
    %v2801 = vpop.f32.mrb[0].mxu0
    %v2802 = vadd.f32 %v2636, %v2801
    %v2803 = vpop.f32.mrb[0].mxu0
    %2804 = vmatprep.mubr.f32.mxu0 0.0
    %2805 = vmatmul.mubr.f32.gmra.mrb[0].mxu0 %v2671
    %v2806 = vpop.f32.mrb[0].mxu0
    %v2807 = vadd.f32 %v2636, %v2806
    %v2808 = vpop.f32.mrb[0].mxu0
    %2809 = vmatprep.mubr.f32.mxu0 0.0
    %2810 = vmatmul.mubr.f32.gmra.mrb[0].mxu0 %v2674
    %v2811 = vpop.f32.mrb[0].mxu0
    %v2812 = vadd.f32 %v2636, %v2811
    %v2813 = vpop.f32.mrb[0].mxu0
    %2814 = vmatprep.mubr.f32.mxu0 0.0
    %2815 = vmatmul.mubr.f32.gmra.mrb[0].mxu0 %v2677
    %v2816 = vpop.f32.mrb[0].mxu0
    %v2817 = vadd.f32 %v2636, %v2816
    %v2818 = vpop.f32.mrb[0].mxu0
    %2819 = vmatprep.mubr.f32.mxu0 0.0
    %2820 = vmatmul.mubr.f32.gmra.mrb[0].mxu0 %v2680
    %v2821 = vpop.f32.mrb[0].mxu0
    %v2822 = vadd.f32 %v2636, %v2821
    %v2823 = vpop.f32.mrb[0].mxu0
    %2824 = vmatprep.mubr.f32.mxu0 0.0
    %2825 = vmatmul.mubr.f32.gmra.mrb[0].mxu0 %v2683
    %v2826 = vpop.f32.mrb[0].mxu0
    %v2827 = vadd.f32 %v2636, %v2826
    %v2828 = vpop.f32.mrb[0].mxu0
    %2829 = vdwg.mxu0
    %2830 = vmatprep.subr.mxu0 0.0
    %2831 = vmatpush1.msra.mxu0 %v2752
    %2832 = vmatprep.subr.mxu0 0.0
    %2833 = vmatpush1.msra.mxu0 %v2757
    %2834 = vmatprep.subr.mxu0 0.0
    %2835 = vmatpush1.msra.mxu0 %v2762
    %2836 = vmatprep.subr.mxu0 0.0
    %2837 = vmatpush1.msra.mxu0 %v2767
    %2838 = vmatprep.subr.mxu0 0.0
    %2839 = vmatpush1.msra.mxu0 %v2772
    %2840 = vmatprep.subr.mxu0 0.0
    %2841 = vmatpush1.msra.mxu0 %v2777
    %2842 = vmatprep.subr.mxu0 0.0
    %2843 = vmatpush1.msra.mxu0 %v2782
    %2844 = vmatprep.subr.mxu0 0.0
    %2845 = vmatpush1.msra.mxu0 %v2787
    %2846 = vmatprep.subr.mxu0 0.0
    %2847 = vmatpush1.msra.mxu0 %v2792
    %2848 = vmatprep.subr.mxu0 0.0
    %2849 = vmatpush1.msra.mxu0 %v2797
    %2850 = vmatprep.subr.mxu0 0.0
    %2851 = vmatpush1.msra.mxu0 %v2802
    %2852 = vmatprep.subr.mxu0 0.0
    %2853 = vmatpush1.msra.mxu0 %v2807
    %2854 = vmatprep.subr.mxu0 0.0
    %2855 = vmatpush1.msra.mxu0 %v2812
    %2856 = vmatprep.subr.mxu0 0.0
    %2857 = vmatpush1.msra.mxu0 %v2817
    %2858 = vmatprep.subr.mxu0 0.0
    %2859 = vmatpush1.msra.mxu0 %v2822
    %2860 = vmatprep.subr.mxu0 0.0
    %2861 = vmatpush1.msra.mxu0 %v2827
    %2862 = vmatprep.subr.mxu0 0.0
    %2863 = vmatpush1.msra.mxu0 0.0
    %2864 = vmatprep.subr.mxu0 0.0
    %2865 = vmatpush1.msra.mxu0 0.0
    %2866 = vmatprep.subr.mxu0 0.0
    %2867 = vmatpush1.msra.mxu0 0.0
    %2868 = vmatprep.subr.mxu0 0.0
    %2869 = vmatpush1.msra.mxu0 0.0
    %2870 = vmatprep.subr.mxu0 0.0
    %2871 = vmatpush1.msra.mxu0 0.0
    %2872 = vmatprep.subr.mxu0 0.0
    %2873 = vmatpush1.msra.mxu0 0.0
    %2874 = vmatprep.subr.mxu0 0.0
    %2875 = vmatpush1.msra.mxu0 0.0
    %2876 = vmatprep.subr.mxu0 0.0
    %2877 = vmatpush1.msra.mxu0 0.0
    %2878 = vmatprep.subr.mxu0 0.0
    %2879 = vmatpush1.msra.mxu0 0.0
    %2880 = vmatprep.subr.mxu0 0.0
    %2881 = vmatpush1.msra.mxu0 0.0
    %2882 = vmatprep.subr.mxu0 0.0
    %2883 = vmatpush1.msra.mxu0 0.0
    %2884 = vmatprep.subr.mxu0 0.0
    %2885 = vmatpush1.msra.mxu0 0.0
    %2886 = vmatprep.subr.mxu0 0.0
    %2887 = vmatpush1.msra.mxu0 0.0
    %2888 = vmatprep.subr.mxu0 0.0
    %2889 = vmatpush1.msra.mxu0 0.0
    %2890 = vmatprep.subr.mxu0 0.0
    %2891 = vmatpush1.msra.mxu0 0.0
    %2892 = vmatprep.subr.mxu0 0.0
    %2893 = vmatpush1.msra.mxu0 0.0
    %2894 = vmatprep.mubr.f32.mxu0 0.0
    %2895 = vmatmul.mubr.f32.gmra.mrb[0].mxu0 %v55
    %v2896 = vpop.f32.mrb[0].mxu0
    %v2897 = vadd.f32 0.0, %v2896
    %v2898 = vpop.f32.mrb[0].mxu0
    %2899 = vmatprep.mubr.f32.mxu0 0.0
    %2900 = vmatmul.mubr.f32.gmra.mrb[0].mxu0 %v56
    %v2901 = vpop.f32.mrb[0].mxu0
    %v2902 = vadd.f32 0.0, %v2901
    %v2903 = vpop.f32.mrb[0].mxu0
    %2904 = vmatprep.mubr.f32.mxu0 0.0
    %2905 = vmatmul.mubr.f32.gmra.mrb[0].mxu0 %v57
    %v2906 = vpop.f32.mrb[0].mxu0
    %v2907 = vadd.f32 0.0, %v2906
    %v2908 = vpop.f32.mrb[0].mxu0
    %2909 = vmatprep.mubr.f32.mxu0 0.0
    %2910 = vmatmul.mubr.f32.gmra.mrb[0].mxu0 %v58
    %v2911 = vpop.f32.mrb[0].mxu0
    %v2912 = vadd.f32 0.0, %v2911
    %v2913 = vpop.f32.mrb[0].mxu0
    %2914 = vmatprep.mubr.f32.mxu0 0.0
    %2915 = vmatmul.mubr.f32.gmra.mrb[0].mxu0 %v59
    %v2916 = vpop.f32.mrb[0].mxu0
    %v2917 = vadd.f32 0.0, %v2916
    %v2918 = vpop.f32.mrb[0].mxu0
    %2919 = vmatprep.mubr.f32.mxu0 0.0
    %2920 = vmatmul.mubr.f32.gmra.mrb[0].mxu0 %v60
    %v2921 = vpop.f32.mrb[0].mxu0
    %v2922 = vadd.f32 0.0, %v2921
    %v2923 = vpop.f32.mrb[0].mxu0
    %2924 = vmatprep.mubr.f32.mxu0 0.0
    %2925 = vmatmul.mubr.f32.gmra.mrb[0].mxu0 %v61
    %v2926 = vpop.f32.mrb[0].mxu0
    %v2927 = vadd.f32 0.0, %v2926
    %v2928 = vpop.f32.mrb[0].mxu0
    %2929 = vmatprep.mubr.f32.mxu0 0.0
    %2930 = vmatmul.mubr.f32.gmra.mrb[0].mxu0 %v62
    %v2931 = vpop.f32.mrb[0].mxu0
    %v2932 = vadd.f32 0.0, %v2931
    %v2933 = vpop.f32.mrb[0].mxu0
    %2934 = vmatprep.mubr.f32.mxu0 0.0
    %2935 = vmatmul.mubr.f32.gmra.mrb[0].mxu0 %v63
    %v2936 = vpop.f32.mrb[0].mxu0
    %v2937 = vadd.f32 0.0, %v2936
    %v2938 = vpop.f32.mrb[0].mxu0
    %2939 = vmatprep.mubr.f32.mxu0 0.0
    %2940 = vmatmul.mubr.f32.gmra.mrb[0].mxu0 %v64
    %v2941 = vpop.f32.mrb[0].mxu0
    %v2942 = vadd.f32 0.0, %v2941
    %v2943 = vpop.f32.mrb[0].mxu0
    %2944 = vmatprep.mubr.f32.mxu0 0.0
    %2945 = vmatmul.mubr.f32.gmra.mrb[0].mxu0 %v65
    %v2946 = vpop.f32.mrb[0].mxu0
    %v2947 = vadd.f32 0.0, %v2946
    %v2948 = vpop.f32.mrb[0].mxu0
    %2949 = vmatprep.mubr.f32.mxu0 0.0
    %2950 = vmatmul.mubr.f32.gmra.mrb[0].mxu0 %v66
    %v2951 = vpop.f32.mrb[0].mxu0
    %v2952 = vadd.f32 0.0, %v2951
    %v2953 = vpop.f32.mrb[0].mxu0
    %2954 = vmatprep.mubr.f32.mxu0 0.0
    %2955 = vmatmul.mubr.f32.gmra.mrb[0].mxu0 %v67
    %v2956 = vpop.f32.mrb[0].mxu0
    %v2957 = vadd.f32 0.0, %v2956
    %v2958 = vpop.f32.mrb[0].mxu0
    %2959 = vmatprep.mubr.f32.mxu0 0.0
    %2960 = vmatmul.mubr.f32.gmra.mrb[0].mxu0 %v68
    %v2961 = vpop.f32.mrb[0].mxu0
    %v2962 = vadd.f32 0.0, %v2961
    %v2963 = vpop.f32.mrb[0].mxu0
    %2964 = vmatprep.mubr.f32.mxu0 0.0
    %2965 = vmatmul.mubr.f32.gmra.mrb[0].mxu0 %v69
    %v2966 = vpop.f32.mrb[0].mxu0
    %v2967 = vadd.f32 0.0, %v2966
    %v2968 = vpop.f32.mrb[0].mxu0
    %2969 = vmatprep.mubr.f32.mxu0 0.0
    %2970 = vmatmul.mubr.f32.gmra.mrb[0].mxu0 %v70
    %v2971 = vpop.f32.mrb[0].mxu0
    %v2972 = vadd.f32 0.0, %v2971
    %v2973 = vpop.f32.mrb[0].mxu0
    %2974 = vdwg.mxu0
    %v2975 = vmul.f32 %v2752, %v2752
    %v2976 = vmul.f32 %v2757, %v2757
    %v2977 = vmul.f32 %v2762, %v2762
    %v2978 = vmul.f32 %v2767, %v2767
    %v2979 = vmul.f32 %v2772, %v2772
    %v2980 = vmul.f32 %v2777, %v2777
    %v2981 = vmul.f32 %v2782, %v2782
    %v2982 = vmul.f32 %v2787, %v2787
    %v2983 = vmul.f32 %v2792, %v2792
    %v2984 = vmul.f32 %v2797, %v2797
    %v2985 = vmul.f32 %v2802, %v2802
    %v2986 = vmul.f32 %v2807, %v2807
    %v2987 = vmul.f32 %v2812, %v2812
    %v2988 = vmul.f32 %v2817, %v2817
    %v2989 = vmul.f32 %v2822, %v2822
    %v2990 = vmul.f32 %v2827, %v2827
    %2991 = vmatprep.subr.mxu0 0.0
    %2992 = vmatpush1.msra.mxu0 %v2975
    %2993 = vmatprep.subr.mxu0 0.0
    %2994 = vmatpush1.msra.mxu0 %v2976
    %2995 = vmatprep.subr.mxu0 0.0
    %2996 = vmatpush1.msra.mxu0 %v2977
    %2997 = vmatprep.subr.mxu0 0.0
    %2998 = vmatpush1.msra.mxu0 %v2978
    %2999 = vmatprep.subr.mxu0 0.0
    %3000 = vmatpush1.msra.mxu0 %v2979
    %3001 = vmatprep.subr.mxu0 0.0
    %3002 = vmatpush1.msra.mxu0 %v2980
    %3003 = vmatprep.subr.mxu0 0.0
    %3004 = vmatpush1.msra.mxu0 %v2981
    %3005 = vmatprep.subr.mxu0 0.0
    %3006 = vmatpush1.msra.mxu0 %v2982
    %3007 = vmatprep.subr.mxu0 0.0
    %3008 = vmatpush1.msra.mxu0 %v2983
    %3009 = vmatprep.subr.mxu0 0.0
    %3010 = vmatpush1.msra.mxu0 %v2984
    %3011 = vmatprep.subr.mxu0 0.0
    %3012 = vmatpush1.msra.mxu0 %v2985
    %3013 = vmatprep.subr.mxu0 0.0
    %3014 = vmatpush1.msra.mxu0 %v2986
    %3015 = vmatprep.subr.mxu0 0.0
    %3016 = vmatpush1.msra.mxu0 %v2987
    %3017 = vmatprep.subr.mxu0 0.0
    %3018 = vmatpush1.msra.mxu0 %v2988
    %3019 = vmatprep.subr.mxu0 0.0
    %3020 = vmatpush1.msra.mxu0 %v2989
    %3021 = vmatprep.subr.mxu0 0.0
    %3022 = vmatpush1.msra.mxu0 %v2990
    %3023 = vmatprep.subr.mxu0 0.0
    %3024 = vmatpush1.msra.mxu0 0.0
    %3025 = vmatprep.subr.mxu0 0.0
    %3026 = vmatpush1.msra.mxu0 0.0
    %3027 = vmatprep.subr.mxu0 0.0
    %3028 = vmatpush1.msra.mxu0 0.0
    %3029 = vmatprep.subr.mxu0 0.0
    %3030 = vmatpush1.msra.mxu0 0.0
    %3031 = vmatprep.subr.mxu0 0.0
    %3032 = vmatpush1.msra.mxu0 0.0
    %3033 = vmatprep.subr.mxu0 0.0
    %3034 = vmatpush1.msra.mxu0 0.0
    %3035 = vmatprep.subr.mxu0 0.0
    %3036 = vmatpush1.msra.mxu0 0.0
    %3037 = vmatprep.subr.mxu0 0.0
    %3038 = vmatpush1.msra.mxu0 0.0
    %3039 = vmatprep.subr.mxu0 0.0
    %3040 = vmatpush1.msra.mxu0 0.0
    %3041 = vmatprep.subr.mxu0 0.0
    %3042 = vmatpush1.msra.mxu0 0.0
    %3043 = vmatprep.subr.mxu0 0.0
    %3044 = vmatpush1.msra.mxu0 0.0
    %3045 = vmatprep.subr.mxu0 0.0
    %3046 = vmatpush1.msra.mxu0 0.0
    %3047 = vmatprep.subr.mxu0 0.0
    %3048 = vmatpush1.msra.mxu0 0.0
    %3049 = vmatprep.subr.mxu0 0.0
    %3050 = vmatpush1.msra.mxu0 0.0
    %3051 = vmatprep.subr.mxu0 0.0
    %3052 = vmatpush1.msra.mxu0 0.0
    %3053 = vmatprep.subr.mxu0 0.0
    %3054 = vmatpush1.msra.mxu0 0.0
    %3055 = vmatprep.mubr.f32.mxu0 0.0
    %3056 = vmatmul.mubr.f32.gmra.mrb[0].mxu0 %v55
    %v3057 = vpop.f32.mrb[0].mxu0
    %v3058 = vadd.f32 0.0, %v3057
    %v3059 = vpop.f32.mrb[0].mxu0
    %3060 = vmatprep.mubr.f32.mxu0 0.0
    %3061 = vmatmul.mubr.f32.gmra.mrb[0].mxu0 %v56
    %v3062 = vpop.f32.mrb[0].mxu0
    %v3063 = vadd.f32 0.0, %v3062
    %v3064 = vpop.f32.mrb[0].mxu0
    %3065 = vmatprep.mubr.f32.mxu0 0.0
    %3066 = vmatmul.mubr.f32.gmra.mrb[0].mxu0 %v57
    %v3067 = vpop.f32.mrb[0].mxu0
    %v3068 = vadd.f32 0.0, %v3067
    %v3069 = vpop.f32.mrb[0].mxu0
    %3070 = vmatprep.mubr.f32.mxu0 0.0
    %3071 = vmatmul.mubr.f32.gmra.mrb[0].mxu0 %v58
    %v3072 = vpop.f32.mrb[0].mxu0
    %v3073 = vadd.f32 0.0, %v3072
    %v3074 = vpop.f32.mrb[0].mxu0
    %3075 = vmatprep.mubr.f32.mxu0 0.0
    %3076 = vmatmul.mubr.f32.gmra.mrb[0].mxu0 %v59
    %v3077 = vpop.f32.mrb[0].mxu0
    %v3078 = vadd.f32 0.0, %v3077
    %v3079 = vpop.f32.mrb[0].mxu0
    %3080 = vmatprep.mubr.f32.mxu0 0.0
    %3081 = vmatmul.mubr.f32.gmra.mrb[0].mxu0 %v60
    %v3082 = vpop.f32.mrb[0].mxu0
    %v3083 = vadd.f32 0.0, %v3082
    %v3084 = vpop.f32.mrb[0].mxu0
    %3085 = vmatprep.mubr.f32.mxu0 0.0
    %3086 = vmatmul.mubr.f32.gmra.mrb[0].mxu0 %v61
    %v3087 = vpop.f32.mrb[0].mxu0
    %v3088 = vadd.f32 0.0, %v3087
    %v3089 = vpop.f32.mrb[0].mxu0
    %3090 = vmatprep.mubr.f32.mxu0 0.0
    %3091 = vmatmul.mubr.f32.gmra.mrb[0].mxu0 %v62
    %v3092 = vpop.f32.mrb[0].mxu0
    %v3093 = vadd.f32 0.0, %v3092
    %v3094 = vpop.f32.mrb[0].mxu0
    %3095 = vmatprep.mubr.f32.mxu0 0.0
    %3096 = vmatmul.mubr.f32.gmra.mrb[0].mxu0 %v63
    %v3097 = vpop.f32.mrb[0].mxu0
    %v3098 = vadd.f32 0.0, %v3097
    %v3099 = vpop.f32.mrb[0].mxu0
    %3100 = vmatprep.mubr.f32.mxu0 0.0
    %3101 = vmatmul.mubr.f32.gmra.mrb[0].mxu0 %v64
    %v3102 = vpop.f32.mrb[0].mxu0
    %v3103 = vadd.f32 0.0, %v3102
    %v3104 = vpop.f32.mrb[0].mxu0
    %3105 = vmatprep.mubr.f32.mxu0 0.0
    %3106 = vmatmul.mubr.f32.gmra.mrb[0].mxu0 %v65
    %v3107 = vpop.f32.mrb[0].mxu0
    %v3108 = vadd.f32 0.0, %v3107
    %v3109 = vpop.f32.mrb[0].mxu0
    %3110 = vmatprep.mubr.f32.mxu0 0.0
    %3111 = vmatmul.mubr.f32.gmra.mrb[0].mxu0 %v66
    %v3112 = vpop.f32.mrb[0].mxu0
    %v3113 = vadd.f32 0.0, %v3112
    %v3114 = vpop.f32.mrb[0].mxu0
    %3115 = vmatprep.mubr.f32.mxu0 0.0
    %3116 = vmatmul.mubr.f32.gmra.mrb[0].mxu0 %v67
    %v3117 = vpop.f32.mrb[0].mxu0
    %v3118 = vadd.f32 0.0, %v3117
    %v3119 = vpop.f32.mrb[0].mxu0
    %3120 = vmatprep.mubr.f32.mxu0 0.0
    %3121 = vmatmul.mubr.f32.gmra.mrb[0].mxu0 %v68
    %v3122 = vpop.f32.mrb[0].mxu0
    %v3123 = vadd.f32 0.0, %v3122
    %v3124 = vpop.f32.mrb[0].mxu0
    %3125 = vmatprep.mubr.f32.mxu0 0.0
    %3126 = vmatmul.mubr.f32.gmra.mrb[0].mxu0 %v69
    %v3127 = vpop.f32.mrb[0].mxu0
    %v3128 = vadd.f32 0.0, %v3127
    %v3129 = vpop.f32.mrb[0].mxu0
    %3130 = vmatprep.mubr.f32.mxu0 0.0
    %3131 = vmatmul.mubr.f32.gmra.mrb[0].mxu0 %v70
    %v3132 = vpop.f32.mrb[0].mxu0
    %v3133 = vadd.f32 0.0, %v3132
    %v3134 = vpop.f32.mrb[0].mxu0
    %3135 = vdwg.mxu0
    %v3136 = vmul.f32 %v2897, %v2897
    %v3137 = vmul.f32 %v2902, %v2902
    %v3138 = vmul.f32 %v2907, %v2907
    %v3139 = vmul.f32 %v2912, %v2912
    %v3140 = vmul.f32 %v2917, %v2917
    %v3141 = vmul.f32 %v2922, %v2922
    %v3142 = vmul.f32 %v2927, %v2927
    %v3143 = vmul.f32 %v2932, %v2932
    %v3144 = vmul.f32 %v2937, %v2937
    %v3145 = vmul.f32 %v2942, %v2942
    %v3146 = vmul.f32 %v2947, %v2947
    %v3147 = vmul.f32 %v2952, %v2952
    %v3148 = vmul.f32 %v2957, %v2957
    %v3149 = vmul.f32 %v2962, %v2962
    %v3150 = vmul.f32 %v2967, %v2967
    %v3151 = vmul.f32 %v2972, %v2972
    %v3152 = vsub.f32 %v3058, %v3136
    %v3153 = vsub.f32 %v3063, %v3137
    %v3154 = vsub.f32 %v3068, %v3138
    %v3155 = vsub.f32 %v3073, %v3139
    %v3156 = vsub.f32 %v3078, %v3140
    %v3157 = vsub.f32 %v3083, %v3141
    %v3158 = vsub.f32 %v3088, %v3142
    %v3159 = vsub.f32 %v3093, %v3143
    %v3160 = vsub.f32 %v3098, %v3144
    %v3161 = vsub.f32 %v3103, %v3145
    %v3162 = vsub.f32 %v3108, %v3146
    %v3163 = vsub.f32 %v3113, %v3147
    %v3164 = vsub.f32 %v3118, %v3148
    %v3165 = vsub.f32 %v3123, %v3149
    %v3166 = vsub.f32 %v3128, %v3150
    %v3167 = vsub.f32 %v3133, %v3151
    %v3168 = vmax.f32 %v3152, 0.0
    %v3169 = vmax.f32 %v3153, 0.0
    %v3170 = vmax.f32 %v3154, 0.0
    %v3171 = vmax.f32 %v3155, 0.0
    %v3172 = vmax.f32 %v3156, 0.0
    %v3173 = vmax.f32 %v3157, 0.0
    %v3174 = vmax.f32 %v3158, 0.0
    %v3175 = vmax.f32 %v3159, 0.0
    %v3176 = vmax.f32 %v3160, 0.0
    %v3177 = vmax.f32 %v3161, 0.0
    %v3178 = vmax.f32 %v3162, 0.0
    %v3179 = vmax.f32 %v3163, 0.0
    %v3180 = vmax.f32 %v3164, 0.0
    %v3181 = vmax.f32 %v3165, 0.0
    %v3182 = vmax.f32 %v3166, 0.0
    %v3183 = vmax.f32 %v3167, 0.0
    %v3184 = vsub.f32 %v2752, %v2897
    %v3185 = vsub.f32 %v2757, %v2902
    %v3186 = vsub.f32 %v2762, %v2907
    %v3187 = vsub.f32 %v2767, %v2912
    %v3188 = vsub.f32 %v2772, %v2917
    %v3189 = vsub.f32 %v2777, %v2922
    %v3190 = vsub.f32 %v2782, %v2927
    %v3191 = vsub.f32 %v2787, %v2932
    %v3192 = vsub.f32 %v2792, %v2937
    %v3193 = vsub.f32 %v2797, %v2942
    %v3194 = vsub.f32 %v2802, %v2947
    %v3195 = vsub.f32 %v2807, %v2952
    %v3196 = vsub.f32 %v2812, %v2957
    %v3197 = vsub.f32 %v2817, %v2962
    %v3198 = vsub.f32 %v2822, %v2967
    %v3199 = vsub.f32 %v2827, %v2972
    %v3200 = vadd.f32 %v3168, 1e-05
    %v3201 = vadd.f32 %v3169, 1e-05
    %v3202 = vadd.f32 %v3170, 1e-05
    %v3203 = vadd.f32 %v3171, 1e-05
    %v3204 = vadd.f32 %v3172, 1e-05
    %v3205 = vadd.f32 %v3173, 1e-05
    %v3206 = vadd.f32 %v3174, 1e-05
    %v3207 = vadd.f32 %v3175, 1e-05
    %v3208 = vadd.f32 %v3176, 1e-05
    %v3209 = vadd.f32 %v3177, 1e-05
    %v3210 = vadd.f32 %v3178, 1e-05
    %v3211 = vadd.f32 %v3179, 1e-05
    %v3212 = vadd.f32 %v3180, 1e-05
    %v3213 = vadd.f32 %v3181, 1e-05
    %v3214 = vadd.f32 %v3182, 1e-05
    %v3215 = vadd.f32 %v3183, 1e-05
    %v3216 = vrsqrt.pop %v3200
    %v3217 = vrsqrt.pop %v3201
    %v3218 = vrsqrt.pop %v3202
    %v3219 = vrsqrt.pop %v3203
    %v3220 = vrsqrt.pop %v3204
    %v3221 = vrsqrt.pop %v3205
    %v3222 = vrsqrt.pop %v3206
    %v3223 = vrsqrt.pop %v3207
    %v3224 = vrsqrt.pop %v3208
    %v3225 = vrsqrt.pop %v3209
    %v3226 = vrsqrt.pop %v3210
    %v3227 = vrsqrt.pop %v3211
    %v3228 = vrsqrt.pop %v3212
    %v3229 = vrsqrt.pop %v3213
    %v3230 = vrsqrt.pop %v3214
    %v3231 = vrsqrt.pop %v3215
    %v3232 = vmul.f32 %v3184, %v3216
    %v3233 = vmul.f32 %v3185, %v3217
    %v3234 = vmul.f32 %v3186, %v3218
    %v3235 = vmul.f32 %v3187, %v3219
    %v3236 = vmul.f32 %v3188, %v3220
    %v3237 = vmul.f32 %v3189, %v3221
    %v3238 = vmul.f32 %v3190, %v3222
    %v3239 = vmul.f32 %v3191, %v3223
    %v3240 = vmul.f32 %v3192, %v3224
    %v3241 = vmul.f32 %v3193, %v3225
    %v3242 = vmul.f32 %v3194, %v3226
    %v3243 = vmul.f32 %v3195, %v3227
    %v3244 = vmul.f32 %v3196, %v3228
    %v3245 = vmul.f32 %v3197, %v3229
    %v3246 = vmul.f32 %v3198, %v3230
    %v3247 = vmul.f32 %v3199, %v3231
    %v3248 = vlaneseq
    %v3249 = vshrl.u32 %v3248, 7
    %v3250 = vsub.s32 0, %v3249
    %v3251 = vrot.slane %v271, %v3250
    %v3252 = vmul.f32 %v3232, %v3251
    %v3253 = vmul.f32 %v3233, %v3251
    %v3254 = vmul.f32 %v3234, %v3251
    %v3255 = vmul.f32 %v3235, %v3251
    %v3256 = vmul.f32 %v3236, %v3251
    %v3257 = vmul.f32 %v3237, %v3251
    %v3258 = vmul.f32 %v3238, %v3251
    %v3259 = vmul.f32 %v3239, %v3251
    %v3260 = vmul.f32 %v3240, %v3251
    %v3261 = vmul.f32 %v3241, %v3251
    %v3262 = vmul.f32 %v3242, %v3251
    %v3263 = vmul.f32 %v3243, %v3251
    %v3264 = vmul.f32 %v3244, %v3251
    %v3265 = vmul.f32 %v3245, %v3251
    %v3266 = vmul.f32 %v3246, %v3251
    %v3267 = vmul.f32 %v3247, %v3251
    %v3268 = vlaneseq
    %v3269 = vshrl.u32 %v3268, 7
    %v3270 = vsub.s32 0, %v3269
    %v3271 = vrot.slane %v272, %v3270
    %v3272 = vadd.f32 %v3252, %v3271
    %v3273 = vadd.f32 %v3253, %v3271
    %v3274 = vadd.f32 %v3254, %v3271
    %v3275 = vadd.f32 %v3255, %v3271
    %v3276 = vadd.f32 %v3256, %v3271
    %v3277 = vadd.f32 %v3257, %v3271
    %v3278 = vadd.f32 %v3258, %v3271
    %v3279 = vadd.f32 %v3259, %v3271
    %v3280 = vadd.f32 %v3260, %v3271
    %v3281 = vadd.f32 %v3261, %v3271
    %v3282 = vadd.f32 %v3262, %v3271
    %v3283 = vadd.f32 %v3263, %v3271
    %v3284 = vadd.f32 %v3264, %v3271
    %v3285 = vadd.f32 %v3265, %v3271
    %v3286 = vadd.f32 %v3266, %v3271
    %v3287 = vadd.f32 %v3267, %v3271
    %v3288 = vmax.f32 %v3272, 0.0
    %v3289 = vmax.f32 %v3273, 0.0
    %v3290 = vmax.f32 %v3274, 0.0
    %v3291 = vmax.f32 %v3275, 0.0
    %v3292 = vmax.f32 %v3276, 0.0
    %v3293 = vmax.f32 %v3277, 0.0
    %v3294 = vmax.f32 %v3278, 0.0
    %v3295 = vmax.f32 %v3279, 0.0
    %v3296 = vmax.f32 %v3280, 0.0
    %v3297 = vmax.f32 %v3281, 0.0
    %v3298 = vmax.f32 %v3282, 0.0
    %v3299 = vmax.f32 %v3283, 0.0
    %v3300 = vmax.f32 %v3284, 0.0
    %v3301 = vmax.f32 %v3285, 0.0
    %v3302 = vmax.f32 %v3286, 0.0
    %v3303 = vmax.f32 %v3287, 0.0
    %3304 = vmatprep.subr.mxu0 0.0
    %3305 = vmatpush1.msra.mxu0 %v120
    %3306 = vmatprep.subr.mxu0 0.0
    %3307 = vmatpush1.msra.mxu0 %v121
    %3308 = vmatprep.subr.mxu0 0.0
    %3309 = vmatpush1.msra.mxu0 %v122
    %3310 = vmatprep.subr.mxu0 0.0
    %3311 = vmatpush1.msra.mxu0 %v123
    %3312 = vmatprep.subr.mxu0 0.0
    %3313 = vmatpush1.msra.mxu0 %v124
    %3314 = vmatprep.subr.mxu0 0.0
    %3315 = vmatpush1.msra.mxu0 %v125
    %3316 = vmatprep.subr.mxu0 0.0
    %3317 = vmatpush1.msra.mxu0 %v126
    %3318 = vmatprep.subr.mxu0 0.0
    %3319 = vmatpush1.msra.mxu0 %v127
    %3320 = vmatprep.subr.mxu0 0.0
    %3321 = vmatpush1.msra.mxu0 %v128
    %3322 = vmatprep.subr.mxu0 0.0
    %3323 = vmatpush1.msra.mxu0 %v129
    %3324 = vmatprep.subr.mxu0 0.0
    %3325 = vmatpush1.msra.mxu0 %v130
    %3326 = vmatprep.subr.mxu0 0.0
    %3327 = vmatpush1.msra.mxu0 %v131
    %3328 = vmatprep.subr.mxu0 0.0
    %3329 = vmatpush1.msra.mxu0 %v132
    %3330 = vmatprep.subr.mxu0 0.0
    %3331 = vmatpush1.msra.mxu0 %v133
    %3332 = vmatprep.subr.mxu0 0.0
    %3333 = vmatpush1.msra.mxu0 %v134
    %3334 = vmatprep.subr.mxu0 0.0
    %3335 = vmatpush1.msra.mxu0 %v135
    %3336 = vmatprep.subr.mxu0 0.0
    %3337 = vmatpush1.msra.mxu0 0.0
    %3338 = vmatprep.subr.mxu0 0.0
    %3339 = vmatpush1.msra.mxu0 0.0
    %3340 = vmatprep.subr.mxu0 0.0
    %3341 = vmatpush1.msra.mxu0 0.0
    %3342 = vmatprep.subr.mxu0 0.0
    %3343 = vmatpush1.msra.mxu0 0.0
    %3344 = vmatprep.subr.mxu0 0.0
    %3345 = vmatpush1.msra.mxu0 0.0
    %3346 = vmatprep.subr.mxu0 0.0
    %3347 = vmatpush1.msra.mxu0 0.0
    %3348 = vmatprep.subr.mxu0 0.0
    %3349 = vmatpush1.msra.mxu0 0.0
    %3350 = vmatprep.subr.mxu0 0.0
    %3351 = vmatpush1.msra.mxu0 0.0
    %3352 = vmatprep.subr.mxu0 0.0
    %3353 = vmatpush1.msra.mxu0 0.0
    %3354 = vmatprep.subr.mxu0 0.0
    %3355 = vmatpush1.msra.mxu0 0.0
    %3356 = vmatprep.subr.mxu0 0.0
    %3357 = vmatpush1.msra.mxu0 0.0
    %3358 = vmatprep.subr.mxu0 0.0
    %3359 = vmatpush1.msra.mxu0 0.0
    %3360 = vmatprep.subr.mxu0 0.0
    %3361 = vmatpush1.msra.mxu0 0.0
    %3362 = vmatprep.subr.mxu0 0.0
    %3363 = vmatpush1.msra.mxu0 0.0
    %3364 = vmatprep.subr.mxu0 0.0
    %3365 = vmatpush1.msra.mxu0 0.0
    %3366 = vmatprep.subr.mxu0 0.0
    %3367 = vmatpush1.msra.mxu0 0.0
    %3368 = vmatprep.mubr.f32.mxu0 0.0
    %3369 = vmatmul.mubr.f32.gmra.mrb[0].mxu0 %v3288
    %v3370 = vpop.f32.mrb[0].mxu0
    %v3371 = vadd.f32 0.0, %v3370
    %v3372 = vpop.f32.mrb[0].mxu0
    %3373 = vmatprep.mubr.f32.mxu0 0.0
    %3374 = vmatmul.mubr.f32.gmra.mrb[0].mxu0 %v3289
    %v3375 = vpop.f32.mrb[0].mxu0
    %v3376 = vadd.f32 0.0, %v3375
    %v3377 = vpop.f32.mrb[0].mxu0
    %3378 = vmatprep.mubr.f32.mxu0 0.0
    %3379 = vmatmul.mubr.f32.gmra.mrb[0].mxu0 %v3290
    %v3380 = vpop.f32.mrb[0].mxu0
    %v3381 = vadd.f32 0.0, %v3380
    %v3382 = vpop.f32.mrb[0].mxu0
    %3383 = vmatprep.mubr.f32.mxu0 0.0
    %3384 = vmatmul.mubr.f32.gmra.mrb[0].mxu0 %v3291
    %v3385 = vpop.f32.mrb[0].mxu0
    %v3386 = vadd.f32 0.0, %v3385
    %v3387 = vpop.f32.mrb[0].mxu0
    %3388 = vmatprep.mubr.f32.mxu0 0.0
    %3389 = vmatmul.mubr.f32.gmra.mrb[0].mxu0 %v3292
    %v3390 = vpop.f32.mrb[0].mxu0
    %v3391 = vadd.f32 0.0, %v3390
    %v3392 = vpop.f32.mrb[0].mxu0
    %3393 = vmatprep.mubr.f32.mxu0 0.0
    %3394 = vmatmul.mubr.f32.gmra.mrb[0].mxu0 %v3293
    %v3395 = vpop.f32.mrb[0].mxu0
    %v3396 = vadd.f32 0.0, %v3395
    %v3397 = vpop.f32.mrb[0].mxu0
    %3398 = vmatprep.mubr.f32.mxu0 0.0
    %3399 = vmatmul.mubr.f32.gmra.mrb[0].mxu0 %v3294
    %v3400 = vpop.f32.mrb[0].mxu0
    %v3401 = vadd.f32 0.0, %v3400
    %v3402 = vpop.f32.mrb[0].mxu0
    %3403 = vmatprep.mubr.f32.mxu0 0.0
    %3404 = vmatmul.mubr.f32.gmra.mrb[0].mxu0 %v3295
    %v3405 = vpop.f32.mrb[0].mxu0
    %v3406 = vadd.f32 0.0, %v3405
    %v3407 = vpop.f32.mrb[0].mxu0
    %3408 = vmatprep.mubr.f32.mxu0 0.0
    %3409 = vmatmul.mubr.f32.gmra.mrb[0].mxu0 %v3296
    %v3410 = vpop.f32.mrb[0].mxu0
    %v3411 = vadd.f32 0.0, %v3410
    %v3412 = vpop.f32.mrb[0].mxu0
    %3413 = vmatprep.mubr.f32.mxu0 0.0
    %3414 = vmatmul.mubr.f32.gmra.mrb[0].mxu0 %v3297
    %v3415 = vpop.f32.mrb[0].mxu0
    %v3416 = vadd.f32 0.0, %v3415
    %v3417 = vpop.f32.mrb[0].mxu0
    %3418 = vmatprep.mubr.f32.mxu0 0.0
    %3419 = vmatmul.mubr.f32.gmra.mrb[0].mxu0 %v3298
    %v3420 = vpop.f32.mrb[0].mxu0
    %v3421 = vadd.f32 0.0, %v3420
    %v3422 = vpop.f32.mrb[0].mxu0
    %3423 = vmatprep.mubr.f32.mxu0 0.0
    %3424 = vmatmul.mubr.f32.gmra.mrb[0].mxu0 %v3299
    %v3425 = vpop.f32.mrb[0].mxu0
    %v3426 = vadd.f32 0.0, %v3425
    %v3427 = vpop.f32.mrb[0].mxu0
    %3428 = vmatprep.mubr.f32.mxu0 0.0
    %3429 = vmatmul.mubr.f32.gmra.mrb[0].mxu0 %v3300
    %v3430 = vpop.f32.mrb[0].mxu0
    %v3431 = vadd.f32 0.0, %v3430
    %v3432 = vpop.f32.mrb[0].mxu0
    %3433 = vmatprep.mubr.f32.mxu0 0.0
    %3434 = vmatmul.mubr.f32.gmra.mrb[0].mxu0 %v3301
    %v3435 = vpop.f32.mrb[0].mxu0
    %v3436 = vadd.f32 0.0, %v3435
    %v3437 = vpop.f32.mrb[0].mxu0
    %3438 = vmatprep.mubr.f32.mxu0 0.0
    %3439 = vmatmul.mubr.f32.gmra.mrb[0].mxu0 %v3302
    %v3440 = vpop.f32.mrb[0].mxu0
    %v3441 = vadd.f32 0.0, %v3440
    %v3442 = vpop.f32.mrb[0].mxu0
    %3443 = vmatprep.mubr.f32.mxu0 0.0
    %3444 = vmatmul.mubr.f32.gmra.mrb[0].mxu0 %v3303
    %v3445 = vpop.f32.mrb[0].mxu0
    %v3446 = vadd.f32 0.0, %v3445
    %v3447 = vpop.f32.mrb[0].mxu0
    %3448 = vdwg.mxu0
    %3449 = vmatprep.subr.mxu0 0.0
    %3450 = vmatpush1.msra.mxu0 %v104
    %3451 = vmatprep.subr.mxu0 0.0
    %3452 = vmatpush1.msra.mxu0 %v105
    %3453 = vmatprep.subr.mxu0 0.0
    %3454 = vmatpush1.msra.mxu0 %v106
    %3455 = vmatprep.subr.mxu0 0.0
    %3456 = vmatpush1.msra.mxu0 %v107
    %3457 = vmatprep.subr.mxu0 0.0
    %3458 = vmatpush1.msra.mxu0 %v108
    %3459 = vmatprep.subr.mxu0 0.0
    %3460 = vmatpush1.msra.mxu0 %v109
    %3461 = vmatprep.subr.mxu0 0.0
    %3462 = vmatpush1.msra.mxu0 %v110
    %3463 = vmatprep.subr.mxu0 0.0
    %3464 = vmatpush1.msra.mxu0 %v111
    %3465 = vmatprep.subr.mxu0 0.0
    %3466 = vmatpush1.msra.mxu0 %v112
    %3467 = vmatprep.subr.mxu0 0.0
    %3468 = vmatpush1.msra.mxu0 %v113
    %3469 = vmatprep.subr.mxu0 0.0
    %3470 = vmatpush1.msra.mxu0 %v114
    %3471 = vmatprep.subr.mxu0 0.0
    %3472 = vmatpush1.msra.mxu0 %v115
    %3473 = vmatprep.subr.mxu0 0.0
    %3474 = vmatpush1.msra.mxu0 %v116
    %3475 = vmatprep.subr.mxu0 0.0
    %3476 = vmatpush1.msra.mxu0 %v117
    %3477 = vmatprep.subr.mxu0 0.0
    %3478 = vmatpush1.msra.mxu0 %v118
    %3479 = vmatprep.subr.mxu0 0.0
    %3480 = vmatpush1.msra.mxu0 %v119
    %3481 = vmatprep.subr.mxu0 0.0
    %3482 = vmatpush1.msra.mxu0 0.0
    %3483 = vmatprep.subr.mxu0 0.0
    %3484 = vmatpush1.msra.mxu0 0.0
    %3485 = vmatprep.subr.mxu0 0.0
    %3486 = vmatpush1.msra.mxu0 0.0
    %3487 = vmatprep.subr.mxu0 0.0
    %3488 = vmatpush1.msra.mxu0 0.0
    %3489 = vmatprep.subr.mxu0 0.0
    %3490 = vmatpush1.msra.mxu0 0.0
    %3491 = vmatprep.subr.mxu0 0.0
    %3492 = vmatpush1.msra.mxu0 0.0
    %3493 = vmatprep.subr.mxu0 0.0
    %3494 = vmatpush1.msra.mxu0 0.0
    %3495 = vmatprep.subr.mxu0 0.0
    %3496 = vmatpush1.msra.mxu0 0.0
    %3497 = vmatprep.subr.mxu0 0.0
    %3498 = vmatpush1.msra.mxu0 0.0
    %3499 = vmatprep.subr.mxu0 0.0
    %3500 = vmatpush1.msra.mxu0 0.0
    %3501 = vmatprep.subr.mxu0 0.0
    %3502 = vmatpush1.msra.mxu0 0.0
    %3503 = vmatprep.subr.mxu0 0.0
    %3504 = vmatpush1.msra.mxu0 0.0
    %3505 = vmatprep.subr.mxu0 0.0
    %3506 = vmatpush1.msra.mxu0 0.0
    %3507 = vmatprep.subr.mxu0 0.0
    %3508 = vmatpush1.msra.mxu0 0.0
    %3509 = vmatprep.subr.mxu0 0.0
    %3510 = vmatpush1.msra.mxu0 0.0
    %3511 = vmatprep.subr.mxu0 0.0
    %3512 = vmatpush1.msra.mxu0 0.0
    %3513 = vmatprep.mubr.f32.mxu0 0.0
    %3514 = vmatmul.mubr.f32.gmra.mrb[0].mxu0 %v2601
    %v3515 = vpop.f32.mrb[0].mxu0
    %v3516 = vadd.f32 %v3371, %v3515
    %v3517 = vpop.f32.mrb[0].mxu0
    %3518 = vmatprep.mubr.f32.mxu0 0.0
    %3519 = vmatmul.mubr.f32.gmra.mrb[0].mxu0 %v2602
    %v3520 = vpop.f32.mrb[0].mxu0
    %v3521 = vadd.f32 %v3376, %v3520
    %v3522 = vpop.f32.mrb[0].mxu0
    %3523 = vmatprep.mubr.f32.mxu0 0.0
    %3524 = vmatmul.mubr.f32.gmra.mrb[0].mxu0 %v2603
    %v3525 = vpop.f32.mrb[0].mxu0
    %v3526 = vadd.f32 %v3381, %v3525
    %v3527 = vpop.f32.mrb[0].mxu0
    %3528 = vmatprep.mubr.f32.mxu0 0.0
    %3529 = vmatmul.mubr.f32.gmra.mrb[0].mxu0 %v2604
    %v3530 = vpop.f32.mrb[0].mxu0
    %v3531 = vadd.f32 %v3386, %v3530
    %v3532 = vpop.f32.mrb[0].mxu0
    %3533 = vmatprep.mubr.f32.mxu0 0.0
    %3534 = vmatmul.mubr.f32.gmra.mrb[0].mxu0 %v2605
    %v3535 = vpop.f32.mrb[0].mxu0
    %v3536 = vadd.f32 %v3391, %v3535
    %v3537 = vpop.f32.mrb[0].mxu0
    %3538 = vmatprep.mubr.f32.mxu0 0.0
    %3539 = vmatmul.mubr.f32.gmra.mrb[0].mxu0 %v2606
    %v3540 = vpop.f32.mrb[0].mxu0
    %v3541 = vadd.f32 %v3396, %v3540
    %v3542 = vpop.f32.mrb[0].mxu0
    %3543 = vmatprep.mubr.f32.mxu0 0.0
    %3544 = vmatmul.mubr.f32.gmra.mrb[0].mxu0 %v2607
    %v3545 = vpop.f32.mrb[0].mxu0
    %v3546 = vadd.f32 %v3401, %v3545
    %v3547 = vpop.f32.mrb[0].mxu0
    %3548 = vmatprep.mubr.f32.mxu0 0.0
    %3549 = vmatmul.mubr.f32.gmra.mrb[0].mxu0 %v2608
    %v3550 = vpop.f32.mrb[0].mxu0
    %v3551 = vadd.f32 %v3406, %v3550
    %v3552 = vpop.f32.mrb[0].mxu0
    %3553 = vmatprep.mubr.f32.mxu0 0.0
    %3554 = vmatmul.mubr.f32.gmra.mrb[0].mxu0 %v2609
    %v3555 = vpop.f32.mrb[0].mxu0
    %v3556 = vadd.f32 %v3411, %v3555
    %v3557 = vpop.f32.mrb[0].mxu0
    %3558 = vmatprep.mubr.f32.mxu0 0.0
    %3559 = vmatmul.mubr.f32.gmra.mrb[0].mxu0 %v2610
    %v3560 = vpop.f32.mrb[0].mxu0
    %v3561 = vadd.f32 %v3416, %v3560
    %v3562 = vpop.f32.mrb[0].mxu0
    %3563 = vmatprep.mubr.f32.mxu0 0.0
    %3564 = vmatmul.mubr.f32.gmra.mrb[0].mxu0 %v2611
    %v3565 = vpop.f32.mrb[0].mxu0
    %v3566 = vadd.f32 %v3421, %v3565
    %v3567 = vpop.f32.mrb[0].mxu0
    %3568 = vmatprep.mubr.f32.mxu0 0.0
    %3569 = vmatmul.mubr.f32.gmra.mrb[0].mxu0 %v2612
    %v3570 = vpop.f32.mrb[0].mxu0
    %v3571 = vadd.f32 %v3426, %v3570
    %v3572 = vpop.f32.mrb[0].mxu0
    %3573 = vmatprep.mubr.f32.mxu0 0.0
    %3574 = vmatmul.mubr.f32.gmra.mrb[0].mxu0 %v2613
    %v3575 = vpop.f32.mrb[0].mxu0
    %v3576 = vadd.f32 %v3431, %v3575
    %v3577 = vpop.f32.mrb[0].mxu0
    %3578 = vmatprep.mubr.f32.mxu0 0.0
    %3579 = vmatmul.mubr.f32.gmra.mrb[0].mxu0 %v2614
    %v3580 = vpop.f32.mrb[0].mxu0
    %v3581 = vadd.f32 %v3436, %v3580
    %v3582 = vpop.f32.mrb[0].mxu0
    %3583 = vmatprep.mubr.f32.mxu0 0.0
    %3584 = vmatmul.mubr.f32.gmra.mrb[0].mxu0 %v2615
    %v3585 = vpop.f32.mrb[0].mxu0
    %v3586 = vadd.f32 %v3441, %v3585
    %v3587 = vpop.f32.mrb[0].mxu0
    %3588 = vmatprep.mubr.f32.mxu0 0.0
    %3589 = vmatmul.mubr.f32.gmra.mrb[0].mxu0 %v2616
    %v3590 = vpop.f32.mrb[0].mxu0
    %v3591 = vadd.f32 %v3446, %v3590
    %v3592 = vpop.f32.mrb[0].mxu0
    %3593 = vdwg.mxu0
    %v3594 = vlaneseq
    %v3595 = vshrl.u32 %v3594, 7
    %v3596 = vsub.s32 0, %v3595
    %v3597 = vrot.slane %v273, %v3596
    %v3598 = vadd.f32 %v3516, %v3597
    %v3599 = vadd.f32 %v3521, %v3597
    %v3600 = vadd.f32 %v3526, %v3597
    %v3601 = vadd.f32 %v3531, %v3597
    %v3602 = vadd.f32 %v3536, %v3597
    %v3603 = vadd.f32 %v3541, %v3597
    %v3604 = vadd.f32 %v3546, %v3597
    %v3605 = vadd.f32 %v3551, %v3597
    %v3606 = vadd.f32 %v3556, %v3597
    %v3607 = vadd.f32 %v3561, %v3597
    %v3608 = vadd.f32 %v3566, %v3597
    %v3609 = vadd.f32 %v3571, %v3597
    %v3610 = vadd.f32 %v3576, %v3597
    %v3611 = vadd.f32 %v3581, %v3597
    %v3612 = vadd.f32 %v3586, %v3597
    %v3613 = vadd.f32 %v3591, %v3597
    %v3614 = vlaneseq
    %v3615 = vand.u32 %v3614, 127
    %vm3616 = vcmp.lt.s32.totalorder %v3615, 2
    %vm3617 = vcmp.lt.s32.totalorder %v3615, 4
    %v3618 = vmul.f32 %v3598, 1.442695
    %v3619 = vpow.pop %v3618
    %v3620 = vmul.f32 %v3599, 1.442695
    %v3621 = vpow.pop %v3620
    %v3622 = vmul.f32 %v3600, 1.442695
    %v3623 = vpow.pop %v3622
    %v3624 = vmul.f32 %v3601, 1.442695
    %v3625 = vpow.pop %v3624
    %v3626 = vmul.f32 %v3602, 1.442695
    %v3627 = vpow.pop %v3626
    %v3628 = vmul.f32 %v3603, 1.442695
    %v3629 = vpow.pop %v3628
    %v3630 = vmul.f32 %v3604, 1.442695
    %v3631 = vpow.pop %v3630
    %v3632 = vmul.f32 %v3605, 1.442695
    %v3633 = vpow.pop %v3632
    %v3634 = vmul.f32 %v3606, 1.442695
    %v3635 = vpow.pop %v3634
    %v3636 = vmul.f32 %v3607, 1.442695
    %v3637 = vpow.pop %v3636
    %v3638 = vmul.f32 %v3608, 1.442695
    %v3639 = vpow.pop %v3638
    %v3640 = vmul.f32 %v3609, 1.442695
    %v3641 = vpow.pop %v3640
    %v3642 = vmul.f32 %v3610, 1.442695
    %v3643 = vpow.pop %v3642
    %v3644 = vmul.f32 %v3611, 1.442695
    %v3645 = vpow.pop %v3644
    %v3646 = vmul.f32 %v3612, 1.442695
    %v3647 = vpow.pop %v3646
    %v3648 = vmul.f32 %v3613, 1.442695
    %v3649 = vpow.pop %v3648
    %vm3650 = vcmp.lt.s32.totalorder %v3615, 5
    %v3651 = vtanh.pop %v3598
    %v3652 = vtanh.pop %v3599
    %v3653 = vtanh.pop %v3600
    %v3654 = vtanh.pop %v3601
    %v3655 = vtanh.pop %v3602
    %v3656 = vtanh.pop %v3603
    %v3657 = vtanh.pop %v3604
    %v3658 = vtanh.pop %v3605
    %v3659 = vtanh.pop %v3606
    %v3660 = vtanh.pop %v3607
    %v3661 = vtanh.pop %v3608
    %v3662 = vtanh.pop %v3609
    %v3663 = vtanh.pop %v3610
    %v3664 = vtanh.pop %v3611
    %v3665 = vtanh.pop %v3612
    %v3666 = vtanh.pop %v3613
    %v3667 = vsel %vm3650, %v3651, 0.0
    %v3668 = vsel %vm3650, %v3652, 0.0
    %v3669 = vsel %vm3650, %v3653, 0.0
    %v3670 = vsel %vm3650, %v3654, 0.0
    %v3671 = vsel %vm3650, %v3655, 0.0
    %v3672 = vsel %vm3650, %v3656, 0.0
    %v3673 = vsel %vm3650, %v3657, 0.0
    %v3674 = vsel %vm3650, %v3658, 0.0
    %v3675 = vsel %vm3650, %v3659, 0.0
    %v3676 = vsel %vm3650, %v3660, 0.0
    %v3677 = vsel %vm3650, %v3661, 0.0
    %v3678 = vsel %vm3650, %v3662, 0.0
    %v3679 = vsel %vm3650, %v3663, 0.0
    %v3680 = vsel %vm3650, %v3664, 0.0
    %v3681 = vsel %vm3650, %v3665, 0.0
    %v3682 = vsel %vm3650, %v3666, 0.0
    %v3683 = vsel %vm3617, %v3619, %v3667
    %v3684 = vsel %vm3617, %v3621, %v3668
    %v3685 = vsel %vm3617, %v3623, %v3669
    %v3686 = vsel %vm3617, %v3625, %v3670
    %v3687 = vsel %vm3617, %v3627, %v3671
    %v3688 = vsel %vm3617, %v3629, %v3672
    %v3689 = vsel %vm3617, %v3631, %v3673
    %v3690 = vsel %vm3617, %v3633, %v3674
    %v3691 = vsel %vm3617, %v3635, %v3675
    %v3692 = vsel %vm3617, %v3637, %v3676
    %v3693 = vsel %vm3617, %v3639, %v3677
    %v3694 = vsel %vm3617, %v3641, %v3678
    %v3695 = vsel %vm3617, %v3643, %v3679
    %v3696 = vsel %vm3617, %v3645, %v3680
    %v3697 = vsel %vm3617, %v3647, %v3681
    %v3698 = vsel %vm3617, %v3649, %v3682
    %v3699 = vsel %vm3616, %v3598, %v3683
    %v3700 = vsel %vm3616, %v3599, %v3684
    %v3701 = vsel %vm3616, %v3600, %v3685
    %v3702 = vsel %vm3616, %v3601, %v3686
    %v3703 = vsel %vm3616, %v3602, %v3687
    %v3704 = vsel %vm3616, %v3603, %v3688
    %v3705 = vsel %vm3616, %v3604, %v3689
    %v3706 = vsel %vm3616, %v3605, %v3690
    %v3707 = vsel %vm3616, %v3606, %v3691
    %v3708 = vsel %vm3616, %v3607, %v3692
    %v3709 = vsel %vm3616, %v3608, %v3693
    %v3710 = vsel %vm3616, %v3609, %v3694
    %v3711 = vsel %vm3616, %v3610, %v3695
    %v3712 = vsel %vm3616, %v3611, %v3696
    %v3713 = vsel %vm3616, %v3612, %v3697
    %v3714 = vsel %vm3616, %v3613, %v3698
    %3715 = vst [vmem:[%s10] sm:$0xff] %v3699
    %3716 = vst [vmem:[%s10 + $0x8] sm:$0xff] %v3700
    %3717 = vst [vmem:[%s10 + $0x10] sm:$0xff] %v3701
    %3718 = vst [vmem:[%s10 + $0x18] sm:$0xff] %v3702
    %3719 = vst [vmem:[%s10 + $0x20] sm:$0xff] %v3703
    %3720 = vst [vmem:[%s10 + $0x28] sm:$0xff] %v3704
    %3721 = vst [vmem:[%s10 + $0x30] sm:$0xff] %v3705
    %3722 = vst [vmem:[%s10 + $0x38] sm:$0xff] %v3706
    %3723 = vst [vmem:[%s10 + $0x40] sm:$0xff] %v3707
    %3724 = vst [vmem:[%s10 + $0x48] sm:$0xff] %v3708
    %3725 = vst [vmem:[%s10 + $0x50] sm:$0xff] %v3709
    %3726 = vst [vmem:[%s10 + $0x58] sm:$0xff] %v3710
    %3727 = vst [vmem:[%s10 + $0x60] sm:$0xff] %v3711
    %3728 = vst [vmem:[%s10 + $0x68] sm:$0xff] %v3712
    %3729 = vst [vmem:[%s10 + $0x70] sm:$0xff] %v3713
    %3730 = vst [vmem:[%s10 + $0x78] sm:$0xff] %v3714
    // Predicated region
    $region42: #{stgcn3d_gep_forward.1} parent=1 // pred_check
      _
    $region43: #{stgcn3d_gep_forward.1} parent=1 // pred_check_branch
      %3732 = sbr.rel (0) target = $region45
    $region44: #{stgcn3d_gep_forward.1} parent=1 // pred_region
      %s3734 = ssub.s32 128, 128
      %3735 = vsyncadd [#allocation4], %s3734
      %s3737 = sshll.u32 [#allocation5], 4
      %s3738 = int_to_ptr.vmem [resolvable:$true] %s3737
      %3740 = dma.vmem_to_hbm [thread:$0]  %s3738, 128, %s9, [#allocation4]
    $region45: #{stgcn3d_gep_forward.1} parent=1 // pred_fallthru
      _
    // Predicated region
    $region46: #{stgcn3d_gep_forward.1} parent=1 // pred_check
      _
    $region47: #{stgcn3d_gep_forward.1} parent=1 // pred_check_branch
      %3742 = sbr.rel (0) target = $region49
    $region48: #{stgcn3d_gep_forward.1} parent=1 // pred_region
      _
    $region49: #{stgcn3d_gep_forward.1} parent=1 // pred_fallthru
      _
    // Predicated region
    $region50: #{stgcn3d_gep_forward.1} parent=1 // pred_check
      _
    $region51: #{stgcn3d_gep_forward.1} parent=1 // pred_check_branch
      %3744 = sbr.rel (0) target = $region53
    $region52: #{stgcn3d_gep_forward.1} parent=1 // pred_region
      %3745 = dma.done [#allocation4], 128
    $region53: #{stgcn3d_gep_forward.1} parent=1 // pred_fallthru
      _
    // Predicated region
    $region54: #{stgcn3d_gep_forward.1} parent=1 // pred_check
      _
    $region55: #{stgcn3d_gep_forward.1} parent=1 // pred_check_branch
      %3747 = sbr.rel (0) target = $region57
    $region56: #{stgcn3d_gep_forward.1} parent=1 // pred_region
      _
    $region57: #{stgcn3d_gep_forward.1} parent=1 // pred_fallthru
      _
    %3748 = vsyncpa [#allocation3], 1
    %3749 = vsyncpa [#allocation4], 1

</llo_original>
